<compile_context>
chip_gen: v6e
topology: v6e:2x2x1
jax: 0.10.0
libtpu: 0.0.40
codegen_flags: <defaults>
</compile_context>

<pallas_src>
import math

import jax
import jax.numpy as jnp
from jax import lax
from jax.experimental import pallas as pl
from jax.experimental.pallas import tpu as pltpu

_DEC_SCALE = 30.0            # DecLayer default `scale`
_SQRT_HALF = 0.7071067811865476
_GELU_K0 = 0.7978845608028654  # sqrt(2/pi)
_GELU_K1 = 0.044715


# ---------------------------------------------------------------------------
# In-kernel math helpers.
# ---------------------------------------------------------------------------
def _gelu(x):
    # tanh-approximate GELU: the transcendental lands on the EUP (own bundle
    # slot), replacing a ~12-op VALU erf rational on the largest tensor here.
    return 0.5 * x * (1.0 + jnp.tanh(_GELU_K0 * (x + _GELU_K1 * x * x * x)))


def _layer_norm(x, g, b, eps=1e-5):
    mu = jnp.mean(x, axis=-1, keepdims=True)
    xc = x - mu
    var = jnp.mean(xc * xc, axis=-1, keepdims=True)
    return xc * lax.rsqrt(var + eps) * g + b


# ---------------------------------------------------------------------------
# Pallas kernel: one (batch, N-tile) block per grid step, all layers inside.
# ---------------------------------------------------------------------------
def _confidence_kernel(hv_ref, hesv_ref, mask_ref,
                       w1n_ref, w1e_ref, b1_ref, w2_ref, b2_ref,
                       w3s_ref, b3s_ref,
                       win_ref, bin_ref, wout_ref, bout_ref,
                       ln1g_ref, ln1b_ref, ln2g_ref, ln2b_ref,
                       out_ref):
    TN, K, C = hesv_ref.shape[1], hesv_ref.shape[2], hesv_ref.shape[3]
    H = hv_ref.shape[2]
    L = w1n_ref.shape[0]

    hv = hv_ref[0]                               # (TN, H)     f32
    hesv = hesv_ref[0].reshape(TN * K, C)        # (TN*K, C)   bf16 (MXU/DMA path)
    mask = mask_ref[0]                           # (TN, 1)     f32, binary 0/1

    for l in range(L):  # layers statically unrolled (L is small)
        # --- message MLP -------------------------------------------------
        # node-part + b1 folded into a single per-row bias.
        row_bias = jnp.dot(hv, w1n_ref[l],
                           preferred_element_type=jnp.float32) + b1_ref[l]   # (TN, H)
        edge = jnp.dot(hesv, w1e_ref[l],
                       preferred_element_type=jnp.float32)                   # (TN*K, H)
        # seq_mask is per-row & binary, so masking h_ESV at width C each layer
        # is equivalent to masking the W1-edge product at width H here.
        m = edge.reshape(TN, K, H) * mask[:, :, None] + row_bias[:, None, :]
        m = _gelu(m)
        m = _gelu(jnp.dot(m.reshape(TN * K, H), w2_ref[l],
                          preferred_element_type=jnp.float32) + b2_ref[l])   # (TN*K, H)

        # --- neighbor aggregation (W3 moved after the K-sum) --------------
        s = jnp.sum(m.reshape(TN, K, H), axis=1)                             # (TN, H)
        dh = jnp.dot(s, w3s_ref[l],
                     preferred_element_type=jnp.float32) + b3s_ref[l]        # (TN, H)
        hv = _layer_norm(hv + dh, ln1g_ref[l], ln1b_ref[l])

        # --- position-wise feed-forward -----------------------------------
        ff = _gelu(jnp.dot(hv, win_ref[l],
                           preferred_element_type=jnp.float32) + bin_ref[l])
        ff = jnp.dot(ff, wout_ref[l],
                     preferred_element_type=jnp.float32) + bout_ref[l]
        hv = _layer_norm(hv + ff, ln2g_ref[l], ln2b_ref[l])

        # mask_V applied inside DecLayer
        hv = mask * hv

    # NOTE: output last dim is H (<128) -> masked vst; acceptable since output
    # traffic is tiny relative to the h_ESV stream.
    out_ref[0] = hv


def _choose_tile_n(N, target=256):
    """Largest N-tile <= target that divides N and satisfies the sublane rule."""
    if N <= target:
        return N
    for t in range(target, 7, -1):
        if N % t == 0 and t % 8 == 0:
            return t
    return N


def confidence_encoder(h_V, h_ESV, E_idx, seq_mask, params, *, tile_n=None):
    """Pallas implementation of ConfidenceEncoder.forward."""
    # TODO(synk): E_idx is accepted to mirror the PyTorch call signature, but the
    # parallel DecLayer forward operates on already-gathered h_ESV, so it is unused.
    del E_idx
    B, N, H = h_V.shape
    K, C = h_ESV.shape[2], h_ESV.shape[3]

    TN = tile_n if tile_n is not None else _choose_tile_n(N)
    assert N % TN == 0, f"tile_n={TN} must divide N={N}"

    mask3 = seq_mask.astype(jnp.float32)[:, :, None]            # (B, N, 1)
    h_V = h_V.astype(jnp.float32)
    hesv_bf16 = h_ESV.astype(jnp.bfloat16)                      # halve the dominant HBM stream

    # Pre-split / pre-fold weights (exact up to f32 rounding of the 1/30 scale).
    W1 = params["W1"].astype(jnp.float32)                       # (L, H+C, H)
    w1n = W1[:, :H, :]                                          # node slice, f32
    w1e = W1[:, H:, :].astype(jnp.bfloat16)                     # edge slice, bf16 (MXU)
    w3s = params["W3"].astype(jnp.float32) * (1.0 / _DEC_SCALE)
    b3s = params["b3"].astype(jnp.float32) * (float(K) / _DEC_SCALE)

    param_list = [
        w1n, w1e, params["b1"], params["W2"], params["b2"],
        w3s, b3s,
        params["Win"], params["bin"], params["Wout"], params["bout"],
        params["ln1_g"], params["ln1_b"], params["ln2_g"], params["ln2_b"],
    ]

    def rep_spec(p):
        nd = p.ndim
        return pl.BlockSpec(p.shape, lambda b, n, _nd=nd: (0,) * _nd)

    in_specs = [
        pl.BlockSpec((1, TN, H), lambda b, n: (b, n, 0)),
        pl.BlockSpec((1, TN, K, C), lambda b, n: (b, n, 0, 0)),
        pl.BlockSpec((1, TN, 1), lambda b, n: (b, n, 0)),
    ] + [rep_spec(p) for p in param_list]

    return pl.pallas_call(
        _confidence_kernel,
        out_shape=jax.ShapeDtypeStruct((B, N, H), jnp.float32),
        grid=(B, N // TN),
        in_specs=in_specs,
        out_specs=pl.BlockSpec((1, TN, H), lambda b, n: (b, n, 0)),
        compiler_params=pltpu.CompilerParams(
            # Both axes are independent -> shard across v7x's 2 TCs; harmless on 1-TC chips.
            dimension_semantics=("parallel", "parallel"),
            # Above the 16/32 MiB scoped defaults, comfortably under v7x's 64 MiB physical VMEM.
            vmem_limit_bytes=48 * 1024 * 1024,
        ),
    )(h_V, hesv_bf16, mask3, *param_list)


# ---------------------------------------------------------------------------
# Deterministic synthetic parameters (xavier_uniform for 2-D weights, as in
# the module's __init__; LayerNorm weights stay at their defaults).
# ---------------------------------------------------------------------------
def _xavier(key, shape):
    fan_in, fan_out = shape[-2], shape[-1]
    bound = math.sqrt(6.0 / (fan_in + fan_out))
    return jax.random.uniform(key, shape, jnp.float32, -bound, bound)


def _bias(key, shape, fan_in):
    bound = 1.0 / math.sqrt(fan_in)
    return jax.random.uniform(key, shape, jnp.float32, -bound, bound)


def init_params(key, n_layers, hidden, decoder_in):
    din = hidden + decoder_in
    ff = 4 * hidden
    ks = jax.random.split(key, 10)
    p = {}
    p["W1"] = _xavier(ks[0], (n_layers, din, hidden))
    p["b1"] = _bias(ks[1], (n_layers, 1, hidden), din)
    p["W2"] = _xavier(ks[2], (n_layers, hidden, hidden))
    p["b2"] = _bias(ks[3], (n_layers, 1, hidden), hidden)
    p["W3"] = _xavier(ks[4], (n_layers, hidden, hidden))
    p["b3"] = _bias(ks[5], (n_layers, 1, hidden), hidden)
    p["Win"] = _xavier(ks[6], (n_layers, hidden, ff))
    p["bin"] = _bias(ks[7], (n_layers, 1, ff), hidden)
    p["Wout"] = _xavier(ks[8], (n_layers, ff, hidden))
    p["bout"] = _bias(ks[9], (n_layers, 1, hidden), ff)
    p["ln1_g"] = jnp.ones((n_layers, 1, hidden), jnp.float32)
    p["ln1_b"] = jnp.zeros((n_layers, 1, hidden), jnp.float32)
    p["ln2_g"] = jnp.ones((n_layers, 1, hidden), jnp.float32)
    p["ln2_b"] = jnp.zeros((n_layers, 1, hidden), jnp.float32)
    return p


# ---------------------------------------------------------------------------
# Pure-JAX reference (concat form, exact erf GELU, full f32) mirroring the
# PyTorch module for a correctness check.
# ---------------------------------------------------------------------------
def reference_forward(h_V, h_ESV, seq_mask, params):
    gelu = lambda x: 0.5 * x * (1.0 + lax.erf(x * _SQRT_HALF))

    def ln(x, g, b, eps=1e-5):
        mu = jnp.mean(x, -1, keepdims=True)
        xc = x - mu
        var = jnp.mean(xc * xc, -1, keepdims=True)
        return xc * lax.rsqrt(var + eps) * g + b

    hv, hesv = h_V, h_ESV
    B, N, H = hv.shape
    K = hesv.shape[2]
    L = params["W1"].shape[0]
    mask4 = seq_mask[:, :, None, None]
    for l in range(L):
        hesv = mask4 * hesv
        hv_exp = jnp.broadcast_to(hv[:, :, None, :], (B, N, K, H))
        h_EV = jnp.concatenate([hv_exp, hesv], -1)
        m = gelu(jnp.einsum("bnki,io->bnko", h_EV, params["W1"][l]) + params["b1"][l][0])
        m = gelu(jnp.einsum("bnki,io->bnko", m, params["W2"][l]) + params["b2"][l][0])
        m = jnp.einsum("bnki,io->bnko", m, params["W3"][l]) + params["b3"][l][0]
        dh = jnp.sum(m, axis=2) / _DEC_SCALE
        hv = ln(hv + dh, params["ln1_g"][l][0], params["ln1_b"][l][0])
        ff = gelu(jnp.einsum("bni,io->bno", hv, params["Win"][l]) + params["bin"][l][0])
        ff = jnp.einsum("bni,io->bno", ff, params["Wout"][l]) + params["bout"][l][0]
        hv = ln(hv + ff, params["ln2_g"][l][0], params["ln2_b"][l][0])
        hv = seq_mask[:, :, None] * hv
    return hv


if __name__ == "__main__":
    # cfg: n_channel=32, n_layers=3, model_type='sidechain' -> decoder_in = 4*32.
    # Small shapes for correctness only; production benchmarking should use
    # realistic N (hundreds-thousands) and K (~30-48).
    B, N, K, H, L = 2, 8, 8, 32, 3
    C = 4 * H

    key = jax.random.PRNGKey(0)
    k_hv, k_he, k_eidx, k_mask, k_par = jax.random.split(key, 5)
    h_V = jax.random.normal(k_hv, (B, N, H), jnp.float32)
    h_ESV = jax.random.normal(k_he, (B, N, K, C), jnp.float32)
    E_idx = jax.random.randint(k_eidx, (B, N, K), 0, N, jnp.int32)
    seq_mask = (jax.random.uniform(k_mask, (B, N)) < 0.85).astype(jnp.float32)

    params = init_params(k_par, L, H, C)

    out = confidence_encoder(h_V, h_ESV, E_idx, seq_mask, params)
    out = jax.block_until_ready(out)

    ref = reference_forward(h_V, h_ESV, seq_mask, params)
    assert out.shape == (B, N, H)
    assert bool(jnp.all(jnp.isfinite(out)))
    # Tolerance covers bf16 h_ESV/W1-edge matmul path + tanh-GELU approximation.
    max_err = float(jnp.max(jnp.abs(out - ref)))
    assert max_err < 2e-2, f"mismatch vs reference, max abs err = {max_err}"

    print("KERNEL_OK")
</pallas_src>

<mosaic_0001>
module attributes {stable_mosaic.version = 11 : i64} {
  func.func @_confidence_kernel(%arg0: i32, %arg1: i32, %arg2: memref<1x8x32xf32, #tpu.memory_space<vmem>>, %arg3: memref<1x8x8x128xbf16, #tpu.memory_space<vmem>>, %arg4: memref<1x8x1xf32, #tpu.memory_space<vmem>>, %arg5: memref<3x32x32xf32, #tpu.memory_space<vmem>>, %arg6: memref<3x128x32xbf16, #tpu.memory_space<vmem>>, %arg7: memref<3x1x32xf32, #tpu.memory_space<vmem>>, %arg8: memref<3x32x32xf32, #tpu.memory_space<vmem>>, %arg9: memref<3x1x32xf32, #tpu.memory_space<vmem>>, %arg10: memref<3x32x32xf32, #tpu.memory_space<vmem>>, %arg11: memref<3x1x32xf32, #tpu.memory_space<vmem>>, %arg12: memref<3x32x128xf32, #tpu.memory_space<vmem>>, %arg13: memref<3x1x128xf32, #tpu.memory_space<vmem>>, %arg14: memref<3x128x32xf32, #tpu.memory_space<vmem>>, %arg15: memref<3x1x32xf32, #tpu.memory_space<vmem>>, %arg16: memref<3x1x32xf32, #tpu.memory_space<vmem>>, %arg17: memref<3x1x32xf32, #tpu.memory_space<vmem>>, %arg18: memref<3x1x32xf32, #tpu.memory_space<vmem>>, %arg19: memref<3x1x32xf32, #tpu.memory_space<vmem>>, %arg20: memref<1x8x32xf32, #tpu.memory_space<vmem>>) attributes {dimension_semantics = [#tpu.dimension_semantics<parallel>, #tpu.dimension_semantics<parallel>], iteration_bounds = array<i64: 2, 1>, scalar_prefetch = 0 : i64, scratch_operands = 0 : i64, tpu.core_type = #tpu.core_type<tc>, window_params = [{transform_indices = @transform_0, window_bounds = array<i64: 1, 8, 32>}, {transform_indices = @transform_1, window_bounds = array<i64: 1, 8, 8, 128>}, {transform_indices = @transform_2, window_bounds = array<i64: 1, 8, 1>}, {pipeline_mode = #tpu.pipeline_mode<synchronous>, transform_indices = @transform_3, window_bounds = array<i64: 3, 32, 32>}, {pipeline_mode = #tpu.pipeline_mode<synchronous>, transform_indices = @transform_4, window_bounds = array<i64: 3, 128, 32>}, {pipeline_mode = #tpu.pipeline_mode<synchronous>, transform_indices = @transform_5, window_bounds = array<i64: 3, 1, 32>}, {pipeline_mode = #tpu.pipeline_mode<synchronous>, transform_indices = @transform_6, window_bounds = array<i64: 3, 32, 32>}, {pipeline_mode = #tpu.pipeline_mode<synchronous>, transform_indices = @transform_7, window_bounds = array<i64: 3, 1, 32>}, {pipeline_mode = #tpu.pipeline_mode<synchronous>, transform_indices = @transform_8, window_bounds = array<i64: 3, 32, 32>}, {pipeline_mode = #tpu.pipeline_mode<synchronous>, transform_indices = @transform_9, window_bounds = array<i64: 3, 1, 32>}, {pipeline_mode = #tpu.pipeline_mode<synchronous>, transform_indices = @transform_10, window_bounds = array<i64: 3, 32, 128>}, {pipeline_mode = #tpu.pipeline_mode<synchronous>, transform_indices = @transform_11, window_bounds = array<i64: 3, 1, 128>}, {pipeline_mode = #tpu.pipeline_mode<synchronous>, transform_indices = @transform_12, window_bounds = array<i64: 3, 128, 32>}, {pipeline_mode = #tpu.pipeline_mode<synchronous>, transform_indices = @transform_13, window_bounds = array<i64: 3, 1, 32>}, {pipeline_mode = #tpu.pipeline_mode<synchronous>, transform_indices = @transform_14, window_bounds = array<i64: 3, 1, 32>}, {pipeline_mode = #tpu.pipeline_mode<synchronous>, transform_indices = @transform_15, window_bounds = array<i64: 3, 1, 32>}, {pipeline_mode = #tpu.pipeline_mode<synchronous>, transform_indices = @transform_16, window_bounds = array<i64: 3, 1, 32>}, {pipeline_mode = #tpu.pipeline_mode<synchronous>, transform_indices = @transform_17, window_bounds = array<i64: 3, 1, 32>}, {transform_indices = @transform_18, window_bounds = array<i64: 1, 8, 32>}]} {
    %c0 = arith.constant 0 : index
    %c0_0 = arith.constant 0 : index
    %c0_1 = arith.constant 0 : index
    %0 = vector.load %arg2[%c0, %c0_0, %c0_1] : memref<1x8x32xf32, #tpu.memory_space<vmem>>, vector<1x8x32xf32>
    %1 = vector.shape_cast %0 : vector<1x8x32xf32> to vector<8x32xf32>
    %c0_2 = arith.constant 0 : index
    %c0_3 = arith.constant 0 : index
    %c0_4 = arith.constant 0 : index
    %c0_5 = arith.constant 0 : index
    %2 = vector.load %arg3[%c0_2, %c0_3, %c0_4, %c0_5] : memref<1x8x8x128xbf16, #tpu.memory_space<vmem>>, vector<1x8x8x128xbf16>
    %3 = vector.shape_cast %2 : vector<1x8x8x128xbf16> to vector<8x8x128xbf16>
    %4 = vector.shape_cast %3 : vector<8x8x128xbf16> to vector<64x128xbf16>
    %c0_6 = arith.constant 0 : index
    %c0_7 = arith.constant 0 : index
    %c0_8 = arith.constant 0 : index
    %5 = vector.load %arg4[%c0_6, %c0_7, %c0_8] : memref<1x8x1xf32, #tpu.memory_space<vmem>>, vector<1x8x1xf32>
    %6 = vector.shape_cast %5 : vector<1x8x1xf32> to vector<8x1xf32>
    %c0_9 = arith.constant 0 : index
    %c0_10 = arith.constant 0 : index
    %c0_11 = arith.constant 0 : index
    %7 = vector.load %arg5[%c0_9, %c0_10, %c0_11] : memref<3x32x32xf32, #tpu.memory_space<vmem>>, vector<1x32x32xf32>
    %8 = vector.shape_cast %7 : vector<1x32x32xf32> to vector<32x32xf32>
    %cst = arith.constant dense<0.000000e+00> : vector<8x32xf32>
    %9 = tpu.matmul %1, %8, %cst {dimension_numbers = #tpu.dot_dimension_numbers<[1], [0], [0], [1], [0, 0, 1, 1], [], []>} : vector<8x32xf32>, vector<32x32xf32>, vector<8x32xf32> -> vector<8x32xf32>
    %c0_12 = arith.constant 0 : index
    %c0_13 = arith.constant 0 : index
    %c0_14 = arith.constant 0 : index
    %10 = vector.load %arg7[%c0_12, %c0_13, %c0_14] : memref<3x1x32xf32, #tpu.memory_space<vmem>>, vector<1x1x32xf32>
    %11 = vector.shape_cast %10 : vector<1x1x32xf32> to vector<1x32xf32>
    %12 = vector.broadcast %11 : vector<1x32xf32> to vector<8x32xf32>
    %13 = arith.addf %9, %12 : vector<8x32xf32>
    %c0_15 = arith.constant 0 : index
    %c0_16 = arith.constant 0 : index
    %c0_17 = arith.constant 0 : index
    %14 = vector.load %arg6[%c0_15, %c0_16, %c0_17] : memref<3x128x32xbf16, #tpu.memory_space<vmem>>, vector<1x128x32xbf16>
    %15 = vector.shape_cast %14 : vector<1x128x32xbf16> to vector<128x32xbf16>
    %cst_18 = arith.constant dense<0.000000e+00> : vector<64x32xf32>
    %16 = tpu.matmul %4, %15, %cst_18 {dimension_numbers = #tpu.dot_dimension_numbers<[1], [0], [0], [1], [0, 0, 1, 1], [], []>} : vector<64x128xbf16>, vector<128x32xbf16>, vector<64x32xf32> -> vector<64x32xf32>
    %17 = vector.shape_cast %16 : vector<64x32xf32> to vector<8x8x32xf32>
    %18 = vector.shape_cast %6 : vector<8x1xf32> to vector<8x1x1xf32>
    %19 = vector.broadcast %18 : vector<8x1x1xf32> to vector<8x8x32xf32>
    %20 = arith.mulf %17, %19 : vector<8x8x32xf32>
    %21 = vector.shape_cast %13 : vector<8x32xf32> to vector<8x1x32xf32>
    %22 = vector.broadcast %21 : vector<8x1x32xf32> to vector<8x8x32xf32>
    %23 = arith.addf %20, %22 : vector<8x8x32xf32>
    %cst_19 = arith.constant 5.000000e-01 : f32
    %24 = vector.broadcast %cst_19 : f32 to vector<8x8x32xf32>
    %25 = arith.mulf %24, %23 : vector<8x8x32xf32>
    %cst_20 = arith.constant 4.471500e-02 : f32
    %26 = vector.broadcast %cst_20 : f32 to vector<8x8x32xf32>
    %27 = arith.mulf %26, %23 : vector<8x8x32xf32>
    %28 = arith.mulf %27, %23 : vector<8x8x32xf32>
    %29 = arith.mulf %28, %23 : vector<8x8x32xf32>
    %30 = arith.addf %23, %29 : vector<8x8x32xf32>
    %cst_21 = arith.constant 0.797884583 : f32
    %31 = vector.broadcast %cst_21 : f32 to vector<8x8x32xf32>
    %32 = arith.mulf %31, %30 : vector<8x8x32xf32>
    %33 = math.tanh %32 : vector<8x8x32xf32>
    %cst_22 = arith.constant 1.000000e+00 : f32
    %34 = vector.broadcast %cst_22 : f32 to vector<8x8x32xf32>
    %35 = arith.addf %34, %33 : vector<8x8x32xf32>
    %36 = arith.mulf %25, %35 : vector<8x8x32xf32>
    %37 = vector.shape_cast %36 : vector<8x8x32xf32> to vector<64x32xf32>
    %c0_23 = arith.constant 0 : index
    %c0_24 = arith.constant 0 : index
    %c0_25 = arith.constant 0 : index
    %38 = vector.load %arg8[%c0_23, %c0_24, %c0_25] : memref<3x32x32xf32, #tpu.memory_space<vmem>>, vector<1x32x32xf32>
    %39 = vector.shape_cast %38 : vector<1x32x32xf32> to vector<32x32xf32>
    %cst_26 = arith.constant dense<0.000000e+00> : vector<64x32xf32>
    %40 = tpu.matmul %37, %39, %cst_26 {dimension_numbers = #tpu.dot_dimension_numbers<[1], [0], [0], [1], [0, 0, 1, 1], [], []>} : vector<64x32xf32>, vector<32x32xf32>, vector<64x32xf32> -> vector<64x32xf32>
    %c0_27 = arith.constant 0 : index
    %c0_28 = arith.constant 0 : index
    %c0_29 = arith.constant 0 : index
    %41 = vector.load %arg9[%c0_27, %c0_28, %c0_29] : memref<3x1x32xf32, #tpu.memory_space<vmem>>, vector<1x1x32xf32>
    %42 = vector.shape_cast %41 : vector<1x1x32xf32> to vector<1x32xf32>
    %43 = vector.broadcast %42 : vector<1x32xf32> to vector<64x32xf32>
    %44 = arith.addf %40, %43 : vector<64x32xf32>
    %cst_30 = arith.constant 5.000000e-01 : f32
    %45 = vector.broadcast %cst_30 : f32 to vector<64x32xf32>
    %46 = arith.mulf %45, %44 : vector<64x32xf32>
    %cst_31 = arith.constant 4.471500e-02 : f32
    %47 = vector.broadcast %cst_31 : f32 to vector<64x32xf32>
    %48 = arith.mulf %47, %44 : vector<64x32xf32>
    %49 = arith.mulf %48, %44 : vector<64x32xf32>
    %50 = arith.mulf %49, %44 : vector<64x32xf32>
    %51 = arith.addf %44, %50 : vector<64x32xf32>
    %cst_32 = arith.constant 0.797884583 : f32
    %52 = vector.broadcast %cst_32 : f32 to vector<64x32xf32>
    %53 = arith.mulf %52, %51 : vector<64x32xf32>
    %54 = math.tanh %53 : vector<64x32xf32>
    %cst_33 = arith.constant 1.000000e+00 : f32
    %55 = vector.broadcast %cst_33 : f32 to vector<64x32xf32>
    %56 = arith.addf %55, %54 : vector<64x32xf32>
    %57 = arith.mulf %46, %56 : vector<64x32xf32>
    %58 = vector.shape_cast %57 : vector<64x32xf32> to vector<8x8x32xf32>
    %cst_34 = arith.constant dense<0.000000e+00> : vector<8x32xf32>
    %59 = vector.multi_reduction <add>, %58, %cst_34 [1] : vector<8x8x32xf32> to vector<8x32xf32>
    %c0_35 = arith.constant 0 : index
    %c0_36 = arith.constant 0 : index
    %c0_37 = arith.constant 0 : index
    %60 = vector.load %arg10[%c0_35, %c0_36, %c0_37] : memref<3x32x32xf32, #tpu.memory_space<vmem>>, vector<1x32x32xf32>
    %61 = vector.shape_cast %60 : vector<1x32x32xf32> to vector<32x32xf32>
    %cst_38 = arith.constant dense<0.000000e+00> : vector<8x32xf32>
    %62 = tpu.matmul %59, %61, %cst_38 {dimension_numbers = #tpu.dot_dimension_numbers<[1], [0], [0], [1], [0, 0, 1, 1], [], []>} : vector<8x32xf32>, vector<32x32xf32>, vector<8x32xf32> -> vector<8x32xf32>
    %c0_39 = arith.constant 0 : index
    %c0_40 = arith.constant 0 : index
    %c0_41 = arith.constant 0 : index
    %63 = vector.load %arg11[%c0_39, %c0_40, %c0_41] : memref<3x1x32xf32, #tpu.memory_space<vmem>>, vector<1x1x32xf32>
    %64 = vector.shape_cast %63 : vector<1x1x32xf32> to vector<1x32xf32>
    %65 = vector.broadcast %64 : vector<1x32xf32> to vector<8x32xf32>
    %66 = arith.addf %62, %65 : vector<8x32xf32>
    %67 = arith.addf %1, %66 : vector<8x32xf32>
    %c0_42 = arith.constant 0 : index
    %c0_43 = arith.constant 0 : index
    %c0_44 = arith.constant 0 : index
    %68 = vector.load %arg16[%c0_42, %c0_43, %c0_44] : memref<3x1x32xf32, #tpu.memory_space<vmem>>, vector<1x1x32xf32>
    %69 = vector.shape_cast %68 : vector<1x1x32xf32> to vector<1x32xf32>
    %c0_45 = arith.constant 0 : index
    %c0_46 = arith.constant 0 : index
    %c0_47 = arith.constant 0 : index
    %70 = vector.load %arg17[%c0_45, %c0_46, %c0_47] : memref<3x1x32xf32, #tpu.memory_space<vmem>>, vector<1x1x32xf32>
    %71 = vector.shape_cast %70 : vector<1x1x32xf32> to vector<1x32xf32>
    %cst_48 = arith.constant dense<0.000000e+00> : vector<8xf32>
    %72 = vector.multi_reduction <add>, %67, %cst_48 [1] : vector<8x32xf32> to vector<8xf32>
    %73 = vector.shape_cast %72 : vector<8xf32> to vector<8x1xf32>
    %cst_49 = arith.constant 3.200000e+01 : f32
    %74 = vector.broadcast %cst_49 : f32 to vector<8x1xf32>
    %75 = arith.divf %73, %74 : vector<8x1xf32>
    %76 = vector.broadcast %75 : vector<8x1xf32> to vector<8x32xf32>
    %77 = arith.subf %67, %76 : vector<8x32xf32>
    %78 = arith.mulf %77, %77 : vector<8x32xf32>
    %cst_50 = arith.constant dense<0.000000e+00> : vector<8xf32>
    %79 = vector.multi_reduction <add>, %78, %cst_50 [1] : vector<8x32xf32> to vector<8xf32>
    %80 = vector.shape_cast %79 : vector<8xf32> to vector<8x1xf32>
    %cst_51 = arith.constant 3.200000e+01 : f32
    %81 = vector.broadcast %cst_51 : f32 to vector<8x1xf32>
    %82 = arith.divf %80, %81 : vector<8x1xf32>
    %cst_52 = arith.constant 9.99999974E-6 : f32
    %83 = vector.broadcast %cst_52 : f32 to vector<8x1xf32>
    %84 = arith.addf %82, %83 : vector<8x1xf32>
    %85 = math.rsqrt %84 : vector<8x1xf32>
    %86 = vector.broadcast %85 : vector<8x1xf32> to vector<8x32xf32>
    %87 = arith.mulf %77, %86 : vector<8x32xf32>
    %88 = vector.broadcast %69 : vector<1x32xf32> to vector<8x32xf32>
    %89 = arith.mulf %87, %88 : vector<8x32xf32>
    %90 = vector.broadcast %71 : vector<1x32xf32> to vector<8x32xf32>
    %91 = arith.addf %89, %90 : vector<8x32xf32>
    %c0_53 = arith.constant 0 : index
    %c0_54 = arith.constant 0 : index
    %c0_55 = arith.constant 0 : index
    %92 = vector.load %arg12[%c0_53, %c0_54, %c0_55] : memref<3x32x128xf32, #tpu.memory_space<vmem>>, vector<1x32x128xf32>
    %93 = vector.shape_cast %92 : vector<1x32x128xf32> to vector<32x128xf32>
    %cst_56 = arith.constant dense<0.000000e+00> : vector<8x128xf32>
    %94 = tpu.matmul %91, %93, %cst_56 {dimension_numbers = #tpu.dot_dimension_numbers<[1], [0], [0], [1], [0, 0, 1, 1], [], []>} : vector<8x32xf32>, vector<32x128xf32>, vector<8x128xf32> -> vector<8x128xf32>
    %c0_57 = arith.constant 0 : index
    %c0_58 = arith.constant 0 : index
    %c0_59 = arith.constant 0 : index
    %95 = vector.load %arg13[%c0_57, %c0_58, %c0_59] : memref<3x1x128xf32, #tpu.memory_space<vmem>>, vector<1x1x128xf32>
    %96 = vector.shape_cast %95 : vector<1x1x128xf32> to vector<1x128xf32>
    %97 = vector.broadcast %96 : vector<1x128xf32> to vector<8x128xf32>
    %98 = arith.addf %94, %97 : vector<8x128xf32>
    %cst_60 = arith.constant 5.000000e-01 : f32
    %99 = vector.broadcast %cst_60 : f32 to vector<8x128xf32>
    %100 = arith.mulf %99, %98 : vector<8x128xf32>
    %cst_61 = arith.constant 4.471500e-02 : f32
    %101 = vector.broadcast %cst_61 : f32 to vector<8x128xf32>
    %102 = arith.mulf %101, %98 : vector<8x128xf32>
    %103 = arith.mulf %102, %98 : vector<8x128xf32>
    %104 = arith.mulf %103, %98 : vector<8x128xf32>
    %105 = arith.addf %98, %104 : vector<8x128xf32>
    %cst_62 = arith.constant 0.797884583 : f32
    %106 = vector.broadcast %cst_62 : f32 to vector<8x128xf32>
    %107 = arith.mulf %106, %105 : vector<8x128xf32>
    %108 = math.tanh %107 : vector<8x128xf32>
    %cst_63 = arith.constant 1.000000e+00 : f32
    %109 = vector.broadcast %cst_63 : f32 to vector<8x128xf32>
    %110 = arith.addf %109, %108 : vector<8x128xf32>
    %111 = arith.mulf %100, %110 : vector<8x128xf32>
    %c0_64 = arith.constant 0 : index
    %c0_65 = arith.constant 0 : index
    %c0_66 = arith.constant 0 : index
    %112 = vector.load %arg14[%c0_64, %c0_65, %c0_66] : memref<3x128x32xf32, #tpu.memory_space<vmem>>, vector<1x128x32xf32>
    %113 = vector.shape_cast %112 : vector<1x128x32xf32> to vector<128x32xf32>
    %cst_67 = arith.constant dense<0.000000e+00> : vector<8x32xf32>
    %114 = tpu.matmul %111, %113, %cst_67 {dimension_numbers = #tpu.dot_dimension_numbers<[1], [0], [0], [1], [0, 0, 1, 1], [], []>} : vector<8x128xf32>, vector<128x32xf32>, vector<8x32xf32> -> vector<8x32xf32>
    %c0_68 = arith.constant 0 : index
    %c0_69 = arith.constant 0 : index
    %c0_70 = arith.constant 0 : index
    %115 = vector.load %arg15[%c0_68, %c0_69, %c0_70] : memref<3x1x32xf32, #tpu.memory_space<vmem>>, vector<1x1x32xf32>
    %116 = vector.shape_cast %115 : vector<1x1x32xf32> to vector<1x32xf32>
    %117 = vector.broadcast %116 : vector<1x32xf32> to vector<8x32xf32>
    %118 = arith.addf %114, %117 : vector<8x32xf32>
    %119 = arith.addf %91, %118 : vector<8x32xf32>
    %c0_71 = arith.constant 0 : index
    %c0_72 = arith.constant 0 : index
    %c0_73 = arith.constant 0 : index
    %120 = vector.load %arg18[%c0_71, %c0_72, %c0_73] : memref<3x1x32xf32, #tpu.memory_space<vmem>>, vector<1x1x32xf32>
    %121 = vector.shape_cast %120 : vector<1x1x32xf32> to vector<1x32xf32>
    %c0_74 = arith.constant 0 : index
    %c0_75 = arith.constant 0 : index
    %c0_76 = arith.constant 0 : index
    %122 = vector.load %arg19[%c0_74, %c0_75, %c0_76] : memref<3x1x32xf32, #tpu.memory_space<vmem>>, vector<1x1x32xf32>
    %123 = vector.shape_cast %122 : vector<1x1x32xf32> to vector<1x32xf32>
    %cst_77 = arith.constant dense<0.000000e+00> : vector<8xf32>
    %124 = vector.multi_reduction <add>, %119, %cst_77 [1] : vector<8x32xf32> to vector<8xf32>
    %125 = vector.shape_cast %124 : vector<8xf32> to vector<8x1xf32>
    %cst_78 = arith.constant 3.200000e+01 : f32
    %126 = vector.broadcast %cst_78 : f32 to vector<8x1xf32>
    %127 = arith.divf %125, %126 : vector<8x1xf32>
    %128 = vector.broadcast %127 : vector<8x1xf32> to vector<8x32xf32>
    %129 = arith.subf %119, %128 : vector<8x32xf32>
    %130 = arith.mulf %129, %129 : vector<8x32xf32>
    %cst_79 = arith.constant dense<0.000000e+00> : vector<8xf32>
    %131 = vector.multi_reduction <add>, %130, %cst_79 [1] : vector<8x32xf32> to vector<8xf32>
    %132 = vector.shape_cast %131 : vector<8xf32> to vector<8x1xf32>
    %cst_80 = arith.constant 3.200000e+01 : f32
    %133 = vector.broadcast %cst_80 : f32 to vector<8x1xf32>
    %134 = arith.divf %132, %133 : vector<8x1xf32>
    %cst_81 = arith.constant 9.99999974E-6 : f32
    %135 = vector.broadcast %cst_81 : f32 to vector<8x1xf32>
    %136 = arith.addf %134, %135 : vector<8x1xf32>
    %137 = math.rsqrt %136 : vector<8x1xf32>
    %138 = vector.broadcast %137 : vector<8x1xf32> to vector<8x32xf32>
    %139 = arith.mulf %129, %138 : vector<8x32xf32>
    %140 = vector.broadcast %121 : vector<1x32xf32> to vector<8x32xf32>
    %141 = arith.mulf %139, %140 : vector<8x32xf32>
    %142 = vector.broadcast %123 : vector<1x32xf32> to vector<8x32xf32>
    %143 = arith.addf %141, %142 : vector<8x32xf32>
    %144 = vector.broadcast %6 : vector<8x1xf32> to vector<8x32xf32>
    %145 = arith.mulf %144, %143 : vector<8x32xf32>
    %c1 = arith.constant 1 : index
    %c0_82 = arith.constant 0 : index
    %c0_83 = arith.constant 0 : index
    %146 = vector.load %arg5[%c1, %c0_82, %c0_83] : memref<3x32x32xf32, #tpu.memory_space<vmem>>, vector<1x32x32xf32>
    %147 = vector.shape_cast %146 : vector<1x32x32xf32> to vector<32x32xf32>
    %cst_84 = arith.constant dense<0.000000e+00> : vector<8x32xf32>
    %148 = tpu.matmul %145, %147, %cst_84 {dimension_numbers = #tpu.dot_dimension_numbers<[1], [0], [0], [1], [0, 0, 1, 1], [], []>} : vector<8x32xf32>, vector<32x32xf32>, vector<8x32xf32> -> vector<8x32xf32>
    %c1_85 = arith.constant 1 : index
    %c0_86 = arith.constant 0 : index
    %c0_87 = arith.constant 0 : index
    %149 = vector.load %arg7[%c1_85, %c0_86, %c0_87] : memref<3x1x32xf32, #tpu.memory_space<vmem>>, vector<1x1x32xf32>
    %150 = vector.shape_cast %149 : vector<1x1x32xf32> to vector<1x32xf32>
    %151 = vector.broadcast %150 : vector<1x32xf32> to vector<8x32xf32>
    %152 = arith.addf %148, %151 : vector<8x32xf32>
    %c1_88 = arith.constant 1 : index
    %c0_89 = arith.constant 0 : index
    %c0_90 = arith.constant 0 : index
    %153 = vector.load %arg6[%c1_88, %c0_89, %c0_90] : memref<3x128x32xbf16, #tpu.memory_space<vmem>>, vector<1x128x32xbf16>
    %154 = vector.shape_cast %153 : vector<1x128x32xbf16> to vector<128x32xbf16>
    %cst_91 = arith.constant dense<0.000000e+00> : vector<64x32xf32>
    %155 = tpu.matmul %4, %154, %cst_91 {dimension_numbers = #tpu.dot_dimension_numbers<[1], [0], [0], [1], [0, 0, 1, 1], [], []>} : vector<64x128xbf16>, vector<128x32xbf16>, vector<64x32xf32> -> vector<64x32xf32>
    %156 = vector.shape_cast %155 : vector<64x32xf32> to vector<8x8x32xf32>
    %157 = vector.shape_cast %6 : vector<8x1xf32> to vector<8x1x1xf32>
    %158 = vector.broadcast %157 : vector<8x1x1xf32> to vector<8x8x32xf32>
    %159 = arith.mulf %156, %158 : vector<8x8x32xf32>
    %160 = vector.shape_cast %152 : vector<8x32xf32> to vector<8x1x32xf32>
    %161 = vector.broadcast %160 : vector<8x1x32xf32> to vector<8x8x32xf32>
    %162 = arith.addf %159, %161 : vector<8x8x32xf32>
    %cst_92 = arith.constant 5.000000e-01 : f32
    %163 = vector.broadcast %cst_92 : f32 to vector<8x8x32xf32>
    %164 = arith.mulf %163, %162 : vector<8x8x32xf32>
    %cst_93 = arith.constant 4.471500e-02 : f32
    %165 = vector.broadcast %cst_93 : f32 to vector<8x8x32xf32>
    %166 = arith.mulf %165, %162 : vector<8x8x32xf32>
    %167 = arith.mulf %166, %162 : vector<8x8x32xf32>
    %168 = arith.mulf %167, %162 : vector<8x8x32xf32>
    %169 = arith.addf %162, %168 : vector<8x8x32xf32>
    %cst_94 = arith.constant 0.797884583 : f32
    %170 = vector.broadcast %cst_94 : f32 to vector<8x8x32xf32>
    %171 = arith.mulf %170, %169 : vector<8x8x32xf32>
    %172 = math.tanh %171 : vector<8x8x32xf32>
    %cst_95 = arith.constant 1.000000e+00 : f32
    %173 = vector.broadcast %cst_95 : f32 to vector<8x8x32xf32>
    %174 = arith.addf %173, %172 : vector<8x8x32xf32>
    %175 = arith.mulf %164, %174 : vector<8x8x32xf32>
    %176 = vector.shape_cast %175 : vector<8x8x32xf32> to vector<64x32xf32>
    %c1_96 = arith.constant 1 : index
    %c0_97 = arith.constant 0 : index
    %c0_98 = arith.constant 0 : index
    %177 = vector.load %arg8[%c1_96, %c0_97, %c0_98] : memref<3x32x32xf32, #tpu.memory_space<vmem>>, vector<1x32x32xf32>
    %178 = vector.shape_cast %177 : vector<1x32x32xf32> to vector<32x32xf32>
    %cst_99 = arith.constant dense<0.000000e+00> : vector<64x32xf32>
    %179 = tpu.matmul %176, %178, %cst_99 {dimension_numbers = #tpu.dot_dimension_numbers<[1], [0], [0], [1], [0, 0, 1, 1], [], []>} : vector<64x32xf32>, vector<32x32xf32>, vector<64x32xf32> -> vector<64x32xf32>
    %c1_100 = arith.constant 1 : index
    %c0_101 = arith.constant 0 : index
    %c0_102 = arith.constant 0 : index
    %180 = vector.load %arg9[%c1_100, %c0_101, %c0_102] : memref<3x1x32xf32, #tpu.memory_space<vmem>>, vector<1x1x32xf32>
    %181 = vector.shape_cast %180 : vector<1x1x32xf32> to vector<1x32xf32>
    %182 = vector.broadcast %181 : vector<1x32xf32> to vector<64x32xf32>
    %183 = arith.addf %179, %182 : vector<64x32xf32>
    %cst_103 = arith.constant 5.000000e-01 : f32
    %184 = vector.broadcast %cst_103 : f32 to vector<64x32xf32>
    %185 = arith.mulf %184, %183 : vector<64x32xf32>
    %cst_104 = arith.constant 4.471500e-02 : f32
    %186 = vector.broadcast %cst_104 : f32 to vector<64x32xf32>
    %187 = arith.mulf %186, %183 : vector<64x32xf32>
    %188 = arith.mulf %187, %183 : vector<64x32xf32>
    %189 = arith.mulf %188, %183 : vector<64x32xf32>
    %190 = arith.addf %183, %189 : vector<64x32xf32>
    %cst_105 = arith.constant 0.797884583 : f32
    %191 = vector.broadcast %cst_105 : f32 to vector<64x32xf32>
    %192 = arith.mulf %191, %190 : vector<64x32xf32>
    %193 = math.tanh %192 : vector<64x32xf32>
    %cst_106 = arith.constant 1.000000e+00 : f32
    %194 = vector.broadcast %cst_106 : f32 to vector<64x32xf32>
    %195 = arith.addf %194, %193 : vector<64x32xf32>
    %196 = arith.mulf %185, %195 : vector<64x32xf32>
    %197 = vector.shape_cast %196 : vector<64x32xf32> to vector<8x8x32xf32>
    %cst_107 = arith.constant dense<0.000000e+00> : vector<8x32xf32>
    %198 = vector.multi_reduction <add>, %197, %cst_107 [1] : vector<8x8x32xf32> to vector<8x32xf32>
    %c1_108 = arith.constant 1 : index
    %c0_109 = arith.constant 0 : index
    %c0_110 = arith.constant 0 : index
    %199 = vector.load %arg10[%c1_108, %c0_109, %c0_110] : memref<3x32x32xf32, #tpu.memory_space<vmem>>, vector<1x32x32xf32>
    %200 = vector.shape_cast %199 : vector<1x32x32xf32> to vector<32x32xf32>
    %cst_111 = arith.constant dense<0.000000e+00> : vector<8x32xf32>
    %201 = tpu.matmul %198, %200, %cst_111 {dimension_numbers = #tpu.dot_dimension_numbers<[1], [0], [0], [1], [0, 0, 1, 1], [], []>} : vector<8x32xf32>, vector<32x32xf32>, vector<8x32xf32> -> vector<8x32xf32>
    %c1_112 = arith.constant 1 : index
    %c0_113 = arith.constant 0 : index
    %c0_114 = arith.constant 0 : index
    %202 = vector.load %arg11[%c1_112, %c0_113, %c0_114] : memref<3x1x32xf32, #tpu.memory_space<vmem>>, vector<1x1x32xf32>
    %203 = vector.shape_cast %202 : vector<1x1x32xf32> to vector<1x32xf32>
    %204 = vector.broadcast %203 : vector<1x32xf32> to vector<8x32xf32>
    %205 = arith.addf %201, %204 : vector<8x32xf32>
    %206 = arith.addf %145, %205 : vector<8x32xf32>
    %c1_115 = arith.constant 1 : index
    %c0_116 = arith.constant 0 : index
    %c0_117 = arith.constant 0 : index
    %207 = vector.load %arg16[%c1_115, %c0_116, %c0_117] : memref<3x1x32xf32, #tpu.memory_space<vmem>>, vector<1x1x32xf32>
    %208 = vector.shape_cast %207 : vector<1x1x32xf32> to vector<1x32xf32>
    %c1_118 = arith.constant 1 : index
    %c0_119 = arith.constant 0 : index
    %c0_120 = arith.constant 0 : index
    %209 = vector.load %arg17[%c1_118, %c0_119, %c0_120] : memref<3x1x32xf32, #tpu.memory_space<vmem>>, vector<1x1x32xf32>
    %210 = vector.shape_cast %209 : vector<1x1x32xf32> to vector<1x32xf32>
    %cst_121 = arith.constant dense<0.000000e+00> : vector<8xf32>
    %211 = vector.multi_reduction <add>, %206, %cst_121 [1] : vector<8x32xf32> to vector<8xf32>
    %212 = vector.shape_cast %211 : vector<8xf32> to vector<8x1xf32>
    %cst_122 = arith.constant 3.200000e+01 : f32
    %213 = vector.broadcast %cst_122 : f32 to vector<8x1xf32>
    %214 = arith.divf %212, %213 : vector<8x1xf32>
    %215 = vector.broadcast %214 : vector<8x1xf32> to vector<8x32xf32>
    %216 = arith.subf %206, %215 : vector<8x32xf32>
    %217 = arith.mulf %216, %216 : vector<8x32xf32>
    %cst_123 = arith.constant dense<0.000000e+00> : vector<8xf32>
    %218 = vector.multi_reduction <add>, %217, %cst_123 [1] : vector<8x32xf32> to vector<8xf32>
    %219 = vector.shape_cast %218 : vector<8xf32> to vector<8x1xf32>
    %cst_124 = arith.constant 3.200000e+01 : f32
    %220 = vector.broadcast %cst_124 : f32 to vector<8x1xf32>
    %221 = arith.divf %219, %220 : vector<8x1xf32>
    %cst_125 = arith.constant 9.99999974E-6 : f32
    %222 = vector.broadcast %cst_125 : f32 to vector<8x1xf32>
    %223 = arith.addf %221, %222 : vector<8x1xf32>
    %224 = math.rsqrt %223 : vector<8x1xf32>
    %225 = vector.broadcast %224 : vector<8x1xf32> to vector<8x32xf32>
    %226 = arith.mulf %216, %225 : vector<8x32xf32>
    %227 = vector.broadcast %208 : vector<1x32xf32> to vector<8x32xf32>
    %228 = arith.mulf %226, %227 : vector<8x32xf32>
    %229 = vector.broadcast %210 : vector<1x32xf32> to vector<8x32xf32>
    %230 = arith.addf %228, %229 : vector<8x32xf32>
    %c1_126 = arith.constant 1 : index
    %c0_127 = arith.constant 0 : index
    %c0_128 = arith.constant 0 : index
    %231 = vector.load %arg12[%c1_126, %c0_127, %c0_128] : memref<3x32x128xf32, #tpu.memory_space<vmem>>, vector<1x32x128xf32>
    %232 = vector.shape_cast %231 : vector<1x32x128xf32> to vector<32x128xf32>
    %cst_129 = arith.constant dense<0.000000e+00> : vector<8x128xf32>
    %233 = tpu.matmul %230, %232, %cst_129 {dimension_numbers = #tpu.dot_dimension_numbers<[1], [0], [0], [1], [0, 0, 1, 1], [], []>} : vector<8x32xf32>, vector<32x128xf32>, vector<8x128xf32> -> vector<8x128xf32>
    %c1_130 = arith.constant 1 : index
    %c0_131 = arith.constant 0 : index
    %c0_132 = arith.constant 0 : index
    %234 = vector.load %arg13[%c1_130, %c0_131, %c0_132] : memref<3x1x128xf32, #tpu.memory_space<vmem>>, vector<1x1x128xf32>
    %235 = vector.shape_cast %234 : vector<1x1x128xf32> to vector<1x128xf32>
    %236 = vector.broadcast %235 : vector<1x128xf32> to vector<8x128xf32>
    %237 = arith.addf %233, %236 : vector<8x128xf32>
    %cst_133 = arith.constant 5.000000e-01 : f32
    %238 = vector.broadcast %cst_133 : f32 to vector<8x128xf32>
    %239 = arith.mulf %238, %237 : vector<8x128xf32>
    %cst_134 = arith.constant 4.471500e-02 : f32
    %240 = vector.broadcast %cst_134 : f32 to vector<8x128xf32>
    %241 = arith.mulf %240, %237 : vector<8x128xf32>
    %242 = arith.mulf %241, %237 : vector<8x128xf32>
    %243 = arith.mulf %242, %237 : vector<8x128xf32>
    %244 = arith.addf %237, %243 : vector<8x128xf32>
    %cst_135 = arith.constant 0.797884583 : f32
    %245 = vector.broadcast %cst_135 : f32 to vector<8x128xf32>
    %246 = arith.mulf %245, %244 : vector<8x128xf32>
    %247 = math.tanh %246 : vector<8x128xf32>
    %cst_136 = arith.constant 1.000000e+00 : f32
    %248 = vector.broadcast %cst_136 : f32 to vector<8x128xf32>
    %249 = arith.addf %248, %247 : vector<8x128xf32>
    %250 = arith.mulf %239, %249 : vector<8x128xf32>
    %c1_137 = arith.constant 1 : index
    %c0_138 = arith.constant 0 : index
    %c0_139 = arith.constant 0 : index
    %251 = vector.load %arg14[%c1_137, %c0_138, %c0_139] : memref<3x128x32xf32, #tpu.memory_space<vmem>>, vector<1x128x32xf32>
    %252 = vector.shape_cast %251 : vector<1x128x32xf32> to vector<128x32xf32>
    %cst_140 = arith.constant dense<0.000000e+00> : vector<8x32xf32>
    %253 = tpu.matmul %250, %252, %cst_140 {dimension_numbers = #tpu.dot_dimension_numbers<[1], [0], [0], [1], [0, 0, 1, 1], [], []>} : vector<8x128xf32>, vector<128x32xf32>, vector<8x32xf32> -> vector<8x32xf32>
    %c1_141 = arith.constant 1 : index
    %c0_142 = arith.constant 0 : index
    %c0_143 = arith.constant 0 : index
    %254 = vector.load %arg15[%c1_141, %c0_142, %c0_143] : memref<3x1x32xf32, #tpu.memory_space<vmem>>, vector<1x1x32xf32>
    %255 = vector.shape_cast %254 : vector<1x1x32xf32> to vector<1x32xf32>
    %256 = vector.broadcast %255 : vector<1x32xf32> to vector<8x32xf32>
    %257 = arith.addf %253, %256 : vector<8x32xf32>
    %258 = arith.addf %230, %257 : vector<8x32xf32>
    %c1_144 = arith.constant 1 : index
    %c0_145 = arith.constant 0 : index
    %c0_146 = arith.constant 0 : index
    %259 = vector.load %arg18[%c1_144, %c0_145, %c0_146] : memref<3x1x32xf32, #tpu.memory_space<vmem>>, vector<1x1x32xf32>
    %260 = vector.shape_cast %259 : vector<1x1x32xf32> to vector<1x32xf32>
    %c1_147 = arith.constant 1 : index
    %c0_148 = arith.constant 0 : index
    %c0_149 = arith.constant 0 : index
    %261 = vector.load %arg19[%c1_147, %c0_148, %c0_149] : memref<3x1x32xf32, #tpu.memory_space<vmem>>, vector<1x1x32xf32>
    %262 = vector.shape_cast %261 : vector<1x1x32xf32> to vector<1x32xf32>
    %cst_150 = arith.constant dense<0.000000e+00> : vector<8xf32>
    %263 = vector.multi_reduction <add>, %258, %cst_150 [1] : vector<8x32xf32> to vector<8xf32>
    %264 = vector.shape_cast %263 : vector<8xf32> to vector<8x1xf32>
    %cst_151 = arith.constant 3.200000e+01 : f32
    %265 = vector.broadcast %cst_151 : f32 to vector<8x1xf32>
    %266 = arith.divf %264, %265 : vector<8x1xf32>
    %267 = vector.broadcast %266 : vector<8x1xf32> to vector<8x32xf32>
    %268 = arith.subf %258, %267 : vector<8x32xf32>
    %269 = arith.mulf %268, %268 : vector<8x32xf32>
    %cst_152 = arith.constant dense<0.000000e+00> : vector<8xf32>
    %270 = vector.multi_reduction <add>, %269, %cst_152 [1] : vector<8x32xf32> to vector<8xf32>
    %271 = vector.shape_cast %270 : vector<8xf32> to vector<8x1xf32>
    %cst_153 = arith.constant 3.200000e+01 : f32
    %272 = vector.broadcast %cst_153 : f32 to vector<8x1xf32>
    %273 = arith.divf %271, %272 : vector<8x1xf32>
    %cst_154 = arith.constant 9.99999974E-6 : f32
    %274 = vector.broadcast %cst_154 : f32 to vector<8x1xf32>
    %275 = arith.addf %273, %274 : vector<8x1xf32>
    %276 = math.rsqrt %275 : vector<8x1xf32>
    %277 = vector.broadcast %276 : vector<8x1xf32> to vector<8x32xf32>
    %278 = arith.mulf %268, %277 : vector<8x32xf32>
    %279 = vector.broadcast %260 : vector<1x32xf32> to vector<8x32xf32>
    %280 = arith.mulf %278, %279 : vector<8x32xf32>
    %281 = vector.broadcast %262 : vector<1x32xf32> to vector<8x32xf32>
    %282 = arith.addf %280, %281 : vector<8x32xf32>
    %283 = vector.broadcast %6 : vector<8x1xf32> to vector<8x32xf32>
    %284 = arith.mulf %283, %282 : vector<8x32xf32>
    %c2 = arith.constant 2 : index
    %c0_155 = arith.constant 0 : index
    %c0_156 = arith.constant 0 : index
    %285 = vector.load %arg5[%c2, %c0_155, %c0_156] : memref<3x32x32xf32, #tpu.memory_space<vmem>>, vector<1x32x32xf32>
    %286 = vector.shape_cast %285 : vector<1x32x32xf32> to vector<32x32xf32>
    %cst_157 = arith.constant dense<0.000000e+00> : vector<8x32xf32>
    %287 = tpu.matmul %284, %286, %cst_157 {dimension_numbers = #tpu.dot_dimension_numbers<[1], [0], [0], [1], [0, 0, 1, 1], [], []>} : vector<8x32xf32>, vector<32x32xf32>, vector<8x32xf32> -> vector<8x32xf32>
    %c2_158 = arith.constant 2 : index
    %c0_159 = arith.constant 0 : index
    %c0_160 = arith.constant 0 : index
    %288 = vector.load %arg7[%c2_158, %c0_159, %c0_160] : memref<3x1x32xf32, #tpu.memory_space<vmem>>, vector<1x1x32xf32>
    %289 = vector.shape_cast %288 : vector<1x1x32xf32> to vector<1x32xf32>
    %290 = vector.broadcast %289 : vector<1x32xf32> to vector<8x32xf32>
    %291 = arith.addf %287, %290 : vector<8x32xf32>
    %c2_161 = arith.constant 2 : index
    %c0_162 = arith.constant 0 : index
    %c0_163 = arith.constant 0 : index
    %292 = vector.load %arg6[%c2_161, %c0_162, %c0_163] : memref<3x128x32xbf16, #tpu.memory_space<vmem>>, vector<1x128x32xbf16>
    %293 = vector.shape_cast %292 : vector<1x128x32xbf16> to vector<128x32xbf16>
    %cst_164 = arith.constant dense<0.000000e+00> : vector<64x32xf32>
    %294 = tpu.matmul %4, %293, %cst_164 {dimension_numbers = #tpu.dot_dimension_numbers<[1], [0], [0], [1], [0, 0, 1, 1], [], []>} : vector<64x128xbf16>, vector<128x32xbf16>, vector<64x32xf32> -> vector<64x32xf32>
    %295 = vector.shape_cast %294 : vector<64x32xf32> to vector<8x8x32xf32>
    %296 = vector.shape_cast %6 : vector<8x1xf32> to vector<8x1x1xf32>
    %297 = vector.broadcast %296 : vector<8x1x1xf32> to vector<8x8x32xf32>
    %298 = arith.mulf %295, %297 : vector<8x8x32xf32>
    %299 = vector.shape_cast %291 : vector<8x32xf32> to vector<8x1x32xf32>
    %300 = vector.broadcast %299 : vector<8x1x32xf32> to vector<8x8x32xf32>
    %301 = arith.addf %298, %300 : vector<8x8x32xf32>
    %cst_165 = arith.constant 5.000000e-01 : f32
    %302 = vector.broadcast %cst_165 : f32 to vector<8x8x32xf32>
    %303 = arith.mulf %302, %301 : vector<8x8x32xf32>
    %cst_166 = arith.constant 4.471500e-02 : f32
    %304 = vector.broadcast %cst_166 : f32 to vector<8x8x32xf32>
    %305 = arith.mulf %304, %301 : vector<8x8x32xf32>
    %306 = arith.mulf %305, %301 : vector<8x8x32xf32>
    %307 = arith.mulf %306, %301 : vector<8x8x32xf32>
    %308 = arith.addf %301, %307 : vector<8x8x32xf32>
    %cst_167 = arith.constant 0.797884583 : f32
    %309 = vector.broadcast %cst_167 : f32 to vector<8x8x32xf32>
    %310 = arith.mulf %309, %308 : vector<8x8x32xf32>
    %311 = math.tanh %310 : vector<8x8x32xf32>
    %cst_168 = arith.constant 1.000000e+00 : f32
    %312 = vector.broadcast %cst_168 : f32 to vector<8x8x32xf32>
    %313 = arith.addf %312, %311 : vector<8x8x32xf32>
    %314 = arith.mulf %303, %313 : vector<8x8x32xf32>
    %315 = vector.shape_cast %314 : vector<8x8x32xf32> to vector<64x32xf32>
    %c2_169 = arith.constant 2 : index
    %c0_170 = arith.constant 0 : index
    %c0_171 = arith.constant 0 : index
    %316 = vector.load %arg8[%c2_169, %c0_170, %c0_171] : memref<3x32x32xf32, #tpu.memory_space<vmem>>, vector<1x32x32xf32>
    %317 = vector.shape_cast %316 : vector<1x32x32xf32> to vector<32x32xf32>
    %cst_172 = arith.constant dense<0.000000e+00> : vector<64x32xf32>
    %318 = tpu.matmul %315, %317, %cst_172 {dimension_numbers = #tpu.dot_dimension_numbers<[1], [0], [0], [1], [0, 0, 1, 1], [], []>} : vector<64x32xf32>, vector<32x32xf32>, vector<64x32xf32> -> vector<64x32xf32>
    %c2_173 = arith.constant 2 : index
    %c0_174 = arith.constant 0 : index
    %c0_175 = arith.constant 0 : index
    %319 = vector.load %arg9[%c2_173, %c0_174, %c0_175] : memref<3x1x32xf32, #tpu.memory_space<vmem>>, vector<1x1x32xf32>
    %320 = vector.shape_cast %319 : vector<1x1x32xf32> to vector<1x32xf32>
    %321 = vector.broadcast %320 : vector<1x32xf32> to vector<64x32xf32>
    %322 = arith.addf %318, %321 : vector<64x32xf32>
    %cst_176 = arith.constant 5.000000e-01 : f32
    %323 = vector.broadcast %cst_176 : f32 to vector<64x32xf32>
    %324 = arith.mulf %323, %322 : vector<64x32xf32>
    %cst_177 = arith.constant 4.471500e-02 : f32
    %325 = vector.broadcast %cst_177 : f32 to vector<64x32xf32>
    %326 = arith.mulf %325, %322 : vector<64x32xf32>
    %327 = arith.mulf %326, %322 : vector<64x32xf32>
    %328 = arith.mulf %327, %322 : vector<64x32xf32>
    %329 = arith.addf %322, %328 : vector<64x32xf32>
    %cst_178 = arith.constant 0.797884583 : f32
    %330 = vector.broadcast %cst_178 : f32 to vector<64x32xf32>
    %331 = arith.mulf %330, %329 : vector<64x32xf32>
    %332 = math.tanh %331 : vector<64x32xf32>
    %cst_179 = arith.constant 1.000000e+00 : f32
    %333 = vector.broadcast %cst_179 : f32 to vector<64x32xf32>
    %334 = arith.addf %333, %332 : vector<64x32xf32>
    %335 = arith.mulf %324, %334 : vector<64x32xf32>
    %336 = vector.shape_cast %335 : vector<64x32xf32> to vector<8x8x32xf32>
    %cst_180 = arith.constant dense<0.000000e+00> : vector<8x32xf32>
    %337 = vector.multi_reduction <add>, %336, %cst_180 [1] : vector<8x8x32xf32> to vector<8x32xf32>
    %c2_181 = arith.constant 2 : index
    %c0_182 = arith.constant 0 : index
    %c0_183 = arith.constant 0 : index
    %338 = vector.load %arg10[%c2_181, %c0_182, %c0_183] : memref<3x32x32xf32, #tpu.memory_space<vmem>>, vector<1x32x32xf32>
    %339 = vector.shape_cast %338 : vector<1x32x32xf32> to vector<32x32xf32>
    %cst_184 = arith.constant dense<0.000000e+00> : vector<8x32xf32>
    %340 = tpu.matmul %337, %339, %cst_184 {dimension_numbers = #tpu.dot_dimension_numbers<[1], [0], [0], [1], [0, 0, 1, 1], [], []>} : vector<8x32xf32>, vector<32x32xf32>, vector<8x32xf32> -> vector<8x32xf32>
    %c2_185 = arith.constant 2 : index
    %c0_186 = arith.constant 0 : index
    %c0_187 = arith.constant 0 : index
    %341 = vector.load %arg11[%c2_185, %c0_186, %c0_187] : memref<3x1x32xf32, #tpu.memory_space<vmem>>, vector<1x1x32xf32>
    %342 = vector.shape_cast %341 : vector<1x1x32xf32> to vector<1x32xf32>
    %343 = vector.broadcast %342 : vector<1x32xf32> to vector<8x32xf32>
    %344 = arith.addf %340, %343 : vector<8x32xf32>
    %345 = arith.addf %284, %344 : vector<8x32xf32>
    %c2_188 = arith.constant 2 : index
    %c0_189 = arith.constant 0 : index
    %c0_190 = arith.constant 0 : index
    %346 = vector.load %arg16[%c2_188, %c0_189, %c0_190] : memref<3x1x32xf32, #tpu.memory_space<vmem>>, vector<1x1x32xf32>
    %347 = vector.shape_cast %346 : vector<1x1x32xf32> to vector<1x32xf32>
    %c2_191 = arith.constant 2 : index
    %c0_192 = arith.constant 0 : index
    %c0_193 = arith.constant 0 : index
    %348 = vector.load %arg17[%c2_191, %c0_192, %c0_193] : memref<3x1x32xf32, #tpu.memory_space<vmem>>, vector<1x1x32xf32>
    %349 = vector.shape_cast %348 : vector<1x1x32xf32> to vector<1x32xf32>
    %cst_194 = arith.constant dense<0.000000e+00> : vector<8xf32>
    %350 = vector.multi_reduction <add>, %345, %cst_194 [1] : vector<8x32xf32> to vector<8xf32>
    %351 = vector.shape_cast %350 : vector<8xf32> to vector<8x1xf32>
    %cst_195 = arith.constant 3.200000e+01 : f32
    %352 = vector.broadcast %cst_195 : f32 to vector<8x1xf32>
    %353 = arith.divf %351, %352 : vector<8x1xf32>
    %354 = vector.broadcast %353 : vector<8x1xf32> to vector<8x32xf32>
    %355 = arith.subf %345, %354 : vector<8x32xf32>
    %356 = arith.mulf %355, %355 : vector<8x32xf32>
    %cst_196 = arith.constant dense<0.000000e+00> : vector<8xf32>
    %357 = vector.multi_reduction <add>, %356, %cst_196 [1] : vector<8x32xf32> to vector<8xf32>
    %358 = vector.shape_cast %357 : vector<8xf32> to vector<8x1xf32>
    %cst_197 = arith.constant 3.200000e+01 : f32
    %359 = vector.broadcast %cst_197 : f32 to vector<8x1xf32>
    %360 = arith.divf %358, %359 : vector<8x1xf32>
    %cst_198 = arith.constant 9.99999974E-6 : f32
    %361 = vector.broadcast %cst_198 : f32 to vector<8x1xf32>
    %362 = arith.addf %360, %361 : vector<8x1xf32>
    %363 = math.rsqrt %362 : vector<8x1xf32>
    %364 = vector.broadcast %363 : vector<8x1xf32> to vector<8x32xf32>
    %365 = arith.mulf %355, %364 : vector<8x32xf32>
    %366 = vector.broadcast %347 : vector<1x32xf32> to vector<8x32xf32>
    %367 = arith.mulf %365, %366 : vector<8x32xf32>
    %368 = vector.broadcast %349 : vector<1x32xf32> to vector<8x32xf32>
    %369 = arith.addf %367, %368 : vector<8x32xf32>
    %c2_199 = arith.constant 2 : index
    %c0_200 = arith.constant 0 : index
    %c0_201 = arith.constant 0 : index
    %370 = vector.load %arg12[%c2_199, %c0_200, %c0_201] : memref<3x32x128xf32, #tpu.memory_space<vmem>>, vector<1x32x128xf32>
    %371 = vector.shape_cast %370 : vector<1x32x128xf32> to vector<32x128xf32>
    %cst_202 = arith.constant dense<0.000000e+00> : vector<8x128xf32>
    %372 = tpu.matmul %369, %371, %cst_202 {dimension_numbers = #tpu.dot_dimension_numbers<[1], [0], [0], [1], [0, 0, 1, 1], [], []>} : vector<8x32xf32>, vector<32x128xf32>, vector<8x128xf32> -> vector<8x128xf32>
    %c2_203 = arith.constant 2 : index
    %c0_204 = arith.constant 0 : index
    %c0_205 = arith.constant 0 : index
    %373 = vector.load %arg13[%c2_203, %c0_204, %c0_205] : memref<3x1x128xf32, #tpu.memory_space<vmem>>, vector<1x1x128xf32>
    %374 = vector.shape_cast %373 : vector<1x1x128xf32> to vector<1x128xf32>
    %375 = vector.broadcast %374 : vector<1x128xf32> to vector<8x128xf32>
    %376 = arith.addf %372, %375 : vector<8x128xf32>
    %cst_206 = arith.constant 5.000000e-01 : f32
    %377 = vector.broadcast %cst_206 : f32 to vector<8x128xf32>
    %378 = arith.mulf %377, %376 : vector<8x128xf32>
    %cst_207 = arith.constant 4.471500e-02 : f32
    %379 = vector.broadcast %cst_207 : f32 to vector<8x128xf32>
    %380 = arith.mulf %379, %376 : vector<8x128xf32>
    %381 = arith.mulf %380, %376 : vector<8x128xf32>
    %382 = arith.mulf %381, %376 : vector<8x128xf32>
    %383 = arith.addf %376, %382 : vector<8x128xf32>
    %cst_208 = arith.constant 0.797884583 : f32
    %384 = vector.broadcast %cst_208 : f32 to vector<8x128xf32>
    %385 = arith.mulf %384, %383 : vector<8x128xf32>
    %386 = math.tanh %385 : vector<8x128xf32>
    %cst_209 = arith.constant 1.000000e+00 : f32
    %387 = vector.broadcast %cst_209 : f32 to vector<8x128xf32>
    %388 = arith.addf %387, %386 : vector<8x128xf32>
    %389 = arith.mulf %378, %388 : vector<8x128xf32>
    %c2_210 = arith.constant 2 : index
    %c0_211 = arith.constant 0 : index
    %c0_212 = arith.constant 0 : index
    %390 = vector.load %arg14[%c2_210, %c0_211, %c0_212] : memref<3x128x32xf32, #tpu.memory_space<vmem>>, vector<1x128x32xf32>
    %391 = vector.shape_cast %390 : vector<1x128x32xf32> to vector<128x32xf32>
    %cst_213 = arith.constant dense<0.000000e+00> : vector<8x32xf32>
    %392 = tpu.matmul %389, %391, %cst_213 {dimension_numbers = #tpu.dot_dimension_numbers<[1], [0], [0], [1], [0, 0, 1, 1], [], []>} : vector<8x128xf32>, vector<128x32xf32>, vector<8x32xf32> -> vector<8x32xf32>
    %c2_214 = arith.constant 2 : index
    %c0_215 = arith.constant 0 : index
    %c0_216 = arith.constant 0 : index
    %393 = vector.load %arg15[%c2_214, %c0_215, %c0_216] : memref<3x1x32xf32, #tpu.memory_space<vmem>>, vector<1x1x32xf32>
    %394 = vector.shape_cast %393 : vector<1x1x32xf32> to vector<1x32xf32>
    %395 = vector.broadcast %394 : vector<1x32xf32> to vector<8x32xf32>
    %396 = arith.addf %392, %395 : vector<8x32xf32>
    %397 = arith.addf %369, %396 : vector<8x32xf32>
    %c2_217 = arith.constant 2 : index
    %c0_218 = arith.constant 0 : index
    %c0_219 = arith.constant 0 : index
    %398 = vector.load %arg18[%c2_217, %c0_218, %c0_219] : memref<3x1x32xf32, #tpu.memory_space<vmem>>, vector<1x1x32xf32>
    %399 = vector.shape_cast %398 : vector<1x1x32xf32> to vector<1x32xf32>
    %c2_220 = arith.constant 2 : index
    %c0_221 = arith.constant 0 : index
    %c0_222 = arith.constant 0 : index
    %400 = vector.load %arg19[%c2_220, %c0_221, %c0_222] : memref<3x1x32xf32, #tpu.memory_space<vmem>>, vector<1x1x32xf32>
    %401 = vector.shape_cast %400 : vector<1x1x32xf32> to vector<1x32xf32>
    %cst_223 = arith.constant dense<0.000000e+00> : vector<8xf32>
    %402 = vector.multi_reduction <add>, %397, %cst_223 [1] : vector<8x32xf32> to vector<8xf32>
    %403 = vector.shape_cast %402 : vector<8xf32> to vector<8x1xf32>
    %cst_224 = arith.constant 3.200000e+01 : f32
    %404 = vector.broadcast %cst_224 : f32 to vector<8x1xf32>
    %405 = arith.divf %403, %404 : vector<8x1xf32>
    %406 = vector.broadcast %405 : vector<8x1xf32> to vector<8x32xf32>
    %407 = arith.subf %397, %406 : vector<8x32xf32>
    %408 = arith.mulf %407, %407 : vector<8x32xf32>
    %cst_225 = arith.constant dense<0.000000e+00> : vector<8xf32>
    %409 = vector.multi_reduction <add>, %408, %cst_225 [1] : vector<8x32xf32> to vector<8xf32>
    %410 = vector.shape_cast %409 : vector<8xf32> to vector<8x1xf32>
    %cst_226 = arith.constant 3.200000e+01 : f32
    %411 = vector.broadcast %cst_226 : f32 to vector<8x1xf32>
    %412 = arith.divf %410, %411 : vector<8x1xf32>
    %cst_227 = arith.constant 9.99999974E-6 : f32
    %413 = vector.broadcast %cst_227 : f32 to vector<8x1xf32>
    %414 = arith.addf %412, %413 : vector<8x1xf32>
    %415 = math.rsqrt %414 : vector<8x1xf32>
    %416 = vector.broadcast %415 : vector<8x1xf32> to vector<8x32xf32>
    %417 = arith.mulf %407, %416 : vector<8x32xf32>
    %418 = vector.broadcast %399 : vector<1x32xf32> to vector<8x32xf32>
    %419 = arith.mulf %417, %418 : vector<8x32xf32>
    %420 = vector.broadcast %401 : vector<1x32xf32> to vector<8x32xf32>
    %421 = arith.addf %419, %420 : vector<8x32xf32>
    %422 = vector.broadcast %6 : vector<8x1xf32> to vector<8x32xf32>
    %423 = arith.mulf %422, %421 : vector<8x32xf32>
    %c0_228 = arith.constant 0 : index
    %c0_229 = arith.constant 0 : index
    %c0_230 = arith.constant 0 : index
    %424 = vector.load %arg20[%c0_228, %c0_229, %c0_230] : memref<1x8x32xf32, #tpu.memory_space<vmem>>, vector<1x8x32xf32>
    %425 = vector.shape_cast %424 : vector<1x8x32xf32> to vector<8x32xf32>
    %426 = vector.shape_cast %423 : vector<8x32xf32> to vector<1x8x32xf32>
    tpu.vector_store %arg20[%c0_228, %c0_229, %c0_230], %426 {strides = array<i32>} : memref<1x8x32xf32, #tpu.memory_space<vmem>>, vector<1x8x32xf32>,
    return
  }
  func.func @transform_0(%arg0: i32, %arg1: i32) -> (i32, i32, i32) {
    %c0_i32 = arith.constant 0 : i32
    %c0_i32_0 = arith.constant 0 : i32
    return %arg0, %arg1, %c0_i32 : i32, i32, i32
  }
  func.func @transform_1(%arg0: i32, %arg1: i32) -> (i32, i32, i32, i32) {
    %c0_i32 = arith.constant 0 : i32
    %c0_i32_0 = arith.constant 0 : i32
    %c0_i32_1 = arith.constant 0 : i32
    return %arg0, %arg1, %c0_i32, %c0_i32_0 : i32, i32, i32, i32
  }
  func.func @transform_2(%arg0: i32, %arg1: i32) -> (i32, i32, i32) {
    %c0_i32 = arith.constant 0 : i32
    %c0_i32_0 = arith.constant 0 : i32
    return %arg0, %arg1, %c0_i32 : i32, i32, i32
  }
  func.func @transform_3(%arg0: i32, %arg1: i32) -> (i32, i32, i32) {
    %c0_i32 = arith.constant 0 : i32
    %c0_i32_0 = arith.constant 0 : i32
    %c0_i32_1 = arith.constant 0 : i32
    %c0_i32_2 = arith.constant 0 : i32
    return %c0_i32, %c0_i32_0, %c0_i32_1 : i32, i32, i32
  }
  func.func @transform_4(%arg0: i32, %arg1: i32) -> (i32, i32, i32) {
    %c0_i32 = arith.constant 0 : i32
    %c0_i32_0 = arith.constant 0 : i32
    %c0_i32_1 = arith.constant 0 : i32
    %c0_i32_2 = arith.constant 0 : i32
    return %c0_i32, %c0_i32_0, %c0_i32_1 : i32, i32, i32
  }
  func.func @transform_5(%arg0: i32, %arg1: i32) -> (i32, i32, i32) {
    %c0_i32 = arith.constant 0 : i32
    %c0_i32_0 = arith.constant 0 : i32
    %c0_i32_1 = arith.constant 0 : i32
    %c0_i32_2 = arith.constant 0 : i32
    return %c0_i32, %c0_i32_0, %c0_i32_1 : i32, i32, i32
  }
  func.func @transform_6(%arg0: i32, %arg1: i32) -> (i32, i32, i32) {
    %c0_i32 = arith.constant 0 : i32
    %c0_i32_0 = arith.constant 0 : i32
    %c0_i32_1 = arith.constant 0 : i32
    %c0_i32_2 = arith.constant 0 : i32
    return %c0_i32, %c0_i32_0, %c0_i32_1 : i32, i32, i32
  }
  func.func @transform_7(%arg0: i32, %arg1: i32) -> (i32, i32, i32) {
    %c0_i32 = arith.constant 0 : i32
    %c0_i32_0 = arith.constant 0 : i32
    %c0_i32_1 = arith.constant 0 : i32
    %c0_i32_2 = arith.constant 0 : i32
    return %c0_i32, %c0_i32_0, %c0_i32_1 : i32, i32, i32
  }
  func.func @transform_8(%arg0: i32, %arg1: i32) -> (i32, i32, i32) {
    %c0_i32 = arith.constant 0 : i32
    %c0_i32_0 = arith.constant 0 : i32
    %c0_i32_1 = arith.constant 0 : i32
    %c0_i32_2 = arith.constant 0 : i32
    return %c0_i32, %c0_i32_0, %c0_i32_1 : i32, i32, i32
  }
  func.func @transform_9(%arg0: i32, %arg1: i32) -> (i32, i32, i32) {
    %c0_i32 = arith.constant 0 : i32
    %c0_i32_0 = arith.constant 0 : i32
    %c0_i32_1 = arith.constant 0 : i32
    %c0_i32_2 = arith.constant 0 : i32
    return %c0_i32, %c0_i32_0, %c0_i32_1 : i32, i32, i32
  }
  func.func @transform_10(%arg0: i32, %arg1: i32) -> (i32, i32, i32) {
    %c0_i32 = arith.constant 0 : i32
    %c0_i32_0 = arith.constant 0 : i32
    %c0_i32_1 = arith.constant 0 : i32
    %c0_i32_2 = arith.constant 0 : i32
    return %c0_i32, %c0_i32_0, %c0_i32_1 : i32, i32, i32
  }
  func.func @transform_11(%arg0: i32, %arg1: i32) -> (i32, i32, i32) {
    %c0_i32 = arith.constant 0 : i32
    %c0_i32_0 = arith.constant 0 : i32
    %c0_i32_1 = arith.constant 0 : i32
    %c0_i32_2 = arith.constant 0 : i32
    return %c0_i32, %c0_i32_0, %c0_i32_1 : i32, i32, i32
  }
  func.func @transform_12(%arg0: i32, %arg1: i32) -> (i32, i32, i32) {
    %c0_i32 = arith.constant 0 : i32
    %c0_i32_0 = arith.constant 0 : i32
    %c0_i32_1 = arith.constant 0 : i32
    %c0_i32_2 = arith.constant 0 : i32
    return %c0_i32, %c0_i32_0, %c0_i32_1 : i32, i32, i32
  }
  func.func @transform_13(%arg0: i32, %arg1: i32) -> (i32, i32, i32) {
    %c0_i32 = arith.constant 0 : i32
    %c0_i32_0 = arith.constant 0 : i32
    %c0_i32_1 = arith.constant 0 : i32
    %c0_i32_2 = arith.constant 0 : i32
    return %c0_i32, %c0_i32_0, %c0_i32_1 : i32, i32, i32
  }
  func.func @transform_14(%arg0: i32, %arg1: i32) -> (i32, i32, i32) {
    %c0_i32 = arith.constant 0 : i32
    %c0_i32_0 = arith.constant 0 : i32
    %c0_i32_1 = arith.constant 0 : i32
    %c0_i32_2 = arith.constant 0 : i32
    return %c0_i32, %c0_i32_0, %c0_i32_1 : i32, i32, i32
  }
  func.func @transform_15(%arg0: i32, %arg1: i32) -> (i32, i32, i32) {
    %c0_i32 = arith.constant 0 : i32
    %c0_i32_0 = arith.constant 0 : i32
    %c0_i32_1 = arith.constant 0 : i32
    %c0_i32_2 = arith.constant 0 : i32
    return %c0_i32, %c0_i32_0, %c0_i32_1 : i32, i32, i32
  }
  func.func @transform_16(%arg0: i32, %arg1: i32) -> (i32, i32, i32) {
    %c0_i32 = arith.constant 0 : i32
    %c0_i32_0 = arith.constant 0 : i32
    %c0_i32_1 = arith.constant 0 : i32
    %c0_i32_2 = arith.constant 0 : i32
    return %c0_i32, %c0_i32_0, %c0_i32_1 : i32, i32, i32
  }
  func.func @transform_17(%arg0: i32, %arg1: i32) -> (i32, i32, i32) {
    %c0_i32 = arith.constant 0 : i32
    %c0_i32_0 = arith.constant 0 : i32
    %c0_i32_1 = arith.constant 0 : i32
    %c0_i32_2 = arith.constant 0 : i32
    return %c0_i32, %c0_i32_0, %c0_i32_1 : i32, i32, i32
  }
  func.func @transform_18(%arg0: i32, %arg1: i32) -> (i32, i32, i32) {
    %c0_i32 = arith.constant 0 : i32
    %c0_i32_0 = arith.constant 0 : i32
    return %arg0, %arg1, %c0_i32 : i32, i32, i32
  }
}

</mosaic_0001>

<llo_original>
// kernel: tpu_custom_call.1
$region0: #{tpu_custom_call.1}
  #allocation0 [shape = 'u32[]', space=smem, size = 0x4, offset = 0x4, fixed_abs, tag = 'smem constant byte address 0x4 - core index']
  #allocation1 [shape = 'u32[144,128]{1,0:T(1,128)}', space=vmem, size = 0x12000, scoped, tag = 'internal scratch']
  %s0 = inlined_call_operand.vmem [shape: f32[2,8,32], index: 0, kind: input, shape index: {}]
  %s1 = inlined_call_operand.vmem [shape: bf16[2,8,8,128], index: 1, kind: input, shape index: {}]
  %s2 = inlined_call_operand.vmem [shape: f32[2,8,1], index: 2, kind: input, shape index: {}]
  %s3 = inlined_call_operand.vmem [shape: f32[3,32,32], index: 3, kind: input, shape index: {}]
  %s4 = inlined_call_operand.vmem [shape: bf16[3,128,32], index: 4, kind: input, shape index: {}]
  %s5 = inlined_call_operand.vmem [shape: f32[3,1,32], index: 5, kind: input, shape index: {}]
  %s6 = inlined_call_operand.vmem [shape: f32[3,32,32], index: 6, kind: input, shape index: {}]
  %s7 = inlined_call_operand.vmem [shape: f32[3,1,32], index: 7, kind: input, shape index: {}]
  %s8 = inlined_call_operand.vmem [shape: f32[3,32,32], index: 8, kind: input, shape index: {}]
  %s9 = inlined_call_operand.vmem [shape: f32[3,1,32], index: 9, kind: input, shape index: {}]
  %s10 = inlined_call_operand.vmem [shape: f32[3,32,128], index: 10, kind: input, shape index: {}]
  %s11 = inlined_call_operand.vmem [shape: f32[3,1,128], index: 11, kind: input, shape index: {}]
  %s12 = inlined_call_operand.vmem [shape: f32[3,128,32], index: 12, kind: input, shape index: {}]
  %s13 = inlined_call_operand.vmem [shape: f32[3,1,32], index: 13, kind: input, shape index: {}]
  %s14 = inlined_call_operand.vmem [shape: f32[3,1,32], index: 14, kind: input, shape index: {}]
  %s15 = inlined_call_operand.vmem [shape: f32[3,1,32], index: 15, kind: input, shape index: {}]
  %s16 = inlined_call_operand.vmem [shape: f32[3,1,32], index: 16, kind: input, shape index: {}]
  %s17 = inlined_call_operand.vmem [shape: f32[3,1,32], index: 17, kind: input, shape index: {}]
  %s18 = inlined_call_operand.hbm [shape: f32[2,8,32], index: 18, kind: output, shape index: {}]
  %s19 = sld [smem:[#allocation0]]
  $region105: #{tpu_custom_call.1} parent=0
    _
  %s21 = ssub.s32 1, %s19
  %s22 = scalar_select 0, %s21, %s19
  $region1: #{tpu_custom_call.1} parent=0
    #allocation2 [shape = 'u8[8192]{0}', space=vmem, size = 0x2000, scoped, tag = 'output window, operand 0']
    #allocation3 [shape = 's32[2]{0}', space=sflag, size = 0x8, scoped, tag = 'scoped memory for tpu_custom_call.1']
    %23 = vsyncpa [#allocation3], 0
    %s24 = scalar_lea.sflag [#allocation3], 1
    %25 = vsyncpa %s24, 0
    loop: start=0, step=1, limit=4
    $region2: #{tpu_custom_call.1} parent=1 // loop_pre_header
      _
    $region3: #{tpu_custom_call.1} parent=1 // loop_header
      %s27 = sphi 0, %s31
      %p28 = scmp.ge.s32.totalorder %s27, 4
      %s34 = sphi 0, %s46
      %s35 = sphi 0, %s42
      %s36 = sphi 0, %s34
      %s37 = sphi 0, %s35
      %s38 = sphi 0, %s36
      %s39 = sphi 0, %s37
      %s51 = sphi 0, %s53
      %s54 = sphi 0, %s51
      %s55 = sphi 0, %s54
      %s71 = sphi 0, %s55
      %s79 = sphi 0, %s81
      %s82 = sphi 0, %s79
      %s83 = sphi 0, %s82
      %s99 = sphi 0, %s83
      %s107 = sphi 0, %s109
      %s110 = sphi 0, %s107
      %s111 = sphi 0, %s110
      %s127 = sphi 0, %s111
      %s131 = sphi 0, %s131
      %s133 = sphi 0, %s131
      %s134 = sphi 0, %s133
      %s148 = sphi 0, %s134
      %s152 = sphi 0, %s152
      %s154 = sphi 0, %s152
      %s155 = sphi 0, %s154
      %s169 = sphi 0, %s155
      %s173 = sphi 0, %s173
      %s175 = sphi 0, %s173
      %s176 = sphi 0, %s175
      %s190 = sphi 0, %s176
      %s194 = sphi 0, %s194
      %s196 = sphi 0, %s194
      %s197 = sphi 0, %s196
      %s211 = sphi 0, %s197
      %s215 = sphi 0, %s215
      %s217 = sphi 0, %s215
      %s218 = sphi 0, %s217
      %s232 = sphi 0, %s218
      %s236 = sphi 0, %s236
      %s238 = sphi 0, %s236
      %s239 = sphi 0, %s238
      %s253 = sphi 0, %s239
      %s257 = sphi 0, %s257
      %s259 = sphi 0, %s257
      %s260 = sphi 0, %s259
      %s274 = sphi 0, %s260
      %s278 = sphi 0, %s278
      %s280 = sphi 0, %s278
      %s281 = sphi 0, %s280
      %s295 = sphi 0, %s281
      %s299 = sphi 0, %s299
      %s301 = sphi 0, %s299
      %s302 = sphi 0, %s301
      %s316 = sphi 0, %s302
      %s320 = sphi 0, %s320
      %s322 = sphi 0, %s320
      %s323 = sphi 0, %s322
      %s337 = sphi 0, %s323
      %s341 = sphi 0, %s341
      %s343 = sphi 0, %s341
      %s344 = sphi 0, %s343
      %s358 = sphi 0, %s344
      %s362 = sphi 0, %s362
      %s364 = sphi 0, %s362
      %s365 = sphi 0, %s364
      %s379 = sphi 0, %s365
      %s383 = sphi 0, %s383
      %s385 = sphi 0, %s383
      %s386 = sphi 0, %s385
      %s400 = sphi 0, %s386
      %s404 = sphi 0, %s404
      %s406 = sphi 0, %s404
      %s407 = sphi 0, %s406
      %s421 = sphi 0, %s407
      %s425 = sphi 0, %s425
      %s427 = sphi 0, %s425
      %s428 = sphi 0, %s427
      %s442 = sphi 0, %s428
      %s450 = sphi 0, %s452
      %s453 = sphi 0, %s450
      %s454 = sphi 0, %s453
      %s470 = sphi 0, %s454
    $region4: #{tpu_custom_call.1} parent=1 // loop_header_branch
      %30 = sbr.rel (%p28) target = $region8
    $region5: #{tpu_custom_call.1} parent=1 // loop_body
      %s32 = ssub.s32 %s27, 1
      %s33 = ssub.s32 %s27, 2
      %s40 = sadd.s32 1, %s35
      %p41 = scmp.ge.s32.totalorder %s40, 1
      %s42 = scalar_select %p41, 0, %s40
      %s43 = sadd.s32 1, %s34
      %s44 = scalar_select %p41, %s43, %s34
      %p45 = scmp.ge.s32.totalorder %s44, 2
      %s46 = scalar_select %p45, 0, %s44
      %s47 = ssub.s32 %s34, %s46
      %s48 = ssub.s32 %s35, %s42
      %s49 = sor.u32 %s47, %s48
      %p50 = scmp.eq.s32.totalorder %s49, 0
      %s52 = sadd.s32 %s51, 1
      %s53 = scalar_select %p50, %s51, %s52
      %p56 = pneg %p50
      %p57 = scmp.eq.s32.totalorder %s27, 1
      %p58 = por %p56, %p57
      %p59 = scmp.ne.s32.totalorder %s51, %s54
      %p60 = scmp.eq.s32.totalorder %s27, 0
      %p61 = por %p59, %p60
      %p62 = scmp.ne.s32.totalorder %s51, %s54
      %p63 = scmp.eq.s32.totalorder %s32, 1
      %p64 = por %p62, %p63
      %p65 = scmp.ne.s32.totalorder %s54, %s55
      %p66 = scmp.eq.s32.totalorder %s32, 0
      %p67 = por %p65, %p66
      %p68 = scmp.ne.s32.totalorder %s54, %s55
      %p69 = scmp.eq.s32.totalorder %s33, 1
      %p70 = por %p68, %p69
      %p72 = scmp.ne.s32.totalorder %s55, %s71
      %p73 = scmp.eq.s32.totalorder %s33, 0
      %p74 = por %p72, %p73
      %s75 = ssub.s32 %s34, %s46
      %s76 = ssub.s32 %s35, %s42
      %s77 = sor.u32 %s75, %s76
      %p78 = scmp.eq.s32.totalorder %s77, 0
      %s80 = sadd.s32 %s79, 1
      %s81 = scalar_select %p78, %s79, %s80
      %p84 = pneg %p78
      %p85 = scmp.eq.s32.totalorder %s27, 1
      %p86 = por %p84, %p85
      %p87 = scmp.ne.s32.totalorder %s79, %s82
      %p88 = scmp.eq.s32.totalorder %s27, 0
      %p89 = por %p87, %p88
      %p90 = scmp.ne.s32.totalorder %s79, %s82
      %p91 = scmp.eq.s32.totalorder %s32, 1
      %p92 = por %p90, %p91
      %p93 = scmp.ne.s32.totalorder %s82, %s83
      %p94 = scmp.eq.s32.totalorder %s32, 0
      %p95 = por %p93, %p94
      %p96 = scmp.ne.s32.totalorder %s82, %s83
      %p97 = scmp.eq.s32.totalorder %s33, 1
      %p98 = por %p96, %p97
      %p100 = scmp.ne.s32.totalorder %s83, %s99
      %p101 = scmp.eq.s32.totalorder %s33, 0
      %p102 = por %p100, %p101
      %s103 = ssub.s32 %s34, %s46
      %s104 = ssub.s32 %s35, %s42
      %s105 = sor.u32 %s103, %s104
      %p106 = scmp.eq.s32.totalorder %s105, 0
      %s108 = sadd.s32 %s107, 1
      %s109 = scalar_select %p106, %s107, %s108
      %p112 = pneg %p106
      %p113 = scmp.eq.s32.totalorder %s27, 1
      %p114 = por %p112, %p113
      %p115 = scmp.ne.s32.totalorder %s107, %s110
      %p116 = scmp.eq.s32.totalorder %s27, 0
      %p117 = por %p115, %p116
      %p118 = scmp.ne.s32.totalorder %s107, %s110
      %p119 = scmp.eq.s32.totalorder %s32, 1
      %p120 = por %p118, %p119
      %p121 = scmp.ne.s32.totalorder %s110, %s111
      %p122 = scmp.eq.s32.totalorder %s32, 0
      %p123 = por %p121, %p122
      %p124 = scmp.ne.s32.totalorder %s110, %s111
      %p125 = scmp.eq.s32.totalorder %s33, 1
      %p126 = por %p124, %p125
      %p128 = scmp.ne.s32.totalorder %s111, %s127
      %p129 = scmp.eq.s32.totalorder %s33, 0
      %p130 = por %p128, %p129
      %s132 = sadd.s32 %s131, 1
      %p135 = scmp.eq.s32.totalorder %s27, 1
      %p136 = scmp.ne.s32.totalorder %s131, %s133
      %p137 = scmp.eq.s32.totalorder %s27, 0
      %p138 = por %p136, %p137
      %p139 = scmp.ne.s32.totalorder %s131, %s133
      %p140 = scmp.eq.s32.totalorder %s32, 1
      %p141 = por %p139, %p140
      %p142 = scmp.ne.s32.totalorder %s133, %s134
      %p143 = scmp.eq.s32.totalorder %s32, 0
      %p144 = por %p142, %p143
      %p145 = scmp.ne.s32.totalorder %s133, %s134
      %p146 = scmp.eq.s32.totalorder %s33, 1
      %p147 = por %p145, %p146
      %p149 = scmp.ne.s32.totalorder %s134, %s148
      %p150 = scmp.eq.s32.totalorder %s33, 0
      %p151 = por %p149, %p150
      %s153 = sadd.s32 %s152, 1
      %p156 = scmp.eq.s32.totalorder %s27, 1
      %p157 = scmp.ne.s32.totalorder %s152, %s154
      %p158 = scmp.eq.s32.totalorder %s27, 0
      %p159 = por %p157, %p158
      %p160 = scmp.ne.s32.totalorder %s152, %s154
      %p161 = scmp.eq.s32.totalorder %s32, 1
      %p162 = por %p160, %p161
      %p163 = scmp.ne.s32.totalorder %s154, %s155
      %p164 = scmp.eq.s32.totalorder %s32, 0
      %p165 = por %p163, %p164
      %p166 = scmp.ne.s32.totalorder %s154, %s155
      %p167 = scmp.eq.s32.totalorder %s33, 1
      %p168 = por %p166, %p167
      %p170 = scmp.ne.s32.totalorder %s155, %s169
      %p171 = scmp.eq.s32.totalorder %s33, 0
      %p172 = por %p170, %p171
      %s174 = sadd.s32 %s173, 1
      %p177 = scmp.eq.s32.totalorder %s27, 1
      %p178 = scmp.ne.s32.totalorder %s173, %s175
      %p179 = scmp.eq.s32.totalorder %s27, 0
      %p180 = por %p178, %p179
      %p181 = scmp.ne.s32.totalorder %s173, %s175
      %p182 = scmp.eq.s32.totalorder %s32, 1
      %p183 = por %p181, %p182
      %p184 = scmp.ne.s32.totalorder %s175, %s176
      %p185 = scmp.eq.s32.totalorder %s32, 0
      %p186 = por %p184, %p185
      %p187 = scmp.ne.s32.totalorder %s175, %s176
      %p188 = scmp.eq.s32.totalorder %s33, 1
      %p189 = por %p187, %p188
      %p191 = scmp.ne.s32.totalorder %s176, %s190
      %p192 = scmp.eq.s32.totalorder %s33, 0
      %p193 = por %p191, %p192
      %s195 = sadd.s32 %s194, 1
      %p198 = scmp.eq.s32.totalorder %s27, 1
      %p199 = scmp.ne.s32.totalorder %s194, %s196
      %p200 = scmp.eq.s32.totalorder %s27, 0
      %p201 = por %p199, %p200
      %p202 = scmp.ne.s32.totalorder %s194, %s196
      %p203 = scmp.eq.s32.totalorder %s32, 1
      %p204 = por %p202, %p203
      %p205 = scmp.ne.s32.totalorder %s196, %s197
      %p206 = scmp.eq.s32.totalorder %s32, 0
      %p207 = por %p205, %p206
      %p208 = scmp.ne.s32.totalorder %s196, %s197
      %p209 = scmp.eq.s32.totalorder %s33, 1
      %p210 = por %p208, %p209
      %p212 = scmp.ne.s32.totalorder %s197, %s211
      %p213 = scmp.eq.s32.totalorder %s33, 0
      %p214 = por %p212, %p213
      %s216 = sadd.s32 %s215, 1
      %p219 = scmp.eq.s32.totalorder %s27, 1
      %p220 = scmp.ne.s32.totalorder %s215, %s217
      %p221 = scmp.eq.s32.totalorder %s27, 0
      %p222 = por %p220, %p221
      %p223 = scmp.ne.s32.totalorder %s215, %s217
      %p224 = scmp.eq.s32.totalorder %s32, 1
      %p225 = por %p223, %p224
      %p226 = scmp.ne.s32.totalorder %s217, %s218
      %p227 = scmp.eq.s32.totalorder %s32, 0
      %p228 = por %p226, %p227
      %p229 = scmp.ne.s32.totalorder %s217, %s218
      %p230 = scmp.eq.s32.totalorder %s33, 1
      %p231 = por %p229, %p230
      %p233 = scmp.ne.s32.totalorder %s218, %s232
      %p234 = scmp.eq.s32.totalorder %s33, 0
      %p235 = por %p233, %p234
      %s237 = sadd.s32 %s236, 1
      %p240 = scmp.eq.s32.totalorder %s27, 1
      %p241 = scmp.ne.s32.totalorder %s236, %s238
      %p242 = scmp.eq.s32.totalorder %s27, 0
      %p243 = por %p241, %p242
      %p244 = scmp.ne.s32.totalorder %s236, %s238
      %p245 = scmp.eq.s32.totalorder %s32, 1
      %p246 = por %p244, %p245
      %p247 = scmp.ne.s32.totalorder %s238, %s239
      %p248 = scmp.eq.s32.totalorder %s32, 0
      %p249 = por %p247, %p248
      %p250 = scmp.ne.s32.totalorder %s238, %s239
      %p251 = scmp.eq.s32.totalorder %s33, 1
      %p252 = por %p250, %p251
      %p254 = scmp.ne.s32.totalorder %s239, %s253
      %p255 = scmp.eq.s32.totalorder %s33, 0
      %p256 = por %p254, %p255
      %s258 = sadd.s32 %s257, 1
      %p261 = scmp.eq.s32.totalorder %s27, 1
      %p262 = scmp.ne.s32.totalorder %s257, %s259
      %p263 = scmp.eq.s32.totalorder %s27, 0
      %p264 = por %p262, %p263
      %p265 = scmp.ne.s32.totalorder %s257, %s259
      %p266 = scmp.eq.s32.totalorder %s32, 1
      %p267 = por %p265, %p266
      %p268 = scmp.ne.s32.totalorder %s259, %s260
      %p269 = scmp.eq.s32.totalorder %s32, 0
      %p270 = por %p268, %p269
      %p271 = scmp.ne.s32.totalorder %s259, %s260
      %p272 = scmp.eq.s32.totalorder %s33, 1
      %p273 = por %p271, %p272
      %p275 = scmp.ne.s32.totalorder %s260, %s274
      %p276 = scmp.eq.s32.totalorder %s33, 0
      %p277 = por %p275, %p276
      %s279 = sadd.s32 %s278, 1
      %p282 = scmp.eq.s32.totalorder %s27, 1
      %p283 = scmp.ne.s32.totalorder %s278, %s280
      %p284 = scmp.eq.s32.totalorder %s27, 0
      %p285 = por %p283, %p284
      %p286 = scmp.ne.s32.totalorder %s278, %s280
      %p287 = scmp.eq.s32.totalorder %s32, 1
      %p288 = por %p286, %p287
      %p289 = scmp.ne.s32.totalorder %s280, %s281
      %p290 = scmp.eq.s32.totalorder %s32, 0
      %p291 = por %p289, %p290
      %p292 = scmp.ne.s32.totalorder %s280, %s281
      %p293 = scmp.eq.s32.totalorder %s33, 1
      %p294 = por %p292, %p293
      %p296 = scmp.ne.s32.totalorder %s281, %s295
      %p297 = scmp.eq.s32.totalorder %s33, 0
      %p298 = por %p296, %p297
      %s300 = sadd.s32 %s299, 1
      %p303 = scmp.eq.s32.totalorder %s27, 1
      %p304 = scmp.ne.s32.totalorder %s299, %s301
      %p305 = scmp.eq.s32.totalorder %s27, 0
      %p306 = por %p304, %p305
      %p307 = scmp.ne.s32.totalorder %s299, %s301
      %p308 = scmp.eq.s32.totalorder %s32, 1
      %p309 = por %p307, %p308
      %p310 = scmp.ne.s32.totalorder %s301, %s302
      %p311 = scmp.eq.s32.totalorder %s32, 0
      %p312 = por %p310, %p311
      %p313 = scmp.ne.s32.totalorder %s301, %s302
      %p314 = scmp.eq.s32.totalorder %s33, 1
      %p315 = por %p313, %p314
      %p317 = scmp.ne.s32.totalorder %s302, %s316
      %p318 = scmp.eq.s32.totalorder %s33, 0
      %p319 = por %p317, %p318
      %s321 = sadd.s32 %s320, 1
      %p324 = scmp.eq.s32.totalorder %s27, 1
      %p325 = scmp.ne.s32.totalorder %s320, %s322
      %p326 = scmp.eq.s32.totalorder %s27, 0
      %p327 = por %p325, %p326
      %p328 = scmp.ne.s32.totalorder %s320, %s322
      %p329 = scmp.eq.s32.totalorder %s32, 1
      %p330 = por %p328, %p329
      %p331 = scmp.ne.s32.totalorder %s322, %s323
      %p332 = scmp.eq.s32.totalorder %s32, 0
      %p333 = por %p331, %p332
      %p334 = scmp.ne.s32.totalorder %s322, %s323
      %p335 = scmp.eq.s32.totalorder %s33, 1
      %p336 = por %p334, %p335
      %p338 = scmp.ne.s32.totalorder %s323, %s337
      %p339 = scmp.eq.s32.totalorder %s33, 0
      %p340 = por %p338, %p339
      %s342 = sadd.s32 %s341, 1
      %p345 = scmp.eq.s32.totalorder %s27, 1
      %p346 = scmp.ne.s32.totalorder %s341, %s343
      %p347 = scmp.eq.s32.totalorder %s27, 0
      %p348 = por %p346, %p347
      %p349 = scmp.ne.s32.totalorder %s341, %s343
      %p350 = scmp.eq.s32.totalorder %s32, 1
      %p351 = por %p349, %p350
      %p352 = scmp.ne.s32.totalorder %s343, %s344
      %p353 = scmp.eq.s32.totalorder %s32, 0
      %p354 = por %p352, %p353
      %p355 = scmp.ne.s32.totalorder %s343, %s344
      %p356 = scmp.eq.s32.totalorder %s33, 1
      %p357 = por %p355, %p356
      %p359 = scmp.ne.s32.totalorder %s344, %s358
      %p360 = scmp.eq.s32.totalorder %s33, 0
      %p361 = por %p359, %p360
      %s363 = sadd.s32 %s362, 1
      %p366 = scmp.eq.s32.totalorder %s27, 1
      %p367 = scmp.ne.s32.totalorder %s362, %s364
      %p368 = scmp.eq.s32.totalorder %s27, 0
      %p369 = por %p367, %p368
      %p370 = scmp.ne.s32.totalorder %s362, %s364
      %p371 = scmp.eq.s32.totalorder %s32, 1
      %p372 = por %p370, %p371
      %p373 = scmp.ne.s32.totalorder %s364, %s365
      %p374 = scmp.eq.s32.totalorder %s32, 0
      %p375 = por %p373, %p374
      %p376 = scmp.ne.s32.totalorder %s364, %s365
      %p377 = scmp.eq.s32.totalorder %s33, 1
      %p378 = por %p376, %p377
      %p380 = scmp.ne.s32.totalorder %s365, %s379
      %p381 = scmp.eq.s32.totalorder %s33, 0
      %p382 = por %p380, %p381
      %s384 = sadd.s32 %s383, 1
      %p387 = scmp.eq.s32.totalorder %s27, 1
      %p388 = scmp.ne.s32.totalorder %s383, %s385
      %p389 = scmp.eq.s32.totalorder %s27, 0
      %p390 = por %p388, %p389
      %p391 = scmp.ne.s32.totalorder %s383, %s385
      %p392 = scmp.eq.s32.totalorder %s32, 1
      %p393 = por %p391, %p392
      %p394 = scmp.ne.s32.totalorder %s385, %s386
      %p395 = scmp.eq.s32.totalorder %s32, 0
      %p396 = por %p394, %p395
      %p397 = scmp.ne.s32.totalorder %s385, %s386
      %p398 = scmp.eq.s32.totalorder %s33, 1
      %p399 = por %p397, %p398
      %p401 = scmp.ne.s32.totalorder %s386, %s400
      %p402 = scmp.eq.s32.totalorder %s33, 0
      %p403 = por %p401, %p402
      %s405 = sadd.s32 %s404, 1
      %p408 = scmp.eq.s32.totalorder %s27, 1
      %p409 = scmp.ne.s32.totalorder %s404, %s406
      %p410 = scmp.eq.s32.totalorder %s27, 0
      %p411 = por %p409, %p410
      %p412 = scmp.ne.s32.totalorder %s404, %s406
      %p413 = scmp.eq.s32.totalorder %s32, 1
      %p414 = por %p412, %p413
      %p415 = scmp.ne.s32.totalorder %s406, %s407
      %p416 = scmp.eq.s32.totalorder %s32, 0
      %p417 = por %p415, %p416
      %p418 = scmp.ne.s32.totalorder %s406, %s407
      %p419 = scmp.eq.s32.totalorder %s33, 1
      %p420 = por %p418, %p419
      %p422 = scmp.ne.s32.totalorder %s407, %s421
      %p423 = scmp.eq.s32.totalorder %s33, 0
      %p424 = por %p422, %p423
      %s426 = sadd.s32 %s425, 1
      %p429 = scmp.eq.s32.totalorder %s27, 1
      %p430 = scmp.ne.s32.totalorder %s425, %s427
      %p431 = scmp.eq.s32.totalorder %s27, 0
      %p432 = por %p430, %p431
      %p433 = scmp.ne.s32.totalorder %s425, %s427
      %p434 = scmp.eq.s32.totalorder %s32, 1
      %p435 = por %p433, %p434
      %p436 = scmp.ne.s32.totalorder %s427, %s428
      %p437 = scmp.eq.s32.totalorder %s32, 0
      %p438 = por %p436, %p437
      %p439 = scmp.ne.s32.totalorder %s427, %s428
      %p440 = scmp.eq.s32.totalorder %s33, 1
      %p441 = por %p439, %p440
      %p443 = scmp.ne.s32.totalorder %s428, %s442
      %p444 = scmp.eq.s32.totalorder %s33, 0
      %p445 = por %p443, %p444
      %s446 = ssub.s32 %s34, %s46
      %s447 = ssub.s32 %s35, %s42
      %s448 = sor.u32 %s446, %s447
      %p449 = scmp.eq.s32.totalorder %s448, 0
      %s451 = sadd.s32 %s450, 1
      %s452 = scalar_select %p449, %s450, %s451
      %p455 = pneg %p449
      %p456 = scmp.eq.s32.totalorder %s27, 1
      %p457 = por %p455, %p456
      %p458 = scmp.ne.s32.totalorder %s450, %s453
      %p459 = scmp.eq.s32.totalorder %s27, 0
      %p460 = por %p458, %p459
      %p461 = scmp.ne.s32.totalorder %s450, %s453
      %p462 = scmp.eq.s32.totalorder %s32, 1
      %p463 = por %p461, %p462
      %p464 = scmp.ne.s32.totalorder %s453, %s454
      %p465 = scmp.eq.s32.totalorder %s32, 0
      %p466 = por %p464, %p465
      %p467 = scmp.ne.s32.totalorder %s453, %s454
      %p468 = scmp.eq.s32.totalorder %s33, 1
      %p469 = por %p467, %p468
      %p471 = scmp.ne.s32.totalorder %s454, %s470
      %p472 = scmp.eq.s32.totalorder %s33, 0
      %p473 = por %p471, %p472
      %p474 = scmp.le.s32.totalorder 1, %s27
      %p475 = scmp.lt.s32.totalorder %s27, 3
      %p476 = pnand %p474, %p475
      %p477 = pneg %p476
      // Predicated region
      $region9: #{tpu_custom_call.1} parent=5 // pred_check
        _
      $region10: #{tpu_custom_call.1} parent=5 // pred_check_branch
        %479 = sbr.rel (%p476) target = $region12
      $region11: #{tpu_custom_call.1} parent=5 // pred_region
        %s480 = ssub.s32 %s27, 1
        // Predicated region
        $region13: #{tpu_custom_call.1} parent=11 // pred_check
          %p481 = pneg %p144
        $region14: #{tpu_custom_call.1} parent=11 // pred_check_branch
          %483 = sbr.rel (%p481) target = $region16
        $region15: #{tpu_custom_call.1} parent=11 // pred_region
          _
        $region16: #{tpu_custom_call.1} parent=11 // pred_fallthru
          _
        // Predicated region
        $region17: #{tpu_custom_call.1} parent=11 // pred_check
          %p484 = pneg %p165
        $region18: #{tpu_custom_call.1} parent=11 // pred_check_branch
          %486 = sbr.rel (%p484) target = $region20
        $region19: #{tpu_custom_call.1} parent=11 // pred_region
          _
        $region20: #{tpu_custom_call.1} parent=11 // pred_fallthru
          _
        // Predicated region
        $region21: #{tpu_custom_call.1} parent=11 // pred_check
          %p487 = pneg %p186
        $region22: #{tpu_custom_call.1} parent=11 // pred_check_branch
          %489 = sbr.rel (%p487) target = $region24
        $region23: #{tpu_custom_call.1} parent=11 // pred_region
          _
        $region24: #{tpu_custom_call.1} parent=11 // pred_fallthru
          _
        // Predicated region
        $region25: #{tpu_custom_call.1} parent=11 // pred_check
          %p490 = pneg %p207
        $region26: #{tpu_custom_call.1} parent=11 // pred_check_branch
          %492 = sbr.rel (%p490) target = $region28
        $region27: #{tpu_custom_call.1} parent=11 // pred_region
          _
        $region28: #{tpu_custom_call.1} parent=11 // pred_fallthru
          _
        // Predicated region
        $region29: #{tpu_custom_call.1} parent=11 // pred_check
          %p493 = pneg %p228
        $region30: #{tpu_custom_call.1} parent=11 // pred_check_branch
          %495 = sbr.rel (%p493) target = $region32
        $region31: #{tpu_custom_call.1} parent=11 // pred_region
          _
        $region32: #{tpu_custom_call.1} parent=11 // pred_fallthru
          _
        // Predicated region
        $region33: #{tpu_custom_call.1} parent=11 // pred_check
          %p496 = pneg %p249
        $region34: #{tpu_custom_call.1} parent=11 // pred_check_branch
          %498 = sbr.rel (%p496) target = $region36
        $region35: #{tpu_custom_call.1} parent=11 // pred_region
          _
        $region36: #{tpu_custom_call.1} parent=11 // pred_fallthru
          _
        // Predicated region
        $region37: #{tpu_custom_call.1} parent=11 // pred_check
          %p499 = pneg %p270
        $region38: #{tpu_custom_call.1} parent=11 // pred_check_branch
          %501 = sbr.rel (%p499) target = $region40
        $region39: #{tpu_custom_call.1} parent=11 // pred_region
          _
        $region40: #{tpu_custom_call.1} parent=11 // pred_fallthru
          _
        // Predicated region
        $region41: #{tpu_custom_call.1} parent=11 // pred_check
          %p502 = pneg %p291
        $region42: #{tpu_custom_call.1} parent=11 // pred_check_branch
          %504 = sbr.rel (%p502) target = $region44
        $region43: #{tpu_custom_call.1} parent=11 // pred_region
          _
        $region44: #{tpu_custom_call.1} parent=11 // pred_fallthru
          _
        // Predicated region
        $region45: #{tpu_custom_call.1} parent=11 // pred_check
          %p505 = pneg %p312
        $region46: #{tpu_custom_call.1} parent=11 // pred_check_branch
          %507 = sbr.rel (%p505) target = $region48
        $region47: #{tpu_custom_call.1} parent=11 // pred_region
          _
        $region48: #{tpu_custom_call.1} parent=11 // pred_fallthru
          _
        // Predicated region
        $region49: #{tpu_custom_call.1} parent=11 // pred_check
          %p508 = pneg %p333
        $region50: #{tpu_custom_call.1} parent=11 // pred_check_branch
          %510 = sbr.rel (%p508) target = $region52
        $region51: #{tpu_custom_call.1} parent=11 // pred_region
          _
        $region52: #{tpu_custom_call.1} parent=11 // pred_fallthru
          _
        // Predicated region
        $region53: #{tpu_custom_call.1} parent=11 // pred_check
          %p511 = pneg %p354
        $region54: #{tpu_custom_call.1} parent=11 // pred_check_branch
          %513 = sbr.rel (%p511) target = $region56
        $region55: #{tpu_custom_call.1} parent=11 // pred_region
          _
        $region56: #{tpu_custom_call.1} parent=11 // pred_fallthru
          _
        // Predicated region
        $region57: #{tpu_custom_call.1} parent=11 // pred_check
          %p514 = pneg %p375
        $region58: #{tpu_custom_call.1} parent=11 // pred_check_branch
          %516 = sbr.rel (%p514) target = $region60
        $region59: #{tpu_custom_call.1} parent=11 // pred_region
          _
        $region60: #{tpu_custom_call.1} parent=11 // pred_fallthru
          _
        // Predicated region
        $region61: #{tpu_custom_call.1} parent=11 // pred_check
          %p517 = pneg %p396
        $region62: #{tpu_custom_call.1} parent=11 // pred_check_branch
          %519 = sbr.rel (%p517) target = $region64
        $region63: #{tpu_custom_call.1} parent=11 // pred_region
          _
        $region64: #{tpu_custom_call.1} parent=11 // pred_fallthru
          _
        // Predicated region
        $region65: #{tpu_custom_call.1} parent=11 // pred_check
          %p520 = pneg %p417
        $region66: #{tpu_custom_call.1} parent=11 // pred_check_branch
          %522 = sbr.rel (%p520) target = $region68
        $region67: #{tpu_custom_call.1} parent=11 // pred_region
          _
        $region68: #{tpu_custom_call.1} parent=11 // pred_fallthru
          _
        // Predicated region
        $region69: #{tpu_custom_call.1} parent=11 // pred_check
          %p523 = pneg %p438
        $region70: #{tpu_custom_call.1} parent=11 // pred_check_branch
          %525 = sbr.rel (%p523) target = $region72
        $region71: #{tpu_custom_call.1} parent=11 // pred_region
          _
        $region72: #{tpu_custom_call.1} parent=11 // pred_fallthru
          _
      $region12: #{tpu_custom_call.1} parent=5 // pred_fallthru
        _
      %p526 = scmp.lt.s32.totalorder %s27, 2
      // Predicated region
      $region73: #{tpu_custom_call.1} parent=5 // pred_check
        %p527 = pneg %p526
      $region74: #{tpu_custom_call.1} parent=5 // pred_check_branch
        %529 = sbr.rel (%p527) target = $region76
      $region75: #{tpu_custom_call.1} parent=5 // pred_region
        // Predicated region
        $region77: #{tpu_custom_call.1} parent=75 // pred_check
          %p530 = pneg %p61
        $region78: #{tpu_custom_call.1} parent=75 // pred_check_branch
          %532 = sbr.rel (%p530) target = $region80
        $region79: #{tpu_custom_call.1} parent=75 // pred_region
          %p533 = scmp.lt.s32.totalorder %s34, 1
          %s534 = scalar_select %p533, %s34, 1
          %p535 = scmp.lt.s32.totalorder %s35, 0
          %s536 = scalar_select %p535, %s35, 0
          %s537 = sadd.s32 %s536, %s534
          %s538 = smul.addr %s537, 8
          %s539 = scalar_lea.vmem %s0, %s538
        $region80: #{tpu_custom_call.1} parent=75 // pred_fallthru
          _
        // Predicated region
        $region81: #{tpu_custom_call.1} parent=75 // pred_check
          %p540 = pneg %p89
        $region82: #{tpu_custom_call.1} parent=75 // pred_check_branch
          %542 = sbr.rel (%p540) target = $region84
        $region83: #{tpu_custom_call.1} parent=75 // pred_region
          %s543 = smul.u32 8, %s35
          %p544 = scmp.lt.s32.totalorder %s34, 1
          %s545 = scalar_select %p544, %s34, 1
          %p546 = scmp.lt.s32.totalorder %s543, 7
          %s547 = scalar_select %p546, %s543, 7
          %s548 = smul.addr %s545, 8
          %s549 = sadd.s32 %s547, %s548
          %s550 = smul.addr %s549, 4
          %s551 = scalar_lea.vmem %s1, %s550
          %s552 = smul.u32 8, %s35
        $region84: #{tpu_custom_call.1} parent=75 // pred_fallthru
          _
        // Predicated region
        $region85: #{tpu_custom_call.1} parent=75 // pred_check
          %p553 = pneg %p117
        $region86: #{tpu_custom_call.1} parent=75 // pred_check_branch
          %555 = sbr.rel (%p553) target = $region88
        $region87: #{tpu_custom_call.1} parent=75 // pred_region
          %p556 = scmp.lt.s32.totalorder %s34, 1
          %s557 = scalar_select %p556, %s34, 1
          %p558 = scmp.lt.s32.totalorder %s35, 0
          %s559 = scalar_select %p558, %s35, 0
          %s560 = sadd.s32 %s559, %s557
          %s561 = smul.addr %s560, 8
          %s562 = scalar_lea.vmem %s2, %s561
        $region88: #{tpu_custom_call.1} parent=75 // pred_fallthru
          _
      $region76: #{tpu_custom_call.1} parent=5 // pred_fallthru
        _
      %p563 = scmp.le.s32.totalorder 1, %s27
      %p564 = scmp.lt.s32.totalorder %s27, 3
      %p565 = pnand %p563, %p564
      %p566 = pneg %p565
      // Predicated region
      $region89: #{tpu_custom_call.1} parent=5 // pred_check
        _
      $region90: #{tpu_custom_call.1} parent=5 // pred_check_branch
        %568 = sbr.rel (%p565) target = $region92
      $region91: #{tpu_custom_call.1} parent=5 // pred_region
        %s569 = ssub.s32 %s27, 1
        %p570 = scmp.lt.s32.totalorder %s36, 1
        %s571 = scalar_select %p570, %s36, 1
        %p572 = scmp.lt.s32.totalorder %s37, 0
        %s573 = scalar_select %p572, %s37, 0
        %s574 = sadd.s32 %s573, %s571
        %s575 = smul.addr %s574, 8
        %s576 = scalar_lea.vmem %s0, %s575
        %p577 = pneg %p67
        %p578 = pneg %p64
        %s579 = smul.u32 8, %s37
        %p580 = scmp.lt.s32.totalorder %s36, 1
        %s581 = scalar_select %p580, %s36, 1
        %p582 = scmp.lt.s32.totalorder %s579, 7
        %s583 = scalar_select %p582, %s579, 7
        %s584 = smul.addr %s581, 8
        %s585 = sadd.s32 %s583, %s584
        %s586 = smul.addr %s585, 4
        %s587 = scalar_lea.vmem %s1, %s586
        %p588 = pneg %p95
        %p589 = pneg %p92
        %p590 = scmp.lt.s32.totalorder %s36, 1
        %s591 = scalar_select %p590, %s36, 1
        %p592 = scmp.lt.s32.totalorder %s37, 0
        %s593 = scalar_select %p592, %s37, 0
        %s594 = sadd.s32 %s593, %s591
        %s595 = smul.addr %s594, 8
        %s596 = scalar_lea.vmem %s2, %s595
        %p597 = pneg %p123
        %p598 = pneg %p120
        %p599 = pneg %p144
        %p600 = pneg %p141
        %p601 = pneg %p165
        %p602 = pneg %p162
        %p603 = pneg %p186
        %p604 = pneg %p183
        %p605 = pneg %p207
        %p606 = pneg %p204
        %p607 = pneg %p228
        %p608 = pneg %p225
        %p609 = pneg %p249
        %p610 = pneg %p246
        %p611 = pneg %p270
        %p612 = pneg %p267
        %p613 = pneg %p291
        %p614 = pneg %p288
        %p615 = pneg %p312
        %p616 = pneg %p309
        %p617 = pneg %p333
        %p618 = pneg %p330
        %p619 = pneg %p354
        %p620 = pneg %p351
        %p621 = pneg %p375
        %p622 = pneg %p372
        %p623 = pneg %p396
        %p624 = pneg %p393
        %p625 = pneg %p417
        %p626 = pneg %p414
        %p627 = pneg %p438
        %p628 = pneg %p435
        %p629 = pneg %p466
        %p630 = pneg %p463
        %s631 = sand.u32 %s453, 1
        %s632 = scalar_lea.sflag [#allocation3], %s631
        %s633 = sand.u32 %s453, 1
        %s634 = smul.addr %s633, 8
        %s635 = scalar_lea.vmem [#allocation2], %s634
        %p636 = scmp.lt.s32.totalorder %s36, 1
        %s637 = scalar_select %p636, %s36, 1
        %p638 = scmp.lt.s32.totalorder %s37, 0
        %s639 = scalar_select %p638, %s37, 0
        %s640 = sadd.s32 %s639, %s637
        %s641 = smul.addr %s640, 8
        %s642 = scalar_lea.vmem %s0, %s641
        %s643 = smul.u32 8, %s37
        %p644 = scmp.lt.s32.totalorder %s36, 1
        %s645 = scalar_select %p644, %s36, 1
        %p646 = scmp.lt.s32.totalorder %s643, 7
        %s647 = scalar_select %p646, %s643, 7
        %s648 = smul.addr %s645, 8
        %s649 = sadd.s32 %s647, %s648
        %s650 = smul.addr %s649, 4
        %s651 = scalar_lea.vmem %s1, %s650
        %s652 = smul.u32 8, %s37
        %p653 = scmp.lt.s32.totalorder %s36, 1
        %s654 = scalar_select %p653, %s36, 1
        %p655 = scmp.lt.s32.totalorder %s37, 0
        %s656 = scalar_select %p655, %s37, 0
        %s657 = sadd.s32 %s656, %s654
        %s658 = smul.addr %s657, 8
        %s659 = scalar_lea.vmem %s2, %s658
        %v661 = vld [vmem:[%s642] sm:$0xff]
        %v662 = vld [vmem:[%s651] sm:$0xf]
        %v663 = vld [vmem:[%s651 + $0x4] sm:$0xf]
        %v664 = vld [vmem:[%s651 + $0x8] sm:$0xf]
        %v665 = vld [vmem:[%s651 + $0xc] sm:$0xf]
        %v666 = vld [vmem:[%s651 + $0x10] sm:$0xf]
        %v667 = vld [vmem:[%s651 + $0x14] sm:$0xf]
        %v668 = vld [vmem:[%s651 + $0x18] sm:$0xf]
        %v669 = vld [vmem:[%s651 + $0x1c] sm:$0xf]
        %v670 = vld [vmem:[%s659] sm:$0xff]
        %v671 = vld [vmem:[%s3] sm:$0xff]
        %v672 = vld [vmem:[%s3 + $0x8] sm:$0xff]
        %v673 = vld [vmem:[%s3 + $0x10] sm:$0xff]
        %v674 = vld [vmem:[%s3 + $0x18] sm:$0xff]
        %v675 = vld [vmem:[%s5] sm:$0x1]
        %v677 = vlaneseq
        %v678 = vshrl.u32 %v677, 7
        %v679 = vsub.s32 0, %v678
        %v680 = vrot.slane %v675, %v679
        %vm682 = vcmask 261120
        %v684 = vsel %vm682, %v661, 0
        %686 = vmatprep.subr.mxu0 0.0
        %687 = vmatpush1.msra.mxu0 0.0
        %688 = vmatprep.subr.mxu0 0.0
        %689 = vmatpush1.msra.mxu0 0.0
        %690 = vmatprep.subr.mxu0 0.0
        %691 = vmatpush1.msra.mxu0 0.0
        %692 = vmatprep.subr.mxu0 0.0
        %693 = vmatpush1.msra.mxu0 0.0
        %694 = vmatprep.subr.mxu0 0.0
        %695 = vmatpush1.msra.mxu0 0.0
        %696 = vmatprep.subr.mxu0 0.0
        %697 = vmatpush1.msra.mxu0 0.0
        %698 = vmatprep.subr.mxu0 0.0
        %699 = vmatpush1.msra.mxu0 0.0
        %700 = vmatprep.subr.mxu0 0.0
        %701 = vmatpush1.msra.mxu0 0.0
        %702 = vmatprep.subr.mxu0 0.0
        %703 = vmatpush1.msra.mxu0 0.0
        %704 = vmatprep.subr.mxu0 0.0
        %705 = vmatpush1.msra.mxu0 0.0
        %706 = vmatprep.subr.mxu0 0.0
        %707 = vmatpush1.msra.mxu0 0.0
        %708 = vmatprep.subr.mxu0 0.0
        %709 = vmatpush1.msra.mxu0 0.0
        %710 = vmatprep.subr.mxu0 0.0
        %711 = vmatpush1.msra.mxu0 %v674
        %712 = vmatprep.subr.mxu0 0.0
        %713 = vmatpush1.msra.mxu0 %v673
        %714 = vmatprep.subr.mxu0 0.0
        %715 = vmatpush1.msra.mxu0 %v672
        %716 = vmatprep.subr.mxu0 0.0
        %717 = vmatpush1.msra.mxu0 %v671
        %718 = vmatprep.subr.mxu0 0.0
        %719 = vmatpush2.msra.mxu0 0.0
        %720 = vmatprep.subr.mxu0 0.0
        %721 = vmatpush2.msra.mxu0 0.0
        %722 = vmatprep.subr.mxu0 0.0
        %723 = vmatpush2.msra.mxu0 0.0
        %724 = vmatprep.subr.mxu0 0.0
        %725 = vmatpush2.msra.mxu0 0.0
        %726 = vmatprep.subr.mxu0 0.0
        %727 = vmatpush2.msra.mxu0 0.0
        %728 = vmatprep.subr.mxu0 0.0
        %729 = vmatpush2.msra.mxu0 0.0
        %730 = vmatprep.subr.mxu0 0.0
        %731 = vmatpush2.msra.mxu0 0.0
        %732 = vmatprep.subr.mxu0 0.0
        %733 = vmatpush2.msra.mxu0 0.0
        %734 = vmatprep.subr.mxu0 0.0
        %735 = vmatpush2.msra.mxu0 0.0
        %736 = vmatprep.subr.mxu0 0.0
        %737 = vmatpush2.msra.mxu0 0.0
        %738 = vmatprep.subr.mxu0 0.0
        %739 = vmatpush2.msra.mxu0 0.0
        %740 = vmatprep.subr.mxu0 0.0
        %741 = vmatpush2.msra.mxu0 0.0
        %742 = vmatprep.subr.mxu0 0.0
        %743 = vmatpush2.msra.mxu0 0.0
        %744 = vmatprep.subr.mxu0 0.0
        %745 = vmatpush2.msra.mxu0 0.0
        %746 = vmatprep.subr.mxu0 0.0
        %747 = vmatpush2.msra.mxu0 0.0
        %748 = vmatprep.subr.mxu0 0.0
        %749 = vmatpush2.msra.mxu0 0.0
        %750 = vmatprep.mubr.f32.mxu0 0.0
        %751 = vmatmul.mubr.f32.gmra.mxu0 %v684
        %v752 = vpop.f32.mrf.mxu0
        %v753 = vadd.f32 %v680, %v752
        %v754 = vpop.f32.mrf.mxu0
        %755 = vdwg.mxu0
        %v756 = vld [vmem:[%s4] sm:$0xf]
        %v757 = vld [vmem:[%s4 + $0x4] sm:$0xf]
        %v758 = vld [vmem:[%s4 + $0x8] sm:$0xf]
        %v759 = vld [vmem:[%s4 + $0xc] sm:$0xf]
        %v760 = vld [vmem:[%s4 + $0x10] sm:$0xf]
        %v761 = vld [vmem:[%s4 + $0x14] sm:$0xf]
        %v762 = vld [vmem:[%s4 + $0x18] sm:$0xf]
        %v763 = vld [vmem:[%s4 + $0x1c] sm:$0xf]
        %v764 = vld [vmem:[%s4 + $0x20] sm:$0xf]
        %v765 = vld [vmem:[%s4 + $0x24] sm:$0xf]
        %v766 = vld [vmem:[%s4 + $0x28] sm:$0xf]
        %v767 = vld [vmem:[%s4 + $0x2c] sm:$0xf]
        %v768 = vld [vmem:[%s4 + $0x30] sm:$0xf]
        %v769 = vld [vmem:[%s4 + $0x34] sm:$0xf]
        %v770 = vld [vmem:[%s4 + $0x38] sm:$0xf]
        %v771 = vld [vmem:[%s4 + $0x3c] sm:$0xf]
        %v780 = vunpack.c.l.b16 %v662
        %v781 = vunpack.c.l.b16 %v663
        %v782 = vunpack.c.l.b16 %v664
        %v783 = vunpack.c.l.b16 %v665
        %v784 = vunpack.c.l.b16 %v666
        %v785 = vunpack.c.l.b16 %v667
        %v786 = vunpack.c.l.b16 %v668
        %v787 = vunpack.c.l.b16 %v669
        %v788 = vpack.c.b16 %v781, %v780
        %v789 = vpack.c.b16 %v783, %v782
        %v790 = vpack.c.b16 %v785, %v784
        %v791 = vpack.c.b16 %v787, %v786
        %v812 = vunpack.c.l.b16 %v756
        %v813 = vunpack.c.l.b16 %v757
        %v814 = vunpack.c.l.b16 %v758
        %v815 = vunpack.c.l.b16 %v759
        %v816 = vunpack.c.l.b16 %v760
        %v817 = vunpack.c.l.b16 %v761
        %v818 = vunpack.c.l.b16 %v762
        %v819 = vunpack.c.l.b16 %v763
        %v820 = vunpack.c.l.b16 %v764
        %v821 = vunpack.c.l.b16 %v765
        %v822 = vunpack.c.l.b16 %v766
        %v823 = vunpack.c.l.b16 %v767
        %v824 = vunpack.c.l.b16 %v768
        %v825 = vunpack.c.l.b16 %v769
        %v826 = vunpack.c.l.b16 %v770
        %v827 = vunpack.c.l.b16 %v771
        %v828 = vpack.c.b16 %v813, %v812
        %v829 = vpack.c.b16 %v815, %v814
        %v830 = vpack.c.b16 %v817, %v816
        %v831 = vpack.c.b16 %v819, %v818
        %v832 = vpack.c.b16 %v821, %v820
        %v833 = vpack.c.b16 %v823, %v822
        %v834 = vpack.c.b16 %v825, %v824
        %v835 = vpack.c.b16 %v827, %v826
        %844 = vmatprep.subr.bf16.mxu0 0
        %845 = vmatpush1.bf16.msra.mxu0 %v835
        %846 = vmatprep.subr.bf16.mxu0 0
        %847 = vmatpush1.bf16.msra.mxu0 %v834
        %848 = vmatprep.subr.bf16.mxu0 0
        %849 = vmatpush1.bf16.msra.mxu0 %v833
        %850 = vmatprep.subr.bf16.mxu0 0
        %851 = vmatpush1.bf16.msra.mxu0 %v832
        %852 = vmatprep.subr.bf16.mxu0 0
        %853 = vmatpush1.bf16.msra.mxu0 %v831
        %854 = vmatprep.subr.bf16.mxu0 0
        %855 = vmatpush1.bf16.msra.mxu0 %v830
        %856 = vmatprep.subr.bf16.mxu0 0
        %857 = vmatpush1.bf16.msra.mxu0 %v829
        %858 = vmatprep.subr.bf16.mxu0 0
        %859 = vmatpush1.bf16.msra.mxu0 %v828
        %860 = vmatprep.subr.bf16.mxu0 0
        %861 = vmatpush2.bf16.msra.mxu0 0
        %862 = vmatprep.subr.bf16.mxu0 0
        %863 = vmatpush2.bf16.msra.mxu0 0
        %864 = vmatprep.subr.bf16.mxu0 0
        %865 = vmatpush2.bf16.msra.mxu0 0
        %866 = vmatprep.subr.bf16.mxu0 0
        %867 = vmatpush2.bf16.msra.mxu0 0
        %868 = vmatprep.subr.bf16.mxu0 0
        %869 = vmatpush2.bf16.msra.mxu0 0
        %870 = vmatprep.subr.bf16.mxu0 0
        %871 = vmatpush2.bf16.msra.mxu0 0
        %872 = vmatprep.subr.bf16.mxu0 0
        %873 = vmatpush2.bf16.msra.mxu0 0
        %874 = vmatprep.subr.bf16.mxu0 0
        %875 = vmatpush2.bf16.msra.mxu0 0
        %876 = vmatprep.mubr.bf16.mxu0 0
        %877 = vmatmul.mubr.bf16.gmra.mxu0 %v788
        %v878 = vpop.f32.mrf.mxu0
        %v879 = vadd.f32 0.0, %v878
        %v880 = vpop.f32.mrf.mxu0
        %v881 = vpop.f32.mrf.mxu0
        %v882 = vadd.f32 0.0, %v881
        %v883 = vpop.f32.mrf.mxu0
        %884 = vmatprep.mubr.bf16.mxu0 0
        %885 = vmatmul.mubr.bf16.gmra.mxu0 %v789
        %v886 = vpop.f32.mrf.mxu0
        %v887 = vadd.f32 0.0, %v886
        %v888 = vpop.f32.mrf.mxu0
        %v889 = vpop.f32.mrf.mxu0
        %v890 = vadd.f32 0.0, %v889
        %v891 = vpop.f32.mrf.mxu0
        %892 = vmatprep.mubr.bf16.mxu0 0
        %893 = vmatmul.mubr.bf16.gmra.mxu0 %v790
        %v894 = vpop.f32.mrf.mxu0
        %v895 = vadd.f32 0.0, %v894
        %v896 = vpop.f32.mrf.mxu0
        %v897 = vpop.f32.mrf.mxu0
        %v898 = vadd.f32 0.0, %v897
        %v899 = vpop.f32.mrf.mxu0
        %900 = vmatprep.mubr.bf16.mxu0 0
        %901 = vmatmul.mubr.bf16.gmra.mxu0 %v791
        %v902 = vpop.f32.mrf.mxu0
        %v903 = vadd.f32 0.0, %v902
        %v904 = vpop.f32.mrf.mxu0
        %v905 = vpop.f32.mrf.mxu0
        %v906 = vadd.f32 0.0, %v905
        %v907 = vpop.f32.mrf.mxu0
        %908 = vdwg.mxu0
        %v910 = vcombine.high %v670, %v670
        %v912 = vunpack.c.l.s4 1966171168
        %v913 = vunpack.c.0.s8 %v912
        %v914 = vlaneseq
        %v915 = vshrl.u32 %v914, 7
        %v916 = vsub.s32 %v913, %v915
        %v917 = vrot.slane %v670, %v916
        %v919 = vunpack.c.l.s4 1966171168
        %v920 = vunpack.c.0.s8 %v919
        %v921 = vlaneseq
        %v922 = vshrl.u32 %v921, 7
        %v923 = vsub.s32 %v920, %v922
        %v924 = vrot.slane %v910, %v923
        %v925 = vcombine.high %v917, %v917
        %v926 = vcombine.high %v924, %v924
        %v928 = vunpack.c.l.s4 1966171168
        %v929 = vunpack.c.0.s8 %v928
        %v930 = vlaneseq
        %v931 = vshrl.u32 %v930, 7
        %v932 = vsub.s32 %v929, %v931
        %v933 = vrot.slane %v917, %v932
        %v935 = vunpack.c.l.s4 1966171168
        %v936 = vunpack.c.0.s8 %v935
        %v937 = vlaneseq
        %v938 = vshrl.u32 %v937, 7
        %v939 = vsub.s32 %v936, %v938
        %v940 = vrot.slane %v924, %v939
        %v942 = vunpack.c.l.s4 1966171168
        %v943 = vunpack.c.0.s8 %v942
        %v944 = vlaneseq
        %v945 = vshrl.u32 %v944, 7
        %v946 = vsub.s32 %v943, %v945
        %v947 = vrot.slane %v925, %v946
        %v949 = vunpack.c.l.s4 1966171168
        %v950 = vunpack.c.0.s8 %v949
        %v951 = vlaneseq
        %v952 = vshrl.u32 %v951, 7
        %v953 = vsub.s32 %v950, %v952
        %v954 = vrot.slane %v926, %v953
        %v955 = vcombine.high %v933, %v933
        %v956 = vcombine.high %v940, %v940
        %v957 = vcombine.high %v947, %v947
        %v958 = vcombine.high %v954, %v954
        %v959 = vlaneseq
        %v960 = vshrl.u32 %v959, 7
        %v961 = vsub.s32 0, %v960
        %v962 = vrot.slane %v933, %v961
        %v963 = vlaneseq
        %v964 = vshrl.u32 %v963, 7
        %v965 = vsub.s32 0, %v964
        %v966 = vrot.slane %v947, %v965
        %v967 = vlaneseq
        %v968 = vshrl.u32 %v967, 7
        %v969 = vsub.s32 0, %v968
        %v970 = vrot.slane %v955, %v969
        %v971 = vlaneseq
        %v972 = vshrl.u32 %v971, 7
        %v973 = vsub.s32 0, %v972
        %v974 = vrot.slane %v957, %v973
        %v975 = vlaneseq
        %v976 = vshrl.u32 %v975, 7
        %v977 = vsub.s32 0, %v976
        %v978 = vrot.slane %v940, %v977
        %v979 = vlaneseq
        %v980 = vshrl.u32 %v979, 7
        %v981 = vsub.s32 0, %v980
        %v982 = vrot.slane %v954, %v981
        %v983 = vlaneseq
        %v984 = vshrl.u32 %v983, 7
        %v985 = vsub.s32 0, %v984
        %v986 = vrot.slane %v956, %v985
        %v987 = vlaneseq
        %v988 = vshrl.u32 %v987, 7
        %v989 = vsub.s32 0, %v988
        %v990 = vrot.slane %v958, %v989
        %991 = vset.pattern.permute.xlu0 0
        %992 = vperm.xlu0 %991, %v962
        %v993 = vpop.permute.xlu0 %992
        %995 = vset.pattern.permute.xlu0 0
        %996 = vperm.xlu0 %995, %v966
        %v997 = vpop.permute.xlu0 %996
        %999 = vset.pattern.permute.xlu0 0
        %1000 = vperm.xlu0 %999, %v970
        %v1001 = vpop.permute.xlu0 %1000
        %1003 = vset.pattern.permute.xlu0 0
        %1004 = vperm.xlu0 %1003, %v974
        %v1005 = vpop.permute.xlu0 %1004
        %1007 = vset.pattern.permute.xlu0 0
        %1008 = vperm.xlu0 %1007, %v978
        %v1009 = vpop.permute.xlu0 %1008
        %1011 = vset.pattern.permute.xlu0 0
        %1012 = vperm.xlu0 %1011, %v982
        %v1013 = vpop.permute.xlu0 %1012
        %1015 = vset.pattern.permute.xlu0 0
        %1016 = vperm.xlu0 %1015, %v986
        %v1017 = vpop.permute.xlu0 %1016
        %1019 = vset.pattern.permute.xlu0 0
        %1020 = vperm.xlu0 %1019, %v990
        %v1021 = vpop.permute.xlu0 %1020
        %v1023 = vmul.f32 %v879, %v993
        %v1024 = vmul.f32 %v882, %v997
        %v1025 = vmul.f32 %v887, %v1001
        %v1026 = vmul.f32 %v890, %v1005
        %v1027 = vmul.f32 %v895, %v1009
        %v1028 = vmul.f32 %v898, %v1013
        %v1029 = vmul.f32 %v903, %v1017
        %v1030 = vmul.f32 %v906, %v1021
        %v1032 = vcombine.high %v753, %v753
        %v1034 = vunpack.c.l.s4 1966171168
        %v1035 = vunpack.c.0.s8 %v1034
        %v1036 = vlaneseq
        %v1037 = vshrl.u32 %v1036, 7
        %v1038 = vsub.s32 %v1035, %v1037
        %v1039 = vrot.slane %v753, %v1038
        %v1041 = vunpack.c.l.s4 1966171168
        %v1042 = vunpack.c.0.s8 %v1041
        %v1043 = vlaneseq
        %v1044 = vshrl.u32 %v1043, 7
        %v1045 = vsub.s32 %v1042, %v1044
        %v1046 = vrot.slane %v1032, %v1045
        %v1047 = vcombine.high %v1039, %v1039
        %v1048 = vcombine.high %v1046, %v1046
        %v1050 = vunpack.c.l.s4 1966171168
        %v1051 = vunpack.c.0.s8 %v1050
        %v1052 = vlaneseq
        %v1053 = vshrl.u32 %v1052, 7
        %v1054 = vsub.s32 %v1051, %v1053
        %v1055 = vrot.slane %v1039, %v1054
        %v1057 = vunpack.c.l.s4 1966171168
        %v1058 = vunpack.c.0.s8 %v1057
        %v1059 = vlaneseq
        %v1060 = vshrl.u32 %v1059, 7
        %v1061 = vsub.s32 %v1058, %v1060
        %v1062 = vrot.slane %v1046, %v1061
        %v1064 = vunpack.c.l.s4 1966171168
        %v1065 = vunpack.c.0.s8 %v1064
        %v1066 = vlaneseq
        %v1067 = vshrl.u32 %v1066, 7
        %v1068 = vsub.s32 %v1065, %v1067
        %v1069 = vrot.slane %v1047, %v1068
        %v1071 = vunpack.c.l.s4 1966171168
        %v1072 = vunpack.c.0.s8 %v1071
        %v1073 = vlaneseq
        %v1074 = vshrl.u32 %v1073, 7
        %v1075 = vsub.s32 %v1072, %v1074
        %v1076 = vrot.slane %v1048, %v1075
        %v1077 = vcombine.high %v1055, %v1055
        %v1078 = vcombine.high %v1062, %v1062
        %v1079 = vcombine.high %v1069, %v1069
        %v1080 = vcombine.high %v1076, %v1076
        %v1081 = vlaneseq
        %v1082 = vshrl.u32 %v1081, 7
        %v1083 = vsub.s32 0, %v1082
        %v1084 = vrot.slane %v1055, %v1083
        %v1085 = vlaneseq
        %v1086 = vshrl.u32 %v1085, 7
        %v1087 = vsub.s32 0, %v1086
        %v1088 = vrot.slane %v1069, %v1087
        %v1089 = vlaneseq
        %v1090 = vshrl.u32 %v1089, 7
        %v1091 = vsub.s32 0, %v1090
        %v1092 = vrot.slane %v1077, %v1091
        %v1093 = vlaneseq
        %v1094 = vshrl.u32 %v1093, 7
        %v1095 = vsub.s32 0, %v1094
        %v1096 = vrot.slane %v1079, %v1095
        %v1097 = vlaneseq
        %v1098 = vshrl.u32 %v1097, 7
        %v1099 = vsub.s32 0, %v1098
        %v1100 = vrot.slane %v1062, %v1099
        %v1101 = vlaneseq
        %v1102 = vshrl.u32 %v1101, 7
        %v1103 = vsub.s32 0, %v1102
        %v1104 = vrot.slane %v1076, %v1103
        %v1105 = vlaneseq
        %v1106 = vshrl.u32 %v1105, 7
        %v1107 = vsub.s32 0, %v1106
        %v1108 = vrot.slane %v1078, %v1107
        %v1109 = vlaneseq
        %v1110 = vshrl.u32 %v1109, 7
        %v1111 = vsub.s32 0, %v1110
        %v1112 = vrot.slane %v1080, %v1111
        %v1121 = vadd.f32 %v1023, %v1084
        %v1122 = vadd.f32 %v1024, %v1088
        %v1123 = vadd.f32 %v1025, %v1092
        %v1124 = vadd.f32 %v1026, %v1096
        %v1125 = vadd.f32 %v1027, %v1100
        %v1126 = vadd.f32 %v1028, %v1104
        %v1127 = vadd.f32 %v1029, %v1108
        %v1128 = vadd.f32 %v1030, %v1112
        %v1129 = vmul.f32 %v1121, 0.5
        %v1130 = vmul.f32 %v1122, 0.5
        %v1131 = vmul.f32 %v1123, 0.5
        %v1132 = vmul.f32 %v1124, 0.5
        %v1133 = vmul.f32 %v1125, 0.5
        %v1134 = vmul.f32 %v1126, 0.5
        %v1135 = vmul.f32 %v1127, 0.5
        %v1136 = vmul.f32 %v1128, 0.5
        %v1137 = vmul.f32 %v1121, 0.044715
        %v1138 = vmul.f32 %v1122, 0.044715
        %v1139 = vmul.f32 %v1123, 0.044715
        %v1140 = vmul.f32 %v1124, 0.044715
        %v1141 = vmul.f32 %v1125, 0.044715
        %v1142 = vmul.f32 %v1126, 0.044715
        %v1143 = vmul.f32 %v1127, 0.044715
        %v1144 = vmul.f32 %v1128, 0.044715
        %v1145 = vmul.f32 %v1137, %v1121
        %v1146 = vmul.f32 %v1138, %v1122
        %v1147 = vmul.f32 %v1139, %v1123
        %v1148 = vmul.f32 %v1140, %v1124
        %v1149 = vmul.f32 %v1141, %v1125
        %v1150 = vmul.f32 %v1142, %v1126
        %v1151 = vmul.f32 %v1143, %v1127
        %v1152 = vmul.f32 %v1144, %v1128
        %v1153 = vmul.f32 %v1145, %v1121
        %v1154 = vmul.f32 %v1146, %v1122
        %v1155 = vmul.f32 %v1147, %v1123
        %v1156 = vmul.f32 %v1148, %v1124
        %v1157 = vmul.f32 %v1149, %v1125
        %v1158 = vmul.f32 %v1150, %v1126
        %v1159 = vmul.f32 %v1151, %v1127
        %v1160 = vmul.f32 %v1152, %v1128
        %v1161 = vadd.f32 %v1121, %v1153
        %v1162 = vadd.f32 %v1122, %v1154
        %v1163 = vadd.f32 %v1123, %v1155
        %v1164 = vadd.f32 %v1124, %v1156
        %v1165 = vadd.f32 %v1125, %v1157
        %v1166 = vadd.f32 %v1126, %v1158
        %v1167 = vadd.f32 %v1127, %v1159
        %v1168 = vadd.f32 %v1128, %v1160
        %v1169 = vmul.f32 %v1161, 0.7978846
        %v1170 = vmul.f32 %v1162, 0.7978846
        %v1171 = vmul.f32 %v1163, 0.7978846
        %v1172 = vmul.f32 %v1164, 0.7978846
        %v1173 = vmul.f32 %v1165, 0.7978846
        %v1174 = vmul.f32 %v1166, 0.7978846
        %v1175 = vmul.f32 %v1167, 0.7978846
        %v1176 = vmul.f32 %v1168, 0.7978846
        %v1177 = vtanh.pop %v1169
        %v1178 = vtanh.pop %v1170
        %v1179 = vtanh.pop %v1171
        %v1180 = vtanh.pop %v1172
        %v1181 = vtanh.pop %v1173
        %v1182 = vtanh.pop %v1174
        %v1183 = vtanh.pop %v1175
        %v1184 = vtanh.pop %v1176
        %v1185 = vadd.f32 %v1177, 1.0
        %v1186 = vadd.f32 %v1178, 1.0
        %v1187 = vadd.f32 %v1179, 1.0
        %v1188 = vadd.f32 %v1180, 1.0
        %v1189 = vadd.f32 %v1181, 1.0
        %v1190 = vadd.f32 %v1182, 1.0
        %v1191 = vadd.f32 %v1183, 1.0
        %v1192 = vadd.f32 %v1184, 1.0
        %v1193 = vmul.f32 %v1129, %v1185
        %v1194 = vmul.f32 %v1130, %v1186
        %v1195 = vmul.f32 %v1131, %v1187
        %v1196 = vmul.f32 %v1132, %v1188
        %v1197 = vmul.f32 %v1133, %v1189
        %v1198 = vmul.f32 %v1134, %v1190
        %v1199 = vmul.f32 %v1135, %v1191
        %v1200 = vmul.f32 %v1136, %v1192
        %v1201 = vld [vmem:[%s6] sm:$0xff]
        %v1202 = vld [vmem:[%s6 + $0x8] sm:$0xff]
        %v1203 = vld [vmem:[%s6 + $0x10] sm:$0xff]
        %v1204 = vld [vmem:[%s6 + $0x18] sm:$0xff]
        %v1205 = vld [vmem:[%s7] sm:$0x1]
        %v1207 = vlaneseq
        %v1208 = vshrl.u32 %v1207, 7
        %v1209 = vsub.s32 0, %v1208
        %v1210 = vrot.slane %v1205, %v1209
        %v1213 = vsel %vm682, %v1193, 0
        %v1216 = vsel %vm682, %v1194, 0
        %v1219 = vsel %vm682, %v1195, 0
        %v1222 = vsel %vm682, %v1196, 0
        %v1225 = vsel %vm682, %v1197, 0
        %v1228 = vsel %vm682, %v1198, 0
        %v1231 = vsel %vm682, %v1199, 0
        %v1234 = vsel %vm682, %v1200, 0
        %1236 = vmatprep.subr.mxu0 0.0
        %1237 = vmatpush1.msra.mxu0 0.0
        %1238 = vmatprep.subr.mxu0 0.0
        %1239 = vmatpush1.msra.mxu0 0.0
        %1240 = vmatprep.subr.mxu0 0.0
        %1241 = vmatpush1.msra.mxu0 0.0
        %1242 = vmatprep.subr.mxu0 0.0
        %1243 = vmatpush1.msra.mxu0 0.0
        %1244 = vmatprep.subr.mxu0 0.0
        %1245 = vmatpush1.msra.mxu0 0.0
        %1246 = vmatprep.subr.mxu0 0.0
        %1247 = vmatpush1.msra.mxu0 0.0
        %1248 = vmatprep.subr.mxu0 0.0
        %1249 = vmatpush1.msra.mxu0 0.0
        %1250 = vmatprep.subr.mxu0 0.0
        %1251 = vmatpush1.msra.mxu0 0.0
        %1252 = vmatprep.subr.mxu0 0.0
        %1253 = vmatpush1.msra.mxu0 0.0
        %1254 = vmatprep.subr.mxu0 0.0
        %1255 = vmatpush1.msra.mxu0 0.0
        %1256 = vmatprep.subr.mxu0 0.0
        %1257 = vmatpush1.msra.mxu0 0.0
        %1258 = vmatprep.subr.mxu0 0.0
        %1259 = vmatpush1.msra.mxu0 0.0
        %1260 = vmatprep.subr.mxu0 0.0
        %1261 = vmatpush1.msra.mxu0 %v1204
        %1262 = vmatprep.subr.mxu0 0.0
        %1263 = vmatpush1.msra.mxu0 %v1203
        %1264 = vmatprep.subr.mxu0 0.0
        %1265 = vmatpush1.msra.mxu0 %v1202
        %1266 = vmatprep.subr.mxu0 0.0
        %1267 = vmatpush1.msra.mxu0 %v1201
        %1268 = vmatprep.subr.mxu0 0.0
        %1269 = vmatpush2.msra.mxu0 0.0
        %1270 = vmatprep.subr.mxu0 0.0
        %1271 = vmatpush2.msra.mxu0 0.0
        %1272 = vmatprep.subr.mxu0 0.0
        %1273 = vmatpush2.msra.mxu0 0.0
        %1274 = vmatprep.subr.mxu0 0.0
        %1275 = vmatpush2.msra.mxu0 0.0
        %1276 = vmatprep.subr.mxu0 0.0
        %1277 = vmatpush2.msra.mxu0 0.0
        %1278 = vmatprep.subr.mxu0 0.0
        %1279 = vmatpush2.msra.mxu0 0.0
        %1280 = vmatprep.subr.mxu0 0.0
        %1281 = vmatpush2.msra.mxu0 0.0
        %1282 = vmatprep.subr.mxu0 0.0
        %1283 = vmatpush2.msra.mxu0 0.0
        %1284 = vmatprep.subr.mxu0 0.0
        %1285 = vmatpush2.msra.mxu0 0.0
        %1286 = vmatprep.subr.mxu0 0.0
        %1287 = vmatpush2.msra.mxu0 0.0
        %1288 = vmatprep.subr.mxu0 0.0
        %1289 = vmatpush2.msra.mxu0 0.0
        %1290 = vmatprep.subr.mxu0 0.0
        %1291 = vmatpush2.msra.mxu0 0.0
        %1292 = vmatprep.subr.mxu0 0.0
        %1293 = vmatpush2.msra.mxu0 0.0
        %1294 = vmatprep.subr.mxu0 0.0
        %1295 = vmatpush2.msra.mxu0 0.0
        %1296 = vmatprep.subr.mxu0 0.0
        %1297 = vmatpush2.msra.mxu0 0.0
        %1298 = vmatprep.subr.mxu0 0.0
        %1299 = vmatpush2.msra.mxu0 0.0
        %1300 = vmatprep.mubr.f32.mxu0 0.0
        %1301 = vmatmul.mubr.f32.gmra.mxu0 %v1213
        %v1302 = vpop.f32.mrf.mxu0
        %v1303 = vadd.f32 %v1210, %v1302
        %v1304 = vpop.f32.mrf.mxu0
        %1305 = vmatprep.mubr.f32.mxu0 0.0
        %1306 = vmatmul.mubr.f32.gmra.mxu0 %v1216
        %v1307 = vpop.f32.mrf.mxu0
        %v1308 = vadd.f32 %v1210, %v1307
        %v1309 = vpop.f32.mrf.mxu0
        %1310 = vmatprep.mubr.f32.mxu0 0.0
        %1311 = vmatmul.mubr.f32.gmra.mxu0 %v1219
        %v1312 = vpop.f32.mrf.mxu0
        %v1313 = vadd.f32 %v1210, %v1312
        %v1314 = vpop.f32.mrf.mxu0
        %1315 = vmatprep.mubr.f32.mxu0 0.0
        %1316 = vmatmul.mubr.f32.gmra.mxu0 %v1222
        %v1317 = vpop.f32.mrf.mxu0
        %v1318 = vadd.f32 %v1210, %v1317
        %v1319 = vpop.f32.mrf.mxu0
        %1320 = vmatprep.mubr.f32.mxu0 0.0
        %1321 = vmatmul.mubr.f32.gmra.mxu0 %v1225
        %v1322 = vpop.f32.mrf.mxu0
        %v1323 = vadd.f32 %v1210, %v1322
        %v1324 = vpop.f32.mrf.mxu0
        %1325 = vmatprep.mubr.f32.mxu0 0.0
        %1326 = vmatmul.mubr.f32.gmra.mxu0 %v1228
        %v1327 = vpop.f32.mrf.mxu0
        %v1328 = vadd.f32 %v1210, %v1327
        %v1329 = vpop.f32.mrf.mxu0
        %1330 = vmatprep.mubr.f32.mxu0 0.0
        %1331 = vmatmul.mubr.f32.gmra.mxu0 %v1231
        %v1332 = vpop.f32.mrf.mxu0
        %v1333 = vadd.f32 %v1210, %v1332
        %v1334 = vpop.f32.mrf.mxu0
        %1335 = vmatprep.mubr.f32.mxu0 0.0
        %1336 = vmatmul.mubr.f32.gmra.mxu0 %v1234
        %v1337 = vpop.f32.mrf.mxu0
        %v1338 = vadd.f32 %v1210, %v1337
        %v1339 = vpop.f32.mrf.mxu0
        %1340 = vdwg.mxu0
        %v1341 = vmul.f32 %v1303, 0.5
        %v1342 = vmul.f32 %v1308, 0.5
        %v1343 = vmul.f32 %v1313, 0.5
        %v1344 = vmul.f32 %v1318, 0.5
        %v1345 = vmul.f32 %v1323, 0.5
        %v1346 = vmul.f32 %v1328, 0.5
        %v1347 = vmul.f32 %v1333, 0.5
        %v1348 = vmul.f32 %v1338, 0.5
        %v1349 = vmul.f32 %v1303, 0.044715
        %v1350 = vmul.f32 %v1308, 0.044715
        %v1351 = vmul.f32 %v1313, 0.044715
        %v1352 = vmul.f32 %v1318, 0.044715
        %v1353 = vmul.f32 %v1323, 0.044715
        %v1354 = vmul.f32 %v1328, 0.044715
        %v1355 = vmul.f32 %v1333, 0.044715
        %v1356 = vmul.f32 %v1338, 0.044715
        %v1357 = vmul.f32 %v1349, %v1303
        %v1358 = vmul.f32 %v1350, %v1308
        %v1359 = vmul.f32 %v1351, %v1313
        %v1360 = vmul.f32 %v1352, %v1318
        %v1361 = vmul.f32 %v1353, %v1323
        %v1362 = vmul.f32 %v1354, %v1328
        %v1363 = vmul.f32 %v1355, %v1333
        %v1364 = vmul.f32 %v1356, %v1338
        %v1365 = vmul.f32 %v1357, %v1303
        %v1366 = vmul.f32 %v1358, %v1308
        %v1367 = vmul.f32 %v1359, %v1313
        %v1368 = vmul.f32 %v1360, %v1318
        %v1369 = vmul.f32 %v1361, %v1323
        %v1370 = vmul.f32 %v1362, %v1328
        %v1371 = vmul.f32 %v1363, %v1333
        %v1372 = vmul.f32 %v1364, %v1338
        %v1373 = vadd.f32 %v1303, %v1365
        %v1374 = vadd.f32 %v1308, %v1366
        %v1375 = vadd.f32 %v1313, %v1367
        %v1376 = vadd.f32 %v1318, %v1368
        %v1377 = vadd.f32 %v1323, %v1369
        %v1378 = vadd.f32 %v1328, %v1370
        %v1379 = vadd.f32 %v1333, %v1371
        %v1380 = vadd.f32 %v1338, %v1372
        %v1381 = vmul.f32 %v1373, 0.7978846
        %v1382 = vmul.f32 %v1374, 0.7978846
        %v1383 = vmul.f32 %v1375, 0.7978846
        %v1384 = vmul.f32 %v1376, 0.7978846
        %v1385 = vmul.f32 %v1377, 0.7978846
        %v1386 = vmul.f32 %v1378, 0.7978846
        %v1387 = vmul.f32 %v1379, 0.7978846
        %v1388 = vmul.f32 %v1380, 0.7978846
        %v1389 = vtanh.pop %v1381
        %v1390 = vtanh.pop %v1382
        %v1391 = vtanh.pop %v1383
        %v1392 = vtanh.pop %v1384
        %v1393 = vtanh.pop %v1385
        %v1394 = vtanh.pop %v1386
        %v1395 = vtanh.pop %v1387
        %v1396 = vtanh.pop %v1388
        %v1397 = vadd.f32 %v1389, 1.0
        %v1398 = vadd.f32 %v1390, 1.0
        %v1399 = vadd.f32 %v1391, 1.0
        %v1400 = vadd.f32 %v1392, 1.0
        %v1401 = vadd.f32 %v1393, 1.0
        %v1402 = vadd.f32 %v1394, 1.0
        %v1403 = vadd.f32 %v1395, 1.0
        %v1404 = vadd.f32 %v1396, 1.0
        %v1405 = vmul.f32 %v1341, %v1397
        %v1406 = vmul.f32 %v1342, %v1398
        %v1407 = vmul.f32 %v1343, %v1399
        %v1408 = vmul.f32 %v1344, %v1400
        %v1409 = vmul.f32 %v1345, %v1401
        %v1410 = vmul.f32 %v1346, %v1402
        %v1411 = vmul.f32 %v1347, %v1403
        %v1412 = vmul.f32 %v1348, %v1404
        %v1413 = vsel %vm682, %v1405, 0.0
        %v1414 = vrot.slane %v1413, 4
        %v1415 = vadd.f32 %v1413, %v1414
        %v1416 = vrot.slane %v1415, 2
        %v1417 = vadd.f32 %v1415, %v1416
        %v1418 = vrot.slane %v1417, 1
        %v1419 = vadd.f32 %v1417, %v1418
        %v1420 = vsel %vm682, %v1406, 0.0
        %v1421 = vrot.slane %v1420, 4
        %v1422 = vadd.f32 %v1420, %v1421
        %v1423 = vrot.slane %v1422, 2
        %v1424 = vadd.f32 %v1422, %v1423
        %v1425 = vrot.slane %v1424, 1
        %v1426 = vadd.f32 %v1424, %v1425
        %v1427 = vsel %vm682, %v1407, 0.0
        %v1428 = vrot.slane %v1427, 4
        %v1429 = vadd.f32 %v1427, %v1428
        %v1430 = vrot.slane %v1429, 2
        %v1431 = vadd.f32 %v1429, %v1430
        %v1432 = vrot.slane %v1431, 1
        %v1433 = vadd.f32 %v1431, %v1432
        %v1434 = vsel %vm682, %v1408, 0.0
        %v1435 = vrot.slane %v1434, 4
        %v1436 = vadd.f32 %v1434, %v1435
        %v1437 = vrot.slane %v1436, 2
        %v1438 = vadd.f32 %v1436, %v1437
        %v1439 = vrot.slane %v1438, 1
        %v1440 = vadd.f32 %v1438, %v1439
        %v1441 = vsel %vm682, %v1409, 0.0
        %v1442 = vrot.slane %v1441, 4
        %v1443 = vadd.f32 %v1441, %v1442
        %v1444 = vrot.slane %v1443, 2
        %v1445 = vadd.f32 %v1443, %v1444
        %v1446 = vrot.slane %v1445, 1
        %v1447 = vadd.f32 %v1445, %v1446
        %v1448 = vsel %vm682, %v1410, 0.0
        %v1449 = vrot.slane %v1448, 4
        %v1450 = vadd.f32 %v1448, %v1449
        %v1451 = vrot.slane %v1450, 2
        %v1452 = vadd.f32 %v1450, %v1451
        %v1453 = vrot.slane %v1452, 1
        %v1454 = vadd.f32 %v1452, %v1453
        %v1455 = vsel %vm682, %v1411, 0.0
        %v1456 = vrot.slane %v1455, 4
        %v1457 = vadd.f32 %v1455, %v1456
        %v1458 = vrot.slane %v1457, 2
        %v1459 = vadd.f32 %v1457, %v1458
        %v1460 = vrot.slane %v1459, 1
        %v1461 = vadd.f32 %v1459, %v1460
        %v1462 = vsel %vm682, %v1412, 0.0
        %v1463 = vrot.slane %v1462, 4
        %v1464 = vadd.f32 %v1462, %v1463
        %v1465 = vrot.slane %v1464, 2
        %v1466 = vadd.f32 %v1464, %v1465
        %v1467 = vrot.slane %v1466, 1
        %v1468 = vadd.f32 %v1466, %v1467
        %v1469 = vld [vmem:[%s8] sm:$0xff]
        %v1470 = vld [vmem:[%s8 + $0x8] sm:$0xff]
        %v1471 = vld [vmem:[%s8 + $0x10] sm:$0xff]
        %v1472 = vld [vmem:[%s8 + $0x18] sm:$0xff]
        %v1473 = vld [vmem:[%s9] sm:$0x1]
        %v1475 = vlaneseq
        %v1476 = vshrl.u32 %v1475, 7
        %v1477 = vsub.s32 0, %v1476
        %v1478 = vrot.slane %v1473, %v1477
        %vm1488 = vcmask 1041409
        %v1489 = vsel %vm1488, %v1426, %v1419
        %vm1490 = vcmask 1042434
        %v1491 = vsel %vm1490, %v1433, %v1489
        %vm1492 = vcmask 1043459
        %v1493 = vsel %vm1492, %v1440, %v1491
        %vm1494 = vcmask 1044484
        %v1495 = vsel %vm1494, %v1447, %v1493
        %vm1496 = vcmask 1045509
        %v1497 = vsel %vm1496, %v1454, %v1495
        %vm1498 = vcmask 1046534
        %v1499 = vsel %vm1498, %v1461, %v1497
        %vm1500 = vcmask 1047559
        %v1501 = vsel %vm1500, %v1468, %v1499
        %v1502 = vsel %vm682, %v1501, 0
        %1504 = vmatprep.subr.mxu0 0.0
        %1505 = vmatpush1.msra.mxu0 0.0
        %1506 = vmatprep.subr.mxu0 0.0
        %1507 = vmatpush1.msra.mxu0 0.0
        %1508 = vmatprep.subr.mxu0 0.0
        %1509 = vmatpush1.msra.mxu0 0.0
        %1510 = vmatprep.subr.mxu0 0.0
        %1511 = vmatpush1.msra.mxu0 0.0
        %1512 = vmatprep.subr.mxu0 0.0
        %1513 = vmatpush1.msra.mxu0 0.0
        %1514 = vmatprep.subr.mxu0 0.0
        %1515 = vmatpush1.msra.mxu0 0.0
        %1516 = vmatprep.subr.mxu0 0.0
        %1517 = vmatpush1.msra.mxu0 0.0
        %1518 = vmatprep.subr.mxu0 0.0
        %1519 = vmatpush1.msra.mxu0 0.0
        %1520 = vmatprep.subr.mxu0 0.0
        %1521 = vmatpush1.msra.mxu0 0.0
        %1522 = vmatprep.subr.mxu0 0.0
        %1523 = vmatpush1.msra.mxu0 0.0
        %1524 = vmatprep.subr.mxu0 0.0
        %1525 = vmatpush1.msra.mxu0 0.0
        %1526 = vmatprep.subr.mxu0 0.0
        %1527 = vmatpush1.msra.mxu0 0.0
        %1528 = vmatprep.subr.mxu0 0.0
        %1529 = vmatpush1.msra.mxu0 %v1472
        %1530 = vmatprep.subr.mxu0 0.0
        %1531 = vmatpush1.msra.mxu0 %v1471
        %1532 = vmatprep.subr.mxu0 0.0
        %1533 = vmatpush1.msra.mxu0 %v1470
        %1534 = vmatprep.subr.mxu0 0.0
        %1535 = vmatpush1.msra.mxu0 %v1469
        %1536 = vmatprep.subr.mxu0 0.0
        %1537 = vmatpush2.msra.mxu0 0.0
        %1538 = vmatprep.subr.mxu0 0.0
        %1539 = vmatpush2.msra.mxu0 0.0
        %1540 = vmatprep.subr.mxu0 0.0
        %1541 = vmatpush2.msra.mxu0 0.0
        %1542 = vmatprep.subr.mxu0 0.0
        %1543 = vmatpush2.msra.mxu0 0.0
        %1544 = vmatprep.subr.mxu0 0.0
        %1545 = vmatpush2.msra.mxu0 0.0
        %1546 = vmatprep.subr.mxu0 0.0
        %1547 = vmatpush2.msra.mxu0 0.0
        %1548 = vmatprep.subr.mxu0 0.0
        %1549 = vmatpush2.msra.mxu0 0.0
        %1550 = vmatprep.subr.mxu0 0.0
        %1551 = vmatpush2.msra.mxu0 0.0
        %1552 = vmatprep.subr.mxu0 0.0
        %1553 = vmatpush2.msra.mxu0 0.0
        %1554 = vmatprep.subr.mxu0 0.0
        %1555 = vmatpush2.msra.mxu0 0.0
        %1556 = vmatprep.subr.mxu0 0.0
        %1557 = vmatpush2.msra.mxu0 0.0
        %1558 = vmatprep.subr.mxu0 0.0
        %1559 = vmatpush2.msra.mxu0 0.0
        %1560 = vmatprep.subr.mxu0 0.0
        %1561 = vmatpush2.msra.mxu0 0.0
        %1562 = vmatprep.subr.mxu0 0.0
        %1563 = vmatpush2.msra.mxu0 0.0
        %1564 = vmatprep.subr.mxu0 0.0
        %1565 = vmatpush2.msra.mxu0 0.0
        %1566 = vmatprep.subr.mxu0 0.0
        %1567 = vmatpush2.msra.mxu0 0.0
        %1568 = vmatprep.mubr.f32.mxu0 0.0
        %1569 = vmatmul.mubr.f32.gmra.mxu0 %v1502
        %v1570 = vpop.f32.mrf.mxu0
        %v1571 = vadd.f32 %v1478, %v1570
        %v1572 = vpop.f32.mrf.mxu0
        %1573 = vdwg.mxu0
        %v1574 = vadd.f32 %v661, %v1571
        %v1575 = vld [vmem:[%s14] sm:$0x1]
        %v1576 = vld [vmem:[%s15] sm:$0x1]
        %v1577 = vsel %vm682, %v1574, 0.0
        %1578 = vadd.xlane.f32.xlu0 %v1577
        %v1579 = vpop.xlane.xlu0 %1578
        %v1580 = vrcp.pop 32.0
        %v1581 = vmul.f32 %v1579, %v1580
        %v1582 = vsub.f32 %v1574, %v1581
        %v1583 = vmul.f32 %v1582, %v1582
        %v1584 = vsel %vm682, %v1583, 0.0
        %1585 = vadd.xlane.f32.xlu0 %v1584
        %v1586 = vpop.xlane.xlu0 %1585
        %v1587 = vmul.f32 %v1586, %v1580
        %v1588 = vadd.f32 %v1587, 1e-05
        %v1589 = vrsqrt.pop %v1588
        %v1590 = vmul.f32 %v1582, %v1589
        %v1592 = vlaneseq
        %v1593 = vshrl.u32 %v1592, 7
        %v1594 = vsub.s32 0, %v1593
        %v1595 = vrot.slane %v1575, %v1594
        %v1597 = vmul.f32 %v1590, %v1595
        %v1599 = vlaneseq
        %v1600 = vshrl.u32 %v1599, 7
        %v1601 = vsub.s32 0, %v1600
        %v1602 = vrot.slane %v1576, %v1601
        %v1604 = vadd.f32 %v1597, %v1602
        %v1605 = vld [vmem:[%s10] sm:$0xff]
        %v1606 = vld [vmem:[%s10 + $0x8] sm:$0xff]
        %v1607 = vld [vmem:[%s10 + $0x10] sm:$0xff]
        %v1608 = vld [vmem:[%s10 + $0x18] sm:$0xff]
        %v1609 = vld [vmem:[%s11] sm:$0x1]
        %v1611 = vlaneseq
        %v1612 = vshrl.u32 %v1611, 7
        %v1613 = vsub.s32 0, %v1612
        %v1614 = vrot.slane %v1609, %v1613
        %v1617 = vsel %vm682, %v1604, 0
        %1619 = vmatprep.subr.mxu0 0.0
        %1620 = vmatpush1.msra.mxu0 0.0
        %1621 = vmatprep.subr.mxu0 0.0
        %1622 = vmatpush1.msra.mxu0 0.0
        %1623 = vmatprep.subr.mxu0 0.0
        %1624 = vmatpush1.msra.mxu0 0.0
        %1625 = vmatprep.subr.mxu0 0.0
        %1626 = vmatpush1.msra.mxu0 0.0
        %1627 = vmatprep.subr.mxu0 0.0
        %1628 = vmatpush1.msra.mxu0 0.0
        %1629 = vmatprep.subr.mxu0 0.0
        %1630 = vmatpush1.msra.mxu0 0.0
        %1631 = vmatprep.subr.mxu0 0.0
        %1632 = vmatpush1.msra.mxu0 0.0
        %1633 = vmatprep.subr.mxu0 0.0
        %1634 = vmatpush1.msra.mxu0 0.0
        %1635 = vmatprep.subr.mxu0 0.0
        %1636 = vmatpush1.msra.mxu0 0.0
        %1637 = vmatprep.subr.mxu0 0.0
        %1638 = vmatpush1.msra.mxu0 0.0
        %1639 = vmatprep.subr.mxu0 0.0
        %1640 = vmatpush1.msra.mxu0 0.0
        %1641 = vmatprep.subr.mxu0 0.0
        %1642 = vmatpush1.msra.mxu0 0.0
        %1643 = vmatprep.subr.mxu0 0.0
        %1644 = vmatpush1.msra.mxu0 %v1608
        %1645 = vmatprep.subr.mxu0 0.0
        %1646 = vmatpush1.msra.mxu0 %v1607
        %1647 = vmatprep.subr.mxu0 0.0
        %1648 = vmatpush1.msra.mxu0 %v1606
        %1649 = vmatprep.subr.mxu0 0.0
        %1650 = vmatpush1.msra.mxu0 %v1605
        %1651 = vmatprep.subr.mxu0 0.0
        %1652 = vmatpush2.msra.mxu0 0.0
        %1653 = vmatprep.subr.mxu0 0.0
        %1654 = vmatpush2.msra.mxu0 0.0
        %1655 = vmatprep.subr.mxu0 0.0
        %1656 = vmatpush2.msra.mxu0 0.0
        %1657 = vmatprep.subr.mxu0 0.0
        %1658 = vmatpush2.msra.mxu0 0.0
        %1659 = vmatprep.subr.mxu0 0.0
        %1660 = vmatpush2.msra.mxu0 0.0
        %1661 = vmatprep.subr.mxu0 0.0
        %1662 = vmatpush2.msra.mxu0 0.0
        %1663 = vmatprep.subr.mxu0 0.0
        %1664 = vmatpush2.msra.mxu0 0.0
        %1665 = vmatprep.subr.mxu0 0.0
        %1666 = vmatpush2.msra.mxu0 0.0
        %1667 = vmatprep.subr.mxu0 0.0
        %1668 = vmatpush2.msra.mxu0 0.0
        %1669 = vmatprep.subr.mxu0 0.0
        %1670 = vmatpush2.msra.mxu0 0.0
        %1671 = vmatprep.subr.mxu0 0.0
        %1672 = vmatpush2.msra.mxu0 0.0
        %1673 = vmatprep.subr.mxu0 0.0
        %1674 = vmatpush2.msra.mxu0 0.0
        %1675 = vmatprep.subr.mxu0 0.0
        %1676 = vmatpush2.msra.mxu0 0.0
        %1677 = vmatprep.subr.mxu0 0.0
        %1678 = vmatpush2.msra.mxu0 0.0
        %1679 = vmatprep.subr.mxu0 0.0
        %1680 = vmatpush2.msra.mxu0 0.0
        %1681 = vmatprep.subr.mxu0 0.0
        %1682 = vmatpush2.msra.mxu0 0.0
        %1683 = vmatprep.mubr.f32.mxu0 0.0
        %1684 = vmatmul.mubr.f32.gmra.mxu0 %v1617
        %v1685 = vpop.f32.mrf.mxu0
        %v1686 = vadd.f32 %v1614, %v1685
        %v1687 = vpop.f32.mrf.mxu0
        %1688 = vdwg.mxu0
        %v1689 = vmul.f32 %v1686, 0.5
        %v1690 = vmul.f32 %v1686, 0.044715
        %v1691 = vmul.f32 %v1690, %v1686
        %v1692 = vmul.f32 %v1691, %v1686
        %v1693 = vadd.f32 %v1686, %v1692
        %v1694 = vmul.f32 %v1693, 0.7978846
        %v1695 = vtanh.pop %v1694
        %v1696 = vadd.f32 %v1695, 1.0
        %v1697 = vmul.f32 %v1689, %v1696
        %v1698 = vld [vmem:[%s12] sm:$0xff]
        %v1699 = vld [vmem:[%s12 + $0x8] sm:$0xff]
        %v1700 = vld [vmem:[%s12 + $0x10] sm:$0xff]
        %v1701 = vld [vmem:[%s12 + $0x18] sm:$0xff]
        %v1702 = vld [vmem:[%s12 + $0x20] sm:$0xff]
        %v1703 = vld [vmem:[%s12 + $0x28] sm:$0xff]
        %v1704 = vld [vmem:[%s12 + $0x30] sm:$0xff]
        %v1705 = vld [vmem:[%s12 + $0x38] sm:$0xff]
        %v1706 = vld [vmem:[%s12 + $0x40] sm:$0xff]
        %v1707 = vld [vmem:[%s12 + $0x48] sm:$0xff]
        %v1708 = vld [vmem:[%s12 + $0x50] sm:$0xff]
        %v1709 = vld [vmem:[%s12 + $0x58] sm:$0xff]
        %v1710 = vld [vmem:[%s12 + $0x60] sm:$0xff]
        %v1711 = vld [vmem:[%s12 + $0x68] sm:$0xff]
        %v1712 = vld [vmem:[%s12 + $0x70] sm:$0xff]
        %v1713 = vld [vmem:[%s12 + $0x78] sm:$0xff]
        %v1714 = vld [vmem:[%s13] sm:$0x1]
        %v1716 = vlaneseq
        %v1717 = vshrl.u32 %v1716, 7
        %v1718 = vsub.s32 0, %v1717
        %v1719 = vrot.slane %v1714, %v1718
        %1721 = vmatprep.subr.mxu0 0.0
        %1722 = vmatpush1.msra.mxu0 %v1713
        %1723 = vmatprep.subr.mxu0 0.0
        %1724 = vmatpush1.msra.mxu0 %v1712
        %1725 = vmatprep.subr.mxu0 0.0
        %1726 = vmatpush1.msra.mxu0 %v1711
        %1727 = vmatprep.subr.mxu0 0.0
        %1728 = vmatpush1.msra.mxu0 %v1710
        %1729 = vmatprep.subr.mxu0 0.0
        %1730 = vmatpush1.msra.mxu0 %v1709
        %1731 = vmatprep.subr.mxu0 0.0
        %1732 = vmatpush1.msra.mxu0 %v1708
        %1733 = vmatprep.subr.mxu0 0.0
        %1734 = vmatpush1.msra.mxu0 %v1707
        %1735 = vmatprep.subr.mxu0 0.0
        %1736 = vmatpush1.msra.mxu0 %v1706
        %1737 = vmatprep.subr.mxu0 0.0
        %1738 = vmatpush1.msra.mxu0 %v1705
        %1739 = vmatprep.subr.mxu0 0.0
        %1740 = vmatpush1.msra.mxu0 %v1704
        %1741 = vmatprep.subr.mxu0 0.0
        %1742 = vmatpush1.msra.mxu0 %v1703
        %1743 = vmatprep.subr.mxu0 0.0
        %1744 = vmatpush1.msra.mxu0 %v1702
        %1745 = vmatprep.subr.mxu0 0.0
        %1746 = vmatpush1.msra.mxu0 %v1701
        %1747 = vmatprep.subr.mxu0 0.0
        %1748 = vmatpush1.msra.mxu0 %v1700
        %1749 = vmatprep.subr.mxu0 0.0
        %1750 = vmatpush1.msra.mxu0 %v1699
        %1751 = vmatprep.subr.mxu0 0.0
        %1752 = vmatpush1.msra.mxu0 %v1698
        %1753 = vmatprep.subr.mxu0 0.0
        %1754 = vmatpush2.msra.mxu0 0.0
        %1755 = vmatprep.subr.mxu0 0.0
        %1756 = vmatpush2.msra.mxu0 0.0
        %1757 = vmatprep.subr.mxu0 0.0
        %1758 = vmatpush2.msra.mxu0 0.0
        %1759 = vmatprep.subr.mxu0 0.0
        %1760 = vmatpush2.msra.mxu0 0.0
        %1761 = vmatprep.subr.mxu0 0.0
        %1762 = vmatpush2.msra.mxu0 0.0
        %1763 = vmatprep.subr.mxu0 0.0
        %1764 = vmatpush2.msra.mxu0 0.0
        %1765 = vmatprep.subr.mxu0 0.0
        %1766 = vmatpush2.msra.mxu0 0.0
        %1767 = vmatprep.subr.mxu0 0.0
        %1768 = vmatpush2.msra.mxu0 0.0
        %1769 = vmatprep.subr.mxu0 0.0
        %1770 = vmatpush2.msra.mxu0 0.0
        %1771 = vmatprep.subr.mxu0 0.0
        %1772 = vmatpush2.msra.mxu0 0.0
        %1773 = vmatprep.subr.mxu0 0.0
        %1774 = vmatpush2.msra.mxu0 0.0
        %1775 = vmatprep.subr.mxu0 0.0
        %1776 = vmatpush2.msra.mxu0 0.0
        %1777 = vmatprep.subr.mxu0 0.0
        %1778 = vmatpush2.msra.mxu0 0.0
        %1779 = vmatprep.subr.mxu0 0.0
        %1780 = vmatpush2.msra.mxu0 0.0
        %1781 = vmatprep.subr.mxu0 0.0
        %1782 = vmatpush2.msra.mxu0 0.0
        %1783 = vmatprep.subr.mxu0 0.0
        %1784 = vmatpush2.msra.mxu0 0.0
        %1785 = vmatprep.mubr.f32.mxu0 0.0
        %1786 = vmatmul.mubr.f32.gmra.mxu0 %v1697
        %v1787 = vpop.f32.mrf.mxu0
        %v1788 = vadd.f32 %v1719, %v1787
        %v1789 = vpop.f32.mrf.mxu0
        %1790 = vdwg.mxu0
        %v1791 = vadd.f32 %v1604, %v1788
        %v1792 = vld [vmem:[%s16] sm:$0x1]
        %v1793 = vld [vmem:[%s17] sm:$0x1]
        %v1794 = vsel %vm682, %v1791, 0.0
        %1795 = vadd.xlane.f32.xlu0 %v1794
        %v1796 = vpop.xlane.xlu0 %1795
        %v1797 = vmul.f32 %v1796, %v1580
        %v1798 = vsub.f32 %v1791, %v1797
        %v1799 = vmul.f32 %v1798, %v1798
        %v1800 = vsel %vm682, %v1799, 0.0
        %1801 = vadd.xlane.f32.xlu0 %v1800
        %v1802 = vpop.xlane.xlu0 %1801
        %v1803 = vmul.f32 %v1802, %v1580
        %v1804 = vadd.f32 %v1803, 1e-05
        %v1805 = vrsqrt.pop %v1804
        %v1806 = vmul.f32 %v1798, %v1805
        %v1808 = vlaneseq
        %v1809 = vshrl.u32 %v1808, 7
        %v1810 = vsub.s32 0, %v1809
        %v1811 = vrot.slane %v1792, %v1810
        %v1813 = vmul.f32 %v1806, %v1811
        %v1815 = vlaneseq
        %v1816 = vshrl.u32 %v1815, 7
        %v1817 = vsub.s32 0, %v1816
        %v1818 = vrot.slane %v1793, %v1817
        %v1820 = vadd.f32 %v1813, %v1818
        %1821 = vset.pattern.permute.xlu0 0
        %1822 = vperm.xlu0 %1821, %v670
        %v1823 = vpop.permute.xlu0 %1822
        %v1825 = vmul.f32 %v1823, %v1820
        %s1826 = scalar_lea.vmem %s3, 32
        %v1827 = vld [vmem:[%s1826] sm:$0xff]
        %v1828 = vld [vmem:[%s1826 + $0x8] sm:$0xff]
        %v1829 = vld [vmem:[%s1826 + $0x10] sm:$0xff]
        %v1830 = vld [vmem:[%s1826 + $0x18] sm:$0xff]
        %s1831 = scalar_lea.vmem %s5, 1
        %v1832 = vld [vmem:[%s1831] sm:$0x1]
        %v1834 = vlaneseq
        %v1835 = vshrl.u32 %v1834, 7
        %v1836 = vsub.s32 0, %v1835
        %v1837 = vrot.slane %v1832, %v1836
        %v1840 = vsel %vm682, %v1825, 0
        %1842 = vmatprep.subr.mxu0 0.0
        %1843 = vmatpush1.msra.mxu0 0.0
        %1844 = vmatprep.subr.mxu0 0.0
        %1845 = vmatpush1.msra.mxu0 0.0
        %1846 = vmatprep.subr.mxu0 0.0
        %1847 = vmatpush1.msra.mxu0 0.0
        %1848 = vmatprep.subr.mxu0 0.0
        %1849 = vmatpush1.msra.mxu0 0.0
        %1850 = vmatprep.subr.mxu0 0.0
        %1851 = vmatpush1.msra.mxu0 0.0
        %1852 = vmatprep.subr.mxu0 0.0
        %1853 = vmatpush1.msra.mxu0 0.0
        %1854 = vmatprep.subr.mxu0 0.0
        %1855 = vmatpush1.msra.mxu0 0.0
        %1856 = vmatprep.subr.mxu0 0.0
        %1857 = vmatpush1.msra.mxu0 0.0
        %1858 = vmatprep.subr.mxu0 0.0
        %1859 = vmatpush1.msra.mxu0 0.0
        %1860 = vmatprep.subr.mxu0 0.0
        %1861 = vmatpush1.msra.mxu0 0.0
        %1862 = vmatprep.subr.mxu0 0.0
        %1863 = vmatpush1.msra.mxu0 0.0
        %1864 = vmatprep.subr.mxu0 0.0
        %1865 = vmatpush1.msra.mxu0 0.0
        %1866 = vmatprep.subr.mxu0 0.0
        %1867 = vmatpush1.msra.mxu0 %v1830
        %1868 = vmatprep.subr.mxu0 0.0
        %1869 = vmatpush1.msra.mxu0 %v1829
        %1870 = vmatprep.subr.mxu0 0.0
        %1871 = vmatpush1.msra.mxu0 %v1828
        %1872 = vmatprep.subr.mxu0 0.0
        %1873 = vmatpush1.msra.mxu0 %v1827
        %1874 = vmatprep.subr.mxu0 0.0
        %1875 = vmatpush2.msra.mxu0 0.0
        %1876 = vmatprep.subr.mxu0 0.0
        %1877 = vmatpush2.msra.mxu0 0.0
        %1878 = vmatprep.subr.mxu0 0.0
        %1879 = vmatpush2.msra.mxu0 0.0
        %1880 = vmatprep.subr.mxu0 0.0
        %1881 = vmatpush2.msra.mxu0 0.0
        %1882 = vmatprep.subr.mxu0 0.0
        %1883 = vmatpush2.msra.mxu0 0.0
        %1884 = vmatprep.subr.mxu0 0.0
        %1885 = vmatpush2.msra.mxu0 0.0
        %1886 = vmatprep.subr.mxu0 0.0
        %1887 = vmatpush2.msra.mxu0 0.0
        %1888 = vmatprep.subr.mxu0 0.0
        %1889 = vmatpush2.msra.mxu0 0.0
        %1890 = vmatprep.subr.mxu0 0.0
        %1891 = vmatpush2.msra.mxu0 0.0
        %1892 = vmatprep.subr.mxu0 0.0
        %1893 = vmatpush2.msra.mxu0 0.0
        %1894 = vmatprep.subr.mxu0 0.0
        %1895 = vmatpush2.msra.mxu0 0.0
        %1896 = vmatprep.subr.mxu0 0.0
        %1897 = vmatpush2.msra.mxu0 0.0
        %1898 = vmatprep.subr.mxu0 0.0
        %1899 = vmatpush2.msra.mxu0 0.0
        %1900 = vmatprep.subr.mxu0 0.0
        %1901 = vmatpush2.msra.mxu0 0.0
        %1902 = vmatprep.subr.mxu0 0.0
        %1903 = vmatpush2.msra.mxu0 0.0
        %1904 = vmatprep.subr.mxu0 0.0
        %1905 = vmatpush2.msra.mxu0 0.0
        %1906 = vmatprep.mubr.f32.mxu0 0.0
        %1907 = vmatmul.mubr.f32.gmra.mxu0 %v1840
        %v1908 = vpop.f32.mrf.mxu0
        %v1909 = vadd.f32 %v1837, %v1908
        %v1910 = vpop.f32.mrf.mxu0
        %1911 = vdwg.mxu0
        %s1912 = scalar_lea.vmem %s4, 64
        %v1913 = vld [vmem:[%s1912] sm:$0xf]
        %v1914 = vld [vmem:[%s1912 + $0x4] sm:$0xf]
        %v1915 = vld [vmem:[%s1912 + $0x8] sm:$0xf]
        %v1916 = vld [vmem:[%s1912 + $0xc] sm:$0xf]
        %v1917 = vld [vmem:[%s1912 + $0x10] sm:$0xf]
        %v1918 = vld [vmem:[%s1912 + $0x14] sm:$0xf]
        %v1919 = vld [vmem:[%s1912 + $0x18] sm:$0xf]
        %v1920 = vld [vmem:[%s1912 + $0x1c] sm:$0xf]
        %v1921 = vld [vmem:[%s1912 + $0x20] sm:$0xf]
        %v1922 = vld [vmem:[%s1912 + $0x24] sm:$0xf]
        %v1923 = vld [vmem:[%s1912 + $0x28] sm:$0xf]
        %v1924 = vld [vmem:[%s1912 + $0x2c] sm:$0xf]
        %v1925 = vld [vmem:[%s1912 + $0x30] sm:$0xf]
        %v1926 = vld [vmem:[%s1912 + $0x34] sm:$0xf]
        %v1927 = vld [vmem:[%s1912 + $0x38] sm:$0xf]
        %v1928 = vld [vmem:[%s1912 + $0x3c] sm:$0xf]
        %v1945 = vunpack.c.l.b16 %v1913
        %v1946 = vunpack.c.l.b16 %v1914
        %v1947 = vunpack.c.l.b16 %v1915
        %v1948 = vunpack.c.l.b16 %v1916
        %v1949 = vunpack.c.l.b16 %v1917
        %v1950 = vunpack.c.l.b16 %v1918
        %v1951 = vunpack.c.l.b16 %v1919
        %v1952 = vunpack.c.l.b16 %v1920
        %v1953 = vunpack.c.l.b16 %v1921
        %v1954 = vunpack.c.l.b16 %v1922
        %v1955 = vunpack.c.l.b16 %v1923
        %v1956 = vunpack.c.l.b16 %v1924
        %v1957 = vunpack.c.l.b16 %v1925
        %v1958 = vunpack.c.l.b16 %v1926
        %v1959 = vunpack.c.l.b16 %v1927
        %v1960 = vunpack.c.l.b16 %v1928
        %v1961 = vpack.c.b16 %v1946, %v1945
        %v1962 = vpack.c.b16 %v1948, %v1947
        %v1963 = vpack.c.b16 %v1950, %v1949
        %v1964 = vpack.c.b16 %v1952, %v1951
        %v1965 = vpack.c.b16 %v1954, %v1953
        %v1966 = vpack.c.b16 %v1956, %v1955
        %v1967 = vpack.c.b16 %v1958, %v1957
        %v1968 = vpack.c.b16 %v1960, %v1959
        %1977 = vmatprep.subr.bf16.mxu0 0
        %1978 = vmatpush1.bf16.msra.mxu0 %v1968
        %1979 = vmatprep.subr.bf16.mxu0 0
        %1980 = vmatpush1.bf16.msra.mxu0 %v1967
        %1981 = vmatprep.subr.bf16.mxu0 0
        %1982 = vmatpush1.bf16.msra.mxu0 %v1966
        %1983 = vmatprep.subr.bf16.mxu0 0
        %1984 = vmatpush1.bf16.msra.mxu0 %v1965
        %1985 = vmatprep.subr.bf16.mxu0 0
        %1986 = vmatpush1.bf16.msra.mxu0 %v1964
        %1987 = vmatprep.subr.bf16.mxu0 0
        %1988 = vmatpush1.bf16.msra.mxu0 %v1963
        %1989 = vmatprep.subr.bf16.mxu0 0
        %1990 = vmatpush1.bf16.msra.mxu0 %v1962
        %1991 = vmatprep.subr.bf16.mxu0 0
        %1992 = vmatpush1.bf16.msra.mxu0 %v1961
        %1993 = vmatprep.subr.bf16.mxu0 0
        %1994 = vmatpush2.bf16.msra.mxu0 0
        %1995 = vmatprep.subr.bf16.mxu0 0
        %1996 = vmatpush2.bf16.msra.mxu0 0
        %1997 = vmatprep.subr.bf16.mxu0 0
        %1998 = vmatpush2.bf16.msra.mxu0 0
        %1999 = vmatprep.subr.bf16.mxu0 0
        %2000 = vmatpush2.bf16.msra.mxu0 0
        %2001 = vmatprep.subr.bf16.mxu0 0
        %2002 = vmatpush2.bf16.msra.mxu0 0
        %2003 = vmatprep.subr.bf16.mxu0 0
        %2004 = vmatpush2.bf16.msra.mxu0 0
        %2005 = vmatprep.subr.bf16.mxu0 0
        %2006 = vmatpush2.bf16.msra.mxu0 0
        %2007 = vmatprep.subr.bf16.mxu0 0
        %2008 = vmatpush2.bf16.msra.mxu0 0
        %2009 = vmatprep.mubr.bf16.mxu0 0
        %2010 = vmatmul.mubr.bf16.gmra.mxu0 %v788
        %v2011 = vpop.f32.mrf.mxu0
        %v2012 = vadd.f32 0.0, %v2011
        %v2013 = vpop.f32.mrf.mxu0
        %v2014 = vpop.f32.mrf.mxu0
        %v2015 = vadd.f32 0.0, %v2014
        %v2016 = vpop.f32.mrf.mxu0
        %2017 = vmatprep.mubr.bf16.mxu0 0
        %2018 = vmatmul.mubr.bf16.gmra.mxu0 %v789
        %v2019 = vpop.f32.mrf.mxu0
        %v2020 = vadd.f32 0.0, %v2019
        %v2021 = vpop.f32.mrf.mxu0
        %v2022 = vpop.f32.mrf.mxu0
        %v2023 = vadd.f32 0.0, %v2022
        %v2024 = vpop.f32.mrf.mxu0
        %2025 = vmatprep.mubr.bf16.mxu0 0
        %2026 = vmatmul.mubr.bf16.gmra.mxu0 %v790
        %v2027 = vpop.f32.mrf.mxu0
        %v2028 = vadd.f32 0.0, %v2027
        %v2029 = vpop.f32.mrf.mxu0
        %v2030 = vpop.f32.mrf.mxu0
        %v2031 = vadd.f32 0.0, %v2030
        %v2032 = vpop.f32.mrf.mxu0
        %2033 = vmatprep.mubr.bf16.mxu0 0
        %2034 = vmatmul.mubr.bf16.gmra.mxu0 %v791
        %v2035 = vpop.f32.mrf.mxu0
        %v2036 = vadd.f32 0.0, %v2035
        %v2037 = vpop.f32.mrf.mxu0
        %v2038 = vpop.f32.mrf.mxu0
        %v2039 = vadd.f32 0.0, %v2038
        %v2040 = vpop.f32.mrf.mxu0
        %2041 = vdwg.mxu0
        %v2042 = vmul.f32 %v2012, %v993
        %v2043 = vmul.f32 %v2015, %v997
        %v2044 = vmul.f32 %v2020, %v1001
        %v2045 = vmul.f32 %v2023, %v1005
        %v2046 = vmul.f32 %v2028, %v1009
        %v2047 = vmul.f32 %v2031, %v1013
        %v2048 = vmul.f32 %v2036, %v1017
        %v2049 = vmul.f32 %v2039, %v1021
        %v2051 = vcombine.high %v1909, %v1909
        %v2053 = vunpack.c.l.s4 1966171168
        %v2054 = vunpack.c.0.s8 %v2053
        %v2055 = vlaneseq
        %v2056 = vshrl.u32 %v2055, 7
        %v2057 = vsub.s32 %v2054, %v2056
        %v2058 = vrot.slane %v1909, %v2057
        %v2060 = vunpack.c.l.s4 1966171168
        %v2061 = vunpack.c.0.s8 %v2060
        %v2062 = vlaneseq
        %v2063 = vshrl.u32 %v2062, 7
        %v2064 = vsub.s32 %v2061, %v2063
        %v2065 = vrot.slane %v2051, %v2064
        %v2066 = vcombine.high %v2058, %v2058
        %v2067 = vcombine.high %v2065, %v2065
        %v2069 = vunpack.c.l.s4 1966171168
        %v2070 = vunpack.c.0.s8 %v2069
        %v2071 = vlaneseq
        %v2072 = vshrl.u32 %v2071, 7
        %v2073 = vsub.s32 %v2070, %v2072
        %v2074 = vrot.slane %v2058, %v2073
        %v2076 = vunpack.c.l.s4 1966171168
        %v2077 = vunpack.c.0.s8 %v2076
        %v2078 = vlaneseq
        %v2079 = vshrl.u32 %v2078, 7
        %v2080 = vsub.s32 %v2077, %v2079
        %v2081 = vrot.slane %v2065, %v2080
        %v2083 = vunpack.c.l.s4 1966171168
        %v2084 = vunpack.c.0.s8 %v2083
        %v2085 = vlaneseq
        %v2086 = vshrl.u32 %v2085, 7
        %v2087 = vsub.s32 %v2084, %v2086
        %v2088 = vrot.slane %v2066, %v2087
        %v2090 = vunpack.c.l.s4 1966171168
        %v2091 = vunpack.c.0.s8 %v2090
        %v2092 = vlaneseq
        %v2093 = vshrl.u32 %v2092, 7
        %v2094 = vsub.s32 %v2091, %v2093
        %v2095 = vrot.slane %v2067, %v2094
        %v2096 = vcombine.high %v2074, %v2074
        %v2097 = vcombine.high %v2081, %v2081
        %v2098 = vcombine.high %v2088, %v2088
        %v2099 = vcombine.high %v2095, %v2095
        %v2100 = vlaneseq
        %v2101 = vshrl.u32 %v2100, 7
        %v2102 = vsub.s32 0, %v2101
        %v2103 = vrot.slane %v2074, %v2102
        %v2104 = vlaneseq
        %v2105 = vshrl.u32 %v2104, 7
        %v2106 = vsub.s32 0, %v2105
        %v2107 = vrot.slane %v2088, %v2106
        %v2108 = vlaneseq
        %v2109 = vshrl.u32 %v2108, 7
        %v2110 = vsub.s32 0, %v2109
        %v2111 = vrot.slane %v2096, %v2110
        %v2112 = vlaneseq
        %v2113 = vshrl.u32 %v2112, 7
        %v2114 = vsub.s32 0, %v2113
        %v2115 = vrot.slane %v2098, %v2114
        %v2116 = vlaneseq
        %v2117 = vshrl.u32 %v2116, 7
        %v2118 = vsub.s32 0, %v2117
        %v2119 = vrot.slane %v2081, %v2118
        %v2120 = vlaneseq
        %v2121 = vshrl.u32 %v2120, 7
        %v2122 = vsub.s32 0, %v2121
        %v2123 = vrot.slane %v2095, %v2122
        %v2124 = vlaneseq
        %v2125 = vshrl.u32 %v2124, 7
        %v2126 = vsub.s32 0, %v2125
        %v2127 = vrot.slane %v2097, %v2126
        %v2128 = vlaneseq
        %v2129 = vshrl.u32 %v2128, 7
        %v2130 = vsub.s32 0, %v2129
        %v2131 = vrot.slane %v2099, %v2130
        %v2140 = vadd.f32 %v2042, %v2103
        %v2141 = vadd.f32 %v2043, %v2107
        %v2142 = vadd.f32 %v2044, %v2111
        %v2143 = vadd.f32 %v2045, %v2115
        %v2144 = vadd.f32 %v2046, %v2119
        %v2145 = vadd.f32 %v2047, %v2123
        %v2146 = vadd.f32 %v2048, %v2127
        %v2147 = vadd.f32 %v2049, %v2131
        %v2148 = vmul.f32 %v2140, 0.5
        %v2149 = vmul.f32 %v2141, 0.5
        %v2150 = vmul.f32 %v2142, 0.5
        %v2151 = vmul.f32 %v2143, 0.5
        %v2152 = vmul.f32 %v2144, 0.5
        %v2153 = vmul.f32 %v2145, 0.5
        %v2154 = vmul.f32 %v2146, 0.5
        %v2155 = vmul.f32 %v2147, 0.5
        %v2156 = vmul.f32 %v2140, 0.044715
        %v2157 = vmul.f32 %v2141, 0.044715
        %v2158 = vmul.f32 %v2142, 0.044715
        %v2159 = vmul.f32 %v2143, 0.044715
        %v2160 = vmul.f32 %v2144, 0.044715
        %v2161 = vmul.f32 %v2145, 0.044715
        %v2162 = vmul.f32 %v2146, 0.044715
        %v2163 = vmul.f32 %v2147, 0.044715
        %v2164 = vmul.f32 %v2156, %v2140
        %v2165 = vmul.f32 %v2157, %v2141
        %v2166 = vmul.f32 %v2158, %v2142
        %v2167 = vmul.f32 %v2159, %v2143
        %v2168 = vmul.f32 %v2160, %v2144
        %v2169 = vmul.f32 %v2161, %v2145
        %v2170 = vmul.f32 %v2162, %v2146
        %v2171 = vmul.f32 %v2163, %v2147
        %v2172 = vmul.f32 %v2164, %v2140
        %v2173 = vmul.f32 %v2165, %v2141
        %v2174 = vmul.f32 %v2166, %v2142
        %v2175 = vmul.f32 %v2167, %v2143
        %v2176 = vmul.f32 %v2168, %v2144
        %v2177 = vmul.f32 %v2169, %v2145
        %v2178 = vmul.f32 %v2170, %v2146
        %v2179 = vmul.f32 %v2171, %v2147
        %v2180 = vadd.f32 %v2140, %v2172
        %v2181 = vadd.f32 %v2141, %v2173
        %v2182 = vadd.f32 %v2142, %v2174
        %v2183 = vadd.f32 %v2143, %v2175
        %v2184 = vadd.f32 %v2144, %v2176
        %v2185 = vadd.f32 %v2145, %v2177
        %v2186 = vadd.f32 %v2146, %v2178
        %v2187 = vadd.f32 %v2147, %v2179
        %v2188 = vmul.f32 %v2180, 0.7978846
        %v2189 = vmul.f32 %v2181, 0.7978846
        %v2190 = vmul.f32 %v2182, 0.7978846
        %v2191 = vmul.f32 %v2183, 0.7978846
        %v2192 = vmul.f32 %v2184, 0.7978846
        %v2193 = vmul.f32 %v2185, 0.7978846
        %v2194 = vmul.f32 %v2186, 0.7978846
        %v2195 = vmul.f32 %v2187, 0.7978846
        %v2196 = vtanh.pop %v2188
        %v2197 = vtanh.pop %v2189
        %v2198 = vtanh.pop %v2190
        %v2199 = vtanh.pop %v2191
        %v2200 = vtanh.pop %v2192
        %v2201 = vtanh.pop %v2193
        %v2202 = vtanh.pop %v2194
        %v2203 = vtanh.pop %v2195
        %v2204 = vadd.f32 %v2196, 1.0
        %v2205 = vadd.f32 %v2197, 1.0
        %v2206 = vadd.f32 %v2198, 1.0
        %v2207 = vadd.f32 %v2199, 1.0
        %v2208 = vadd.f32 %v2200, 1.0
        %v2209 = vadd.f32 %v2201, 1.0
        %v2210 = vadd.f32 %v2202, 1.0
        %v2211 = vadd.f32 %v2203, 1.0
        %v2212 = vmul.f32 %v2148, %v2204
        %v2213 = vmul.f32 %v2149, %v2205
        %v2214 = vmul.f32 %v2150, %v2206
        %v2215 = vmul.f32 %v2151, %v2207
        %v2216 = vmul.f32 %v2152, %v2208
        %v2217 = vmul.f32 %v2153, %v2209
        %v2218 = vmul.f32 %v2154, %v2210
        %v2219 = vmul.f32 %v2155, %v2211
        %s2220 = scalar_lea.vmem %s6, 32
        %v2221 = vld [vmem:[%s2220] sm:$0xff]
        %v2222 = vld [vmem:[%s2220 + $0x8] sm:$0xff]
        %v2223 = vld [vmem:[%s2220 + $0x10] sm:$0xff]
        %v2224 = vld [vmem:[%s2220 + $0x18] sm:$0xff]
        %s2225 = scalar_lea.vmem %s7, 1
        %v2226 = vld [vmem:[%s2225] sm:$0x1]
        %v2228 = vlaneseq
        %v2229 = vshrl.u32 %v2228, 7
        %v2230 = vsub.s32 0, %v2229
        %v2231 = vrot.slane %v2226, %v2230
        %v2234 = vsel %vm682, %v2212, 0
        %v2237 = vsel %vm682, %v2213, 0
        %v2240 = vsel %vm682, %v2214, 0
        %v2243 = vsel %vm682, %v2215, 0
        %v2246 = vsel %vm682, %v2216, 0
        %v2249 = vsel %vm682, %v2217, 0
        %v2252 = vsel %vm682, %v2218, 0
        %v2255 = vsel %vm682, %v2219, 0
        %2257 = vmatprep.subr.mxu0 0.0
        %2258 = vmatpush1.msra.mxu0 0.0
        %2259 = vmatprep.subr.mxu0 0.0
        %2260 = vmatpush1.msra.mxu0 0.0
        %2261 = vmatprep.subr.mxu0 0.0
        %2262 = vmatpush1.msra.mxu0 0.0
        %2263 = vmatprep.subr.mxu0 0.0
        %2264 = vmatpush1.msra.mxu0 0.0
        %2265 = vmatprep.subr.mxu0 0.0
        %2266 = vmatpush1.msra.mxu0 0.0
        %2267 = vmatprep.subr.mxu0 0.0
        %2268 = vmatpush1.msra.mxu0 0.0
        %2269 = vmatprep.subr.mxu0 0.0
        %2270 = vmatpush1.msra.mxu0 0.0
        %2271 = vmatprep.subr.mxu0 0.0
        %2272 = vmatpush1.msra.mxu0 0.0
        %2273 = vmatprep.subr.mxu0 0.0
        %2274 = vmatpush1.msra.mxu0 0.0
        %2275 = vmatprep.subr.mxu0 0.0
        %2276 = vmatpush1.msra.mxu0 0.0
        %2277 = vmatprep.subr.mxu0 0.0
        %2278 = vmatpush1.msra.mxu0 0.0
        %2279 = vmatprep.subr.mxu0 0.0
        %2280 = vmatpush1.msra.mxu0 0.0
        %2281 = vmatprep.subr.mxu0 0.0
        %2282 = vmatpush1.msra.mxu0 %v2224
        %2283 = vmatprep.subr.mxu0 0.0
        %2284 = vmatpush1.msra.mxu0 %v2223
        %2285 = vmatprep.subr.mxu0 0.0
        %2286 = vmatpush1.msra.mxu0 %v2222
        %2287 = vmatprep.subr.mxu0 0.0
        %2288 = vmatpush1.msra.mxu0 %v2221
        %2289 = vmatprep.subr.mxu0 0.0
        %2290 = vmatpush2.msra.mxu0 0.0
        %2291 = vmatprep.subr.mxu0 0.0
        %2292 = vmatpush2.msra.mxu0 0.0
        %2293 = vmatprep.subr.mxu0 0.0
        %2294 = vmatpush2.msra.mxu0 0.0
        %2295 = vmatprep.subr.mxu0 0.0
        %2296 = vmatpush2.msra.mxu0 0.0
        %2297 = vmatprep.subr.mxu0 0.0
        %2298 = vmatpush2.msra.mxu0 0.0
        %2299 = vmatprep.subr.mxu0 0.0
        %2300 = vmatpush2.msra.mxu0 0.0
        %2301 = vmatprep.subr.mxu0 0.0
        %2302 = vmatpush2.msra.mxu0 0.0
        %2303 = vmatprep.subr.mxu0 0.0
        %2304 = vmatpush2.msra.mxu0 0.0
        %2305 = vmatprep.subr.mxu0 0.0
        %2306 = vmatpush2.msra.mxu0 0.0
        %2307 = vmatprep.subr.mxu0 0.0
        %2308 = vmatpush2.msra.mxu0 0.0
        %2309 = vmatprep.subr.mxu0 0.0
        %2310 = vmatpush2.msra.mxu0 0.0
        %2311 = vmatprep.subr.mxu0 0.0
        %2312 = vmatpush2.msra.mxu0 0.0
        %2313 = vmatprep.subr.mxu0 0.0
        %2314 = vmatpush2.msra.mxu0 0.0
        %2315 = vmatprep.subr.mxu0 0.0
        %2316 = vmatpush2.msra.mxu0 0.0
        %2317 = vmatprep.subr.mxu0 0.0
        %2318 = vmatpush2.msra.mxu0 0.0
        %2319 = vmatprep.subr.mxu0 0.0
        %2320 = vmatpush2.msra.mxu0 0.0
        %2321 = vmatprep.mubr.f32.mxu0 0.0
        %2322 = vmatmul.mubr.f32.gmra.mxu0 %v2234
        %v2323 = vpop.f32.mrf.mxu0
        %v2324 = vadd.f32 %v2231, %v2323
        %v2325 = vpop.f32.mrf.mxu0
        %2326 = vmatprep.mubr.f32.mxu0 0.0
        %2327 = vmatmul.mubr.f32.gmra.mxu0 %v2237
        %v2328 = vpop.f32.mrf.mxu0
        %v2329 = vadd.f32 %v2231, %v2328
        %v2330 = vpop.f32.mrf.mxu0
        %2331 = vmatprep.mubr.f32.mxu0 0.0
        %2332 = vmatmul.mubr.f32.gmra.mxu0 %v2240
        %v2333 = vpop.f32.mrf.mxu0
        %v2334 = vadd.f32 %v2231, %v2333
        %v2335 = vpop.f32.mrf.mxu0
        %2336 = vmatprep.mubr.f32.mxu0 0.0
        %2337 = vmatmul.mubr.f32.gmra.mxu0 %v2243
        %v2338 = vpop.f32.mrf.mxu0
        %v2339 = vadd.f32 %v2231, %v2338
        %v2340 = vpop.f32.mrf.mxu0
        %2341 = vmatprep.mubr.f32.mxu0 0.0
        %2342 = vmatmul.mubr.f32.gmra.mxu0 %v2246
        %v2343 = vpop.f32.mrf.mxu0
        %v2344 = vadd.f32 %v2231, %v2343
        %v2345 = vpop.f32.mrf.mxu0
        %2346 = vmatprep.mubr.f32.mxu0 0.0
        %2347 = vmatmul.mubr.f32.gmra.mxu0 %v2249
        %v2348 = vpop.f32.mrf.mxu0
        %v2349 = vadd.f32 %v2231, %v2348
        %v2350 = vpop.f32.mrf.mxu0
        %2351 = vmatprep.mubr.f32.mxu0 0.0
        %2352 = vmatmul.mubr.f32.gmra.mxu0 %v2252
        %v2353 = vpop.f32.mrf.mxu0
        %v2354 = vadd.f32 %v2231, %v2353
        %v2355 = vpop.f32.mrf.mxu0
        %2356 = vmatprep.mubr.f32.mxu0 0.0
        %2357 = vmatmul.mubr.f32.gmra.mxu0 %v2255
        %v2358 = vpop.f32.mrf.mxu0
        %v2359 = vadd.f32 %v2231, %v2358
        %v2360 = vpop.f32.mrf.mxu0
        %2361 = vdwg.mxu0
        %v2362 = vmul.f32 %v2324, 0.5
        %v2363 = vmul.f32 %v2329, 0.5
        %v2364 = vmul.f32 %v2334, 0.5
        %v2365 = vmul.f32 %v2339, 0.5
        %v2366 = vmul.f32 %v2344, 0.5
        %v2367 = vmul.f32 %v2349, 0.5
        %v2368 = vmul.f32 %v2354, 0.5
        %v2369 = vmul.f32 %v2359, 0.5
        %v2370 = vmul.f32 %v2324, 0.044715
        %v2371 = vmul.f32 %v2329, 0.044715
        %v2372 = vmul.f32 %v2334, 0.044715
        %v2373 = vmul.f32 %v2339, 0.044715
        %v2374 = vmul.f32 %v2344, 0.044715
        %v2375 = vmul.f32 %v2349, 0.044715
        %v2376 = vmul.f32 %v2354, 0.044715
        %v2377 = vmul.f32 %v2359, 0.044715
        %v2378 = vmul.f32 %v2370, %v2324
        %v2379 = vmul.f32 %v2371, %v2329
        %v2380 = vmul.f32 %v2372, %v2334
        %v2381 = vmul.f32 %v2373, %v2339
        %v2382 = vmul.f32 %v2374, %v2344
        %v2383 = vmul.f32 %v2375, %v2349
        %v2384 = vmul.f32 %v2376, %v2354
        %v2385 = vmul.f32 %v2377, %v2359
        %v2386 = vmul.f32 %v2378, %v2324
        %v2387 = vmul.f32 %v2379, %v2329
        %v2388 = vmul.f32 %v2380, %v2334
        %v2389 = vmul.f32 %v2381, %v2339
        %v2390 = vmul.f32 %v2382, %v2344
        %v2391 = vmul.f32 %v2383, %v2349
        %v2392 = vmul.f32 %v2384, %v2354
        %v2393 = vmul.f32 %v2385, %v2359
        %v2394 = vadd.f32 %v2324, %v2386
        %v2395 = vadd.f32 %v2329, %v2387
        %v2396 = vadd.f32 %v2334, %v2388
        %v2397 = vadd.f32 %v2339, %v2389
        %v2398 = vadd.f32 %v2344, %v2390
        %v2399 = vadd.f32 %v2349, %v2391
        %v2400 = vadd.f32 %v2354, %v2392
        %v2401 = vadd.f32 %v2359, %v2393
        %v2402 = vmul.f32 %v2394, 0.7978846
        %v2403 = vmul.f32 %v2395, 0.7978846
        %v2404 = vmul.f32 %v2396, 0.7978846
        %v2405 = vmul.f32 %v2397, 0.7978846
        %v2406 = vmul.f32 %v2398, 0.7978846
        %v2407 = vmul.f32 %v2399, 0.7978846
        %v2408 = vmul.f32 %v2400, 0.7978846
        %v2409 = vmul.f32 %v2401, 0.7978846
        %v2410 = vtanh.pop %v2402
        %v2411 = vtanh.pop %v2403
        %v2412 = vtanh.pop %v2404
        %v2413 = vtanh.pop %v2405
        %v2414 = vtanh.pop %v2406
        %v2415 = vtanh.pop %v2407
        %v2416 = vtanh.pop %v2408
        %v2417 = vtanh.pop %v2409
        %v2418 = vadd.f32 %v2410, 1.0
        %v2419 = vadd.f32 %v2411, 1.0
        %v2420 = vadd.f32 %v2412, 1.0
        %v2421 = vadd.f32 %v2413, 1.0
        %v2422 = vadd.f32 %v2414, 1.0
        %v2423 = vadd.f32 %v2415, 1.0
        %v2424 = vadd.f32 %v2416, 1.0
        %v2425 = vadd.f32 %v2417, 1.0
        %v2426 = vmul.f32 %v2362, %v2418
        %v2427 = vmul.f32 %v2363, %v2419
        %v2428 = vmul.f32 %v2364, %v2420
        %v2429 = vmul.f32 %v2365, %v2421
        %v2430 = vmul.f32 %v2366, %v2422
        %v2431 = vmul.f32 %v2367, %v2423
        %v2432 = vmul.f32 %v2368, %v2424
        %v2433 = vmul.f32 %v2369, %v2425
        %v2434 = vsel %vm682, %v2426, 0.0
        %v2435 = vrot.slane %v2434, 4
        %v2436 = vadd.f32 %v2434, %v2435
        %v2437 = vrot.slane %v2436, 2
        %v2438 = vadd.f32 %v2436, %v2437
        %v2439 = vrot.slane %v2438, 1
        %v2440 = vadd.f32 %v2438, %v2439
        %v2441 = vsel %vm682, %v2427, 0.0
        %v2442 = vrot.slane %v2441, 4
        %v2443 = vadd.f32 %v2441, %v2442
        %v2444 = vrot.slane %v2443, 2
        %v2445 = vadd.f32 %v2443, %v2444
        %v2446 = vrot.slane %v2445, 1
        %v2447 = vadd.f32 %v2445, %v2446
        %v2448 = vsel %vm682, %v2428, 0.0
        %v2449 = vrot.slane %v2448, 4
        %v2450 = vadd.f32 %v2448, %v2449
        %v2451 = vrot.slane %v2450, 2
        %v2452 = vadd.f32 %v2450, %v2451
        %v2453 = vrot.slane %v2452, 1
        %v2454 = vadd.f32 %v2452, %v2453
        %v2455 = vsel %vm682, %v2429, 0.0
        %v2456 = vrot.slane %v2455, 4
        %v2457 = vadd.f32 %v2455, %v2456
        %v2458 = vrot.slane %v2457, 2
        %v2459 = vadd.f32 %v2457, %v2458
        %v2460 = vrot.slane %v2459, 1
        %v2461 = vadd.f32 %v2459, %v2460
        %v2462 = vsel %vm682, %v2430, 0.0
        %v2463 = vrot.slane %v2462, 4
        %v2464 = vadd.f32 %v2462, %v2463
        %v2465 = vrot.slane %v2464, 2
        %v2466 = vadd.f32 %v2464, %v2465
        %v2467 = vrot.slane %v2466, 1
        %v2468 = vadd.f32 %v2466, %v2467
        %v2469 = vsel %vm682, %v2431, 0.0
        %v2470 = vrot.slane %v2469, 4
        %v2471 = vadd.f32 %v2469, %v2470
        %v2472 = vrot.slane %v2471, 2
        %v2473 = vadd.f32 %v2471, %v2472
        %v2474 = vrot.slane %v2473, 1
        %v2475 = vadd.f32 %v2473, %v2474
        %v2476 = vsel %vm682, %v2432, 0.0
        %v2477 = vrot.slane %v2476, 4
        %v2478 = vadd.f32 %v2476, %v2477
        %v2479 = vrot.slane %v2478, 2
        %v2480 = vadd.f32 %v2478, %v2479
        %v2481 = vrot.slane %v2480, 1
        %v2482 = vadd.f32 %v2480, %v2481
        %v2483 = vsel %vm682, %v2433, 0.0
        %v2484 = vrot.slane %v2483, 4
        %v2485 = vadd.f32 %v2483, %v2484
        %v2486 = vrot.slane %v2485, 2
        %v2487 = vadd.f32 %v2485, %v2486
        %v2488 = vrot.slane %v2487, 1
        %v2489 = vadd.f32 %v2487, %v2488
        %s2490 = scalar_lea.vmem %s8, 32
        %v2491 = vld [vmem:[%s2490] sm:$0xff]
        %v2492 = vld [vmem:[%s2490 + $0x8] sm:$0xff]
        %v2493 = vld [vmem:[%s2490 + $0x10] sm:$0xff]
        %v2494 = vld [vmem:[%s2490 + $0x18] sm:$0xff]
        %s2495 = scalar_lea.vmem %s9, 1
        %v2496 = vld [vmem:[%s2495] sm:$0x1]
        %v2498 = vlaneseq
        %v2499 = vshrl.u32 %v2498, 7
        %v2500 = vsub.s32 0, %v2499
        %v2501 = vrot.slane %v2496, %v2500
        %v2511 = vsel %vm1488, %v2447, %v2440
        %v2512 = vsel %vm1490, %v2454, %v2511
        %v2513 = vsel %vm1492, %v2461, %v2512
        %v2514 = vsel %vm1494, %v2468, %v2513
        %v2515 = vsel %vm1496, %v2475, %v2514
        %v2516 = vsel %vm1498, %v2482, %v2515
        %v2517 = vsel %vm1500, %v2489, %v2516
        %v2518 = vsel %vm682, %v2517, 0
        %2520 = vmatprep.subr.mxu0 0.0
        %2521 = vmatpush1.msra.mxu0 0.0
        %2522 = vmatprep.subr.mxu0 0.0
        %2523 = vmatpush1.msra.mxu0 0.0
        %2524 = vmatprep.subr.mxu0 0.0
        %2525 = vmatpush1.msra.mxu0 0.0
        %2526 = vmatprep.subr.mxu0 0.0
        %2527 = vmatpush1.msra.mxu0 0.0
        %2528 = vmatprep.subr.mxu0 0.0
        %2529 = vmatpush1.msra.mxu0 0.0
        %2530 = vmatprep.subr.mxu0 0.0
        %2531 = vmatpush1.msra.mxu0 0.0
        %2532 = vmatprep.subr.mxu0 0.0
        %2533 = vmatpush1.msra.mxu0 0.0
        %2534 = vmatprep.subr.mxu0 0.0
        %2535 = vmatpush1.msra.mxu0 0.0
        %2536 = vmatprep.subr.mxu0 0.0
        %2537 = vmatpush1.msra.mxu0 0.0
        %2538 = vmatprep.subr.mxu0 0.0
        %2539 = vmatpush1.msra.mxu0 0.0
        %2540 = vmatprep.subr.mxu0 0.0
        %2541 = vmatpush1.msra.mxu0 0.0
        %2542 = vmatprep.subr.mxu0 0.0
        %2543 = vmatpush1.msra.mxu0 0.0
        %2544 = vmatprep.subr.mxu0 0.0
        %2545 = vmatpush1.msra.mxu0 %v2494
        %2546 = vmatprep.subr.mxu0 0.0
        %2547 = vmatpush1.msra.mxu0 %v2493
        %2548 = vmatprep.subr.mxu0 0.0
        %2549 = vmatpush1.msra.mxu0 %v2492
        %2550 = vmatprep.subr.mxu0 0.0
        %2551 = vmatpush1.msra.mxu0 %v2491
        %2552 = vmatprep.subr.mxu0 0.0
        %2553 = vmatpush2.msra.mxu0 0.0
        %2554 = vmatprep.subr.mxu0 0.0
        %2555 = vmatpush2.msra.mxu0 0.0
        %2556 = vmatprep.subr.mxu0 0.0
        %2557 = vmatpush2.msra.mxu0 0.0
        %2558 = vmatprep.subr.mxu0 0.0
        %2559 = vmatpush2.msra.mxu0 0.0
        %2560 = vmatprep.subr.mxu0 0.0
        %2561 = vmatpush2.msra.mxu0 0.0
        %2562 = vmatprep.subr.mxu0 0.0
        %2563 = vmatpush2.msra.mxu0 0.0
        %2564 = vmatprep.subr.mxu0 0.0
        %2565 = vmatpush2.msra.mxu0 0.0
        %2566 = vmatprep.subr.mxu0 0.0
        %2567 = vmatpush2.msra.mxu0 0.0
        %2568 = vmatprep.subr.mxu0 0.0
        %2569 = vmatpush2.msra.mxu0 0.0
        %2570 = vmatprep.subr.mxu0 0.0
        %2571 = vmatpush2.msra.mxu0 0.0
        %2572 = vmatprep.subr.mxu0 0.0
        %2573 = vmatpush2.msra.mxu0 0.0
        %2574 = vmatprep.subr.mxu0 0.0
        %2575 = vmatpush2.msra.mxu0 0.0
        %2576 = vmatprep.subr.mxu0 0.0
        %2577 = vmatpush2.msra.mxu0 0.0
        %2578 = vmatprep.subr.mxu0 0.0
        %2579 = vmatpush2.msra.mxu0 0.0
        %2580 = vmatprep.subr.mxu0 0.0
        %2581 = vmatpush2.msra.mxu0 0.0
        %2582 = vmatprep.subr.mxu0 0.0
        %2583 = vmatpush2.msra.mxu0 0.0
        %2584 = vmatprep.mubr.f32.mxu0 0.0
        %2585 = vmatmul.mubr.f32.gmra.mxu0 %v2518
        %v2586 = vpop.f32.mrf.mxu0
        %v2587 = vadd.f32 %v2501, %v2586
        %v2588 = vpop.f32.mrf.mxu0
        %2589 = vdwg.mxu0
        %v2590 = vadd.f32 %v1825, %v2587
        %s2591 = scalar_lea.vmem %s14, 1
        %v2592 = vld [vmem:[%s2591] sm:$0x1]
        %s2593 = scalar_lea.vmem %s15, 1
        %v2594 = vld [vmem:[%s2593] sm:$0x1]
        %v2595 = vsel %vm682, %v2590, 0.0
        %2596 = vadd.xlane.f32.xlu0 %v2595
        %v2597 = vpop.xlane.xlu0 %2596
        %v2598 = vmul.f32 %v2597, %v1580
        %v2599 = vsub.f32 %v2590, %v2598
        %v2600 = vmul.f32 %v2599, %v2599
        %v2601 = vsel %vm682, %v2600, 0.0
        %2602 = vadd.xlane.f32.xlu0 %v2601
        %v2603 = vpop.xlane.xlu0 %2602
        %v2604 = vmul.f32 %v2603, %v1580
        %v2605 = vadd.f32 %v2604, 1e-05
        %v2606 = vrsqrt.pop %v2605
        %v2607 = vmul.f32 %v2599, %v2606
        %v2609 = vlaneseq
        %v2610 = vshrl.u32 %v2609, 7
        %v2611 = vsub.s32 0, %v2610
        %v2612 = vrot.slane %v2592, %v2611
        %v2614 = vmul.f32 %v2607, %v2612
        %v2616 = vlaneseq
        %v2617 = vshrl.u32 %v2616, 7
        %v2618 = vsub.s32 0, %v2617
        %v2619 = vrot.slane %v2594, %v2618
        %v2621 = vadd.f32 %v2614, %v2619
        %s2622 = scalar_lea.vmem %s10, 32
        %v2623 = vld [vmem:[%s2622] sm:$0xff]
        %v2624 = vld [vmem:[%s2622 + $0x8] sm:$0xff]
        %v2625 = vld [vmem:[%s2622 + $0x10] sm:$0xff]
        %v2626 = vld [vmem:[%s2622 + $0x18] sm:$0xff]
        %s2627 = scalar_lea.vmem %s11, 1
        %v2628 = vld [vmem:[%s2627] sm:$0x1]
        %v2630 = vlaneseq
        %v2631 = vshrl.u32 %v2630, 7
        %v2632 = vsub.s32 0, %v2631
        %v2633 = vrot.slane %v2628, %v2632
        %v2636 = vsel %vm682, %v2621, 0
        %2638 = vmatprep.subr.mxu0 0.0
        %2639 = vmatpush1.msra.mxu0 0.0
        %2640 = vmatprep.subr.mxu0 0.0
        %2641 = vmatpush1.msra.mxu0 0.0
        %2642 = vmatprep.subr.mxu0 0.0
        %2643 = vmatpush1.msra.mxu0 0.0
        %2644 = vmatprep.subr.mxu0 0.0
        %2645 = vmatpush1.msra.mxu0 0.0
        %2646 = vmatprep.subr.mxu0 0.0
        %2647 = vmatpush1.msra.mxu0 0.0
        %2648 = vmatprep.subr.mxu0 0.0
        %2649 = vmatpush1.msra.mxu0 0.0
        %2650 = vmatprep.subr.mxu0 0.0
        %2651 = vmatpush1.msra.mxu0 0.0
        %2652 = vmatprep.subr.mxu0 0.0
        %2653 = vmatpush1.msra.mxu0 0.0
        %2654 = vmatprep.subr.mxu0 0.0
        %2655 = vmatpush1.msra.mxu0 0.0
        %2656 = vmatprep.subr.mxu0 0.0
        %2657 = vmatpush1.msra.mxu0 0.0
        %2658 = vmatprep.subr.mxu0 0.0
        %2659 = vmatpush1.msra.mxu0 0.0
        %2660 = vmatprep.subr.mxu0 0.0
        %2661 = vmatpush1.msra.mxu0 0.0
        %2662 = vmatprep.subr.mxu0 0.0
        %2663 = vmatpush1.msra.mxu0 %v2626
        %2664 = vmatprep.subr.mxu0 0.0
        %2665 = vmatpush1.msra.mxu0 %v2625
        %2666 = vmatprep.subr.mxu0 0.0
        %2667 = vmatpush1.msra.mxu0 %v2624
        %2668 = vmatprep.subr.mxu0 0.0
        %2669 = vmatpush1.msra.mxu0 %v2623
        %2670 = vmatprep.subr.mxu0 0.0
        %2671 = vmatpush2.msra.mxu0 0.0
        %2672 = vmatprep.subr.mxu0 0.0
        %2673 = vmatpush2.msra.mxu0 0.0
        %2674 = vmatprep.subr.mxu0 0.0
        %2675 = vmatpush2.msra.mxu0 0.0
        %2676 = vmatprep.subr.mxu0 0.0
        %2677 = vmatpush2.msra.mxu0 0.0
        %2678 = vmatprep.subr.mxu0 0.0
        %2679 = vmatpush2.msra.mxu0 0.0
        %2680 = vmatprep.subr.mxu0 0.0
        %2681 = vmatpush2.msra.mxu0 0.0
        %2682 = vmatprep.subr.mxu0 0.0
        %2683 = vmatpush2.msra.mxu0 0.0
        %2684 = vmatprep.subr.mxu0 0.0
        %2685 = vmatpush2.msra.mxu0 0.0
        %2686 = vmatprep.subr.mxu0 0.0
        %2687 = vmatpush2.msra.mxu0 0.0
        %2688 = vmatprep.subr.mxu0 0.0
        %2689 = vmatpush2.msra.mxu0 0.0
        %2690 = vmatprep.subr.mxu0 0.0
        %2691 = vmatpush2.msra.mxu0 0.0
        %2692 = vmatprep.subr.mxu0 0.0
        %2693 = vmatpush2.msra.mxu0 0.0
        %2694 = vmatprep.subr.mxu0 0.0
        %2695 = vmatpush2.msra.mxu0 0.0
        %2696 = vmatprep.subr.mxu0 0.0
        %2697 = vmatpush2.msra.mxu0 0.0
        %2698 = vmatprep.subr.mxu0 0.0
        %2699 = vmatpush2.msra.mxu0 0.0
        %2700 = vmatprep.subr.mxu0 0.0
        %2701 = vmatpush2.msra.mxu0 0.0
        %2702 = vmatprep.mubr.f32.mxu0 0.0
        %2703 = vmatmul.mubr.f32.gmra.mxu0 %v2636
        %v2704 = vpop.f32.mrf.mxu0
        %v2705 = vadd.f32 %v2633, %v2704
        %v2706 = vpop.f32.mrf.mxu0
        %2707 = vdwg.mxu0
        %v2708 = vmul.f32 %v2705, 0.5
        %v2709 = vmul.f32 %v2705, 0.044715
        %v2710 = vmul.f32 %v2709, %v2705
        %v2711 = vmul.f32 %v2710, %v2705
        %v2712 = vadd.f32 %v2705, %v2711
        %v2713 = vmul.f32 %v2712, 0.7978846
        %v2714 = vtanh.pop %v2713
        %v2715 = vadd.f32 %v2714, 1.0
        %v2716 = vmul.f32 %v2708, %v2715
        %s2717 = scalar_lea.vmem %s12, 128
        %v2718 = vld [vmem:[%s2717] sm:$0xff]
        %v2719 = vld [vmem:[%s2717 + $0x8] sm:$0xff]
        %v2720 = vld [vmem:[%s2717 + $0x10] sm:$0xff]
        %v2721 = vld [vmem:[%s2717 + $0x18] sm:$0xff]
        %v2722 = vld [vmem:[%s2717 + $0x20] sm:$0xff]
        %v2723 = vld [vmem:[%s2717 + $0x28] sm:$0xff]
        %v2724 = vld [vmem:[%s2717 + $0x30] sm:$0xff]
        %v2725 = vld [vmem:[%s2717 + $0x38] sm:$0xff]
        %v2726 = vld [vmem:[%s2717 + $0x40] sm:$0xff]
        %v2727 = vld [vmem:[%s2717 + $0x48] sm:$0xff]
        %v2728 = vld [vmem:[%s2717 + $0x50] sm:$0xff]
        %v2729 = vld [vmem:[%s2717 + $0x58] sm:$0xff]
        %v2730 = vld [vmem:[%s2717 + $0x60] sm:$0xff]
        %v2731 = vld [vmem:[%s2717 + $0x68] sm:$0xff]
        %v2732 = vld [vmem:[%s2717 + $0x70] sm:$0xff]
        %v2733 = vld [vmem:[%s2717 + $0x78] sm:$0xff]
        %s2734 = scalar_lea.vmem %s13, 1
        %v2735 = vld [vmem:[%s2734] sm:$0x1]
        %v2737 = vlaneseq
        %v2738 = vshrl.u32 %v2737, 7
        %v2739 = vsub.s32 0, %v2738
        %v2740 = vrot.slane %v2735, %v2739
        %2742 = vmatprep.subr.mxu0 0.0
        %2743 = vmatpush1.msra.mxu0 %v2733
        %2744 = vmatprep.subr.mxu0 0.0
        %2745 = vmatpush1.msra.mxu0 %v2732
        %2746 = vmatprep.subr.mxu0 0.0
        %2747 = vmatpush1.msra.mxu0 %v2731
        %2748 = vmatprep.subr.mxu0 0.0
        %2749 = vmatpush1.msra.mxu0 %v2730
        %2750 = vmatprep.subr.mxu0 0.0
        %2751 = vmatpush1.msra.mxu0 %v2729
        %2752 = vmatprep.subr.mxu0 0.0
        %2753 = vmatpush1.msra.mxu0 %v2728
        %2754 = vmatprep.subr.mxu0 0.0
        %2755 = vmatpush1.msra.mxu0 %v2727
        %2756 = vmatprep.subr.mxu0 0.0
        %2757 = vmatpush1.msra.mxu0 %v2726
        %2758 = vmatprep.subr.mxu0 0.0
        %2759 = vmatpush1.msra.mxu0 %v2725
        %2760 = vmatprep.subr.mxu0 0.0
        %2761 = vmatpush1.msra.mxu0 %v2724
        %2762 = vmatprep.subr.mxu0 0.0
        %2763 = vmatpush1.msra.mxu0 %v2723
        %2764 = vmatprep.subr.mxu0 0.0
        %2765 = vmatpush1.msra.mxu0 %v2722
        %2766 = vmatprep.subr.mxu0 0.0
        %2767 = vmatpush1.msra.mxu0 %v2721
        %2768 = vmatprep.subr.mxu0 0.0
        %2769 = vmatpush1.msra.mxu0 %v2720
        %2770 = vmatprep.subr.mxu0 0.0
        %2771 = vmatpush1.msra.mxu0 %v2719
        %2772 = vmatprep.subr.mxu0 0.0
        %2773 = vmatpush1.msra.mxu0 %v2718
        %2774 = vmatprep.subr.mxu0 0.0
        %2775 = vmatpush2.msra.mxu0 0.0
        %2776 = vmatprep.subr.mxu0 0.0
        %2777 = vmatpush2.msra.mxu0 0.0
        %2778 = vmatprep.subr.mxu0 0.0
        %2779 = vmatpush2.msra.mxu0 0.0
        %2780 = vmatprep.subr.mxu0 0.0
        %2781 = vmatpush2.msra.mxu0 0.0
        %2782 = vmatprep.subr.mxu0 0.0
        %2783 = vmatpush2.msra.mxu0 0.0
        %2784 = vmatprep.subr.mxu0 0.0
        %2785 = vmatpush2.msra.mxu0 0.0
        %2786 = vmatprep.subr.mxu0 0.0
        %2787 = vmatpush2.msra.mxu0 0.0
        %2788 = vmatprep.subr.mxu0 0.0
        %2789 = vmatpush2.msra.mxu0 0.0
        %2790 = vmatprep.subr.mxu0 0.0
        %2791 = vmatpush2.msra.mxu0 0.0
        %2792 = vmatprep.subr.mxu0 0.0
        %2793 = vmatpush2.msra.mxu0 0.0
        %2794 = vmatprep.subr.mxu0 0.0
        %2795 = vmatpush2.msra.mxu0 0.0
        %2796 = vmatprep.subr.mxu0 0.0
        %2797 = vmatpush2.msra.mxu0 0.0
        %2798 = vmatprep.subr.mxu0 0.0
        %2799 = vmatpush2.msra.mxu0 0.0
        %2800 = vmatprep.subr.mxu0 0.0
        %2801 = vmatpush2.msra.mxu0 0.0
        %2802 = vmatprep.subr.mxu0 0.0
        %2803 = vmatpush2.msra.mxu0 0.0
        %2804 = vmatprep.subr.mxu0 0.0
        %2805 = vmatpush2.msra.mxu0 0.0
        %2806 = vmatprep.mubr.f32.mxu0 0.0
        %2807 = vmatmul.mubr.f32.gmra.mxu0 %v2716
        %v2808 = vpop.f32.mrf.mxu0
        %v2809 = vadd.f32 %v2740, %v2808
        %v2810 = vpop.f32.mrf.mxu0
        %2811 = vdwg.mxu0
        %v2812 = vadd.f32 %v2621, %v2809
        %s2813 = scalar_lea.vmem %s16, 1
        %v2814 = vld [vmem:[%s2813] sm:$0x1]
        %s2815 = scalar_lea.vmem %s17, 1
        %v2816 = vld [vmem:[%s2815] sm:$0x1]
        %v2817 = vsel %vm682, %v2812, 0.0
        %2818 = vadd.xlane.f32.xlu0 %v2817
        %v2819 = vpop.xlane.xlu0 %2818
        %v2820 = vmul.f32 %v2819, %v1580
        %v2821 = vsub.f32 %v2812, %v2820
        %v2822 = vmul.f32 %v2821, %v2821
        %v2823 = vsel %vm682, %v2822, 0.0
        %2824 = vadd.xlane.f32.xlu0 %v2823
        %v2825 = vpop.xlane.xlu0 %2824
        %v2826 = vmul.f32 %v2825, %v1580
        %v2827 = vadd.f32 %v2826, 1e-05
        %v2828 = vrsqrt.pop %v2827
        %v2829 = vmul.f32 %v2821, %v2828
        %v2831 = vlaneseq
        %v2832 = vshrl.u32 %v2831, 7
        %v2833 = vsub.s32 0, %v2832
        %v2834 = vrot.slane %v2814, %v2833
        %v2836 = vmul.f32 %v2829, %v2834
        %v2838 = vlaneseq
        %v2839 = vshrl.u32 %v2838, 7
        %v2840 = vsub.s32 0, %v2839
        %v2841 = vrot.slane %v2816, %v2840
        %v2843 = vadd.f32 %v2836, %v2841
        %v2844 = vmul.f32 %v1823, %v2843
        %s2845 = scalar_lea.vmem %s3, 64
        %v2846 = vld [vmem:[%s2845] sm:$0xff]
        %v2847 = vld [vmem:[%s2845 + $0x8] sm:$0xff]
        %v2848 = vld [vmem:[%s2845 + $0x10] sm:$0xff]
        %v2849 = vld [vmem:[%s2845 + $0x18] sm:$0xff]
        %s2850 = scalar_lea.vmem %s5, 2
        %v2851 = vld [vmem:[%s2850] sm:$0x1]
        %v2853 = vlaneseq
        %v2854 = vshrl.u32 %v2853, 7
        %v2855 = vsub.s32 0, %v2854
        %v2856 = vrot.slane %v2851, %v2855
        %v2859 = vsel %vm682, %v2844, 0
        %2861 = vmatprep.subr.mxu0 0.0
        %2862 = vmatpush1.msra.mxu0 0.0
        %2863 = vmatprep.subr.mxu0 0.0
        %2864 = vmatpush1.msra.mxu0 0.0
        %2865 = vmatprep.subr.mxu0 0.0
        %2866 = vmatpush1.msra.mxu0 0.0
        %2867 = vmatprep.subr.mxu0 0.0
        %2868 = vmatpush1.msra.mxu0 0.0
        %2869 = vmatprep.subr.mxu0 0.0
        %2870 = vmatpush1.msra.mxu0 0.0
        %2871 = vmatprep.subr.mxu0 0.0
        %2872 = vmatpush1.msra.mxu0 0.0
        %2873 = vmatprep.subr.mxu0 0.0
        %2874 = vmatpush1.msra.mxu0 0.0
        %2875 = vmatprep.subr.mxu0 0.0
        %2876 = vmatpush1.msra.mxu0 0.0
        %2877 = vmatprep.subr.mxu0 0.0
        %2878 = vmatpush1.msra.mxu0 0.0
        %2879 = vmatprep.subr.mxu0 0.0
        %2880 = vmatpush1.msra.mxu0 0.0
        %2881 = vmatprep.subr.mxu0 0.0
        %2882 = vmatpush1.msra.mxu0 0.0
        %2883 = vmatprep.subr.mxu0 0.0
        %2884 = vmatpush1.msra.mxu0 0.0
        %2885 = vmatprep.subr.mxu0 0.0
        %2886 = vmatpush1.msra.mxu0 %v2849
        %2887 = vmatprep.subr.mxu0 0.0
        %2888 = vmatpush1.msra.mxu0 %v2848
        %2889 = vmatprep.subr.mxu0 0.0
        %2890 = vmatpush1.msra.mxu0 %v2847
        %2891 = vmatprep.subr.mxu0 0.0
        %2892 = vmatpush1.msra.mxu0 %v2846
        %2893 = vmatprep.subr.mxu0 0.0
        %2894 = vmatpush2.msra.mxu0 0.0
        %2895 = vmatprep.subr.mxu0 0.0
        %2896 = vmatpush2.msra.mxu0 0.0
        %2897 = vmatprep.subr.mxu0 0.0
        %2898 = vmatpush2.msra.mxu0 0.0
        %2899 = vmatprep.subr.mxu0 0.0
        %2900 = vmatpush2.msra.mxu0 0.0
        %2901 = vmatprep.subr.mxu0 0.0
        %2902 = vmatpush2.msra.mxu0 0.0
        %2903 = vmatprep.subr.mxu0 0.0
        %2904 = vmatpush2.msra.mxu0 0.0
        %2905 = vmatprep.subr.mxu0 0.0
        %2906 = vmatpush2.msra.mxu0 0.0
        %2907 = vmatprep.subr.mxu0 0.0
        %2908 = vmatpush2.msra.mxu0 0.0
        %2909 = vmatprep.subr.mxu0 0.0
        %2910 = vmatpush2.msra.mxu0 0.0
        %2911 = vmatprep.subr.mxu0 0.0
        %2912 = vmatpush2.msra.mxu0 0.0
        %2913 = vmatprep.subr.mxu0 0.0
        %2914 = vmatpush2.msra.mxu0 0.0
        %2915 = vmatprep.subr.mxu0 0.0
        %2916 = vmatpush2.msra.mxu0 0.0
        %2917 = vmatprep.subr.mxu0 0.0
        %2918 = vmatpush2.msra.mxu0 0.0
        %2919 = vmatprep.subr.mxu0 0.0
        %2920 = vmatpush2.msra.mxu0 0.0
        %2921 = vmatprep.subr.mxu0 0.0
        %2922 = vmatpush2.msra.mxu0 0.0
        %2923 = vmatprep.subr.mxu0 0.0
        %2924 = vmatpush2.msra.mxu0 0.0
        %2925 = vmatprep.mubr.f32.mxu0 0.0
        %2926 = vmatmul.mubr.f32.gmra.mxu0 %v2859
        %v2927 = vpop.f32.mrf.mxu0
        %v2928 = vadd.f32 %v2856, %v2927
        %v2929 = vpop.f32.mrf.mxu0
        %2930 = vdwg.mxu0
        %s2931 = scalar_lea.vmem %s4, 128
        %v2932 = vld [vmem:[%s2931] sm:$0xf]
        %v2933 = vld [vmem:[%s2931 + $0x4] sm:$0xf]
        %v2934 = vld [vmem:[%s2931 + $0x8] sm:$0xf]
        %v2935 = vld [vmem:[%s2931 + $0xc] sm:$0xf]
        %v2936 = vld [vmem:[%s2931 + $0x10] sm:$0xf]
        %v2937 = vld [vmem:[%s2931 + $0x14] sm:$0xf]
        %v2938 = vld [vmem:[%s2931 + $0x18] sm:$0xf]
        %v2939 = vld [vmem:[%s2931 + $0x1c] sm:$0xf]
        %v2940 = vld [vmem:[%s2931 + $0x20] sm:$0xf]
        %v2941 = vld [vmem:[%s2931 + $0x24] sm:$0xf]
        %v2942 = vld [vmem:[%s2931 + $0x28] sm:$0xf]
        %v2943 = vld [vmem:[%s2931 + $0x2c] sm:$0xf]
        %v2944 = vld [vmem:[%s2931 + $0x30] sm:$0xf]
        %v2945 = vld [vmem:[%s2931 + $0x34] sm:$0xf]
        %v2946 = vld [vmem:[%s2931 + $0x38] sm:$0xf]
        %v2947 = vld [vmem:[%s2931 + $0x3c] sm:$0xf]
        %v2964 = vunpack.c.l.b16 %v2932
        %v2965 = vunpack.c.l.b16 %v2933
        %v2966 = vunpack.c.l.b16 %v2934
        %v2967 = vunpack.c.l.b16 %v2935
        %v2968 = vunpack.c.l.b16 %v2936
        %v2969 = vunpack.c.l.b16 %v2937
        %v2970 = vunpack.c.l.b16 %v2938
        %v2971 = vunpack.c.l.b16 %v2939
        %v2972 = vunpack.c.l.b16 %v2940
        %v2973 = vunpack.c.l.b16 %v2941
        %v2974 = vunpack.c.l.b16 %v2942
        %v2975 = vunpack.c.l.b16 %v2943
        %v2976 = vunpack.c.l.b16 %v2944
        %v2977 = vunpack.c.l.b16 %v2945
        %v2978 = vunpack.c.l.b16 %v2946
        %v2979 = vunpack.c.l.b16 %v2947
        %v2980 = vpack.c.b16 %v2965, %v2964
        %v2981 = vpack.c.b16 %v2967, %v2966
        %v2982 = vpack.c.b16 %v2969, %v2968
        %v2983 = vpack.c.b16 %v2971, %v2970
        %v2984 = vpack.c.b16 %v2973, %v2972
        %v2985 = vpack.c.b16 %v2975, %v2974
        %v2986 = vpack.c.b16 %v2977, %v2976
        %v2987 = vpack.c.b16 %v2979, %v2978
        %2996 = vmatprep.subr.bf16.mxu0 0
        %2997 = vmatpush1.bf16.msra.mxu0 %v2987
        %2998 = vmatprep.subr.bf16.mxu0 0
        %2999 = vmatpush1.bf16.msra.mxu0 %v2986
        %3000 = vmatprep.subr.bf16.mxu0 0
        %3001 = vmatpush1.bf16.msra.mxu0 %v2985
        %3002 = vmatprep.subr.bf16.mxu0 0
        %3003 = vmatpush1.bf16.msra.mxu0 %v2984
        %3004 = vmatprep.subr.bf16.mxu0 0
        %3005 = vmatpush1.bf16.msra.mxu0 %v2983
        %3006 = vmatprep.subr.bf16.mxu0 0
        %3007 = vmatpush1.bf16.msra.mxu0 %v2982
        %3008 = vmatprep.subr.bf16.mxu0 0
        %3009 = vmatpush1.bf16.msra.mxu0 %v2981
        %3010 = vmatprep.subr.bf16.mxu0 0
        %3011 = vmatpush1.bf16.msra.mxu0 %v2980
        %3012 = vmatprep.subr.bf16.mxu0 0
        %3013 = vmatpush2.bf16.msra.mxu0 0
        %3014 = vmatprep.subr.bf16.mxu0 0
        %3015 = vmatpush2.bf16.msra.mxu0 0
        %3016 = vmatprep.subr.bf16.mxu0 0
        %3017 = vmatpush2.bf16.msra.mxu0 0
        %3018 = vmatprep.subr.bf16.mxu0 0
        %3019 = vmatpush2.bf16.msra.mxu0 0
        %3020 = vmatprep.subr.bf16.mxu0 0
        %3021 = vmatpush2.bf16.msra.mxu0 0
        %3022 = vmatprep.subr.bf16.mxu0 0
        %3023 = vmatpush2.bf16.msra.mxu0 0
        %3024 = vmatprep.subr.bf16.mxu0 0
        %3025 = vmatpush2.bf16.msra.mxu0 0
        %3026 = vmatprep.subr.bf16.mxu0 0
        %3027 = vmatpush2.bf16.msra.mxu0 0
        %3028 = vmatprep.mubr.bf16.mxu0 0
        %3029 = vmatmul.mubr.bf16.gmra.mxu0 %v788
        %v3030 = vpop.f32.mrf.mxu0
        %v3031 = vadd.f32 0.0, %v3030
        %v3032 = vpop.f32.mrf.mxu0
        %v3033 = vpop.f32.mrf.mxu0
        %v3034 = vadd.f32 0.0, %v3033
        %v3035 = vpop.f32.mrf.mxu0
        %3036 = vmatprep.mubr.bf16.mxu0 0
        %3037 = vmatmul.mubr.bf16.gmra.mxu0 %v789
        %v3038 = vpop.f32.mrf.mxu0
        %v3039 = vadd.f32 0.0, %v3038
        %v3040 = vpop.f32.mrf.mxu0
        %v3041 = vpop.f32.mrf.mxu0
        %v3042 = vadd.f32 0.0, %v3041
        %v3043 = vpop.f32.mrf.mxu0
        %3044 = vmatprep.mubr.bf16.mxu0 0
        %3045 = vmatmul.mubr.bf16.gmra.mxu0 %v790
        %v3046 = vpop.f32.mrf.mxu0
        %v3047 = vadd.f32 0.0, %v3046
        %v3048 = vpop.f32.mrf.mxu0
        %v3049 = vpop.f32.mrf.mxu0
        %v3050 = vadd.f32 0.0, %v3049
        %v3051 = vpop.f32.mrf.mxu0
        %3052 = vmatprep.mubr.bf16.mxu0 0
        %3053 = vmatmul.mubr.bf16.gmra.mxu0 %v791
        %v3054 = vpop.f32.mrf.mxu0
        %v3055 = vadd.f32 0.0, %v3054
        %v3056 = vpop.f32.mrf.mxu0
        %v3057 = vpop.f32.mrf.mxu0
        %v3058 = vadd.f32 0.0, %v3057
        %v3059 = vpop.f32.mrf.mxu0
        %3060 = vdwg.mxu0
        %v3061 = vmul.f32 %v3031, %v993
        %v3062 = vmul.f32 %v3034, %v997
        %v3063 = vmul.f32 %v3039, %v1001
        %v3064 = vmul.f32 %v3042, %v1005
        %v3065 = vmul.f32 %v3047, %v1009
        %v3066 = vmul.f32 %v3050, %v1013
        %v3067 = vmul.f32 %v3055, %v1017
        %v3068 = vmul.f32 %v3058, %v1021
        %v3070 = vcombine.high %v2928, %v2928
        %v3072 = vunpack.c.l.s4 1966171168
        %v3073 = vunpack.c.0.s8 %v3072
        %v3074 = vlaneseq
        %v3075 = vshrl.u32 %v3074, 7
        %v3076 = vsub.s32 %v3073, %v3075
        %v3077 = vrot.slane %v2928, %v3076
        %v3079 = vunpack.c.l.s4 1966171168
        %v3080 = vunpack.c.0.s8 %v3079
        %v3081 = vlaneseq
        %v3082 = vshrl.u32 %v3081, 7
        %v3083 = vsub.s32 %v3080, %v3082
        %v3084 = vrot.slane %v3070, %v3083
        %v3085 = vcombine.high %v3077, %v3077
        %v3086 = vcombine.high %v3084, %v3084
        %v3088 = vunpack.c.l.s4 1966171168
        %v3089 = vunpack.c.0.s8 %v3088
        %v3090 = vlaneseq
        %v3091 = vshrl.u32 %v3090, 7
        %v3092 = vsub.s32 %v3089, %v3091
        %v3093 = vrot.slane %v3077, %v3092
        %v3095 = vunpack.c.l.s4 1966171168
        %v3096 = vunpack.c.0.s8 %v3095
        %v3097 = vlaneseq
        %v3098 = vshrl.u32 %v3097, 7
        %v3099 = vsub.s32 %v3096, %v3098
        %v3100 = vrot.slane %v3084, %v3099
        %v3102 = vunpack.c.l.s4 1966171168
        %v3103 = vunpack.c.0.s8 %v3102
        %v3104 = vlaneseq
        %v3105 = vshrl.u32 %v3104, 7
        %v3106 = vsub.s32 %v3103, %v3105
        %v3107 = vrot.slane %v3085, %v3106
        %v3109 = vunpack.c.l.s4 1966171168
        %v3110 = vunpack.c.0.s8 %v3109
        %v3111 = vlaneseq
        %v3112 = vshrl.u32 %v3111, 7
        %v3113 = vsub.s32 %v3110, %v3112
        %v3114 = vrot.slane %v3086, %v3113
        %v3115 = vcombine.high %v3093, %v3093
        %v3116 = vcombine.high %v3100, %v3100
        %v3117 = vcombine.high %v3107, %v3107
        %v3118 = vcombine.high %v3114, %v3114
        %v3119 = vlaneseq
        %v3120 = vshrl.u32 %v3119, 7
        %v3121 = vsub.s32 0, %v3120
        %v3122 = vrot.slane %v3093, %v3121
        %v3123 = vlaneseq
        %v3124 = vshrl.u32 %v3123, 7
        %v3125 = vsub.s32 0, %v3124
        %v3126 = vrot.slane %v3107, %v3125
        %v3127 = vlaneseq
        %v3128 = vshrl.u32 %v3127, 7
        %v3129 = vsub.s32 0, %v3128
        %v3130 = vrot.slane %v3115, %v3129
        %v3131 = vlaneseq
        %v3132 = vshrl.u32 %v3131, 7
        %v3133 = vsub.s32 0, %v3132
        %v3134 = vrot.slane %v3117, %v3133
        %v3135 = vlaneseq
        %v3136 = vshrl.u32 %v3135, 7
        %v3137 = vsub.s32 0, %v3136
        %v3138 = vrot.slane %v3100, %v3137
        %v3139 = vlaneseq
        %v3140 = vshrl.u32 %v3139, 7
        %v3141 = vsub.s32 0, %v3140
        %v3142 = vrot.slane %v3114, %v3141
        %v3143 = vlaneseq
        %v3144 = vshrl.u32 %v3143, 7
        %v3145 = vsub.s32 0, %v3144
        %v3146 = vrot.slane %v3116, %v3145
        %v3147 = vlaneseq
        %v3148 = vshrl.u32 %v3147, 7
        %v3149 = vsub.s32 0, %v3148
        %v3150 = vrot.slane %v3118, %v3149
        %v3159 = vadd.f32 %v3061, %v3122
        %v3160 = vadd.f32 %v3062, %v3126
        %v3161 = vadd.f32 %v3063, %v3130
        %v3162 = vadd.f32 %v3064, %v3134
        %v3163 = vadd.f32 %v3065, %v3138
        %v3164 = vadd.f32 %v3066, %v3142
        %v3165 = vadd.f32 %v3067, %v3146
        %v3166 = vadd.f32 %v3068, %v3150
        %v3167 = vmul.f32 %v3159, 0.5
        %v3168 = vmul.f32 %v3160, 0.5
        %v3169 = vmul.f32 %v3161, 0.5
        %v3170 = vmul.f32 %v3162, 0.5
        %v3171 = vmul.f32 %v3163, 0.5
        %v3172 = vmul.f32 %v3164, 0.5
        %v3173 = vmul.f32 %v3165, 0.5
        %v3174 = vmul.f32 %v3166, 0.5
        %v3175 = vmul.f32 %v3159, 0.044715
        %v3176 = vmul.f32 %v3160, 0.044715
        %v3177 = vmul.f32 %v3161, 0.044715
        %v3178 = vmul.f32 %v3162, 0.044715
        %v3179 = vmul.f32 %v3163, 0.044715
        %v3180 = vmul.f32 %v3164, 0.044715
        %v3181 = vmul.f32 %v3165, 0.044715
        %v3182 = vmul.f32 %v3166, 0.044715
        %v3183 = vmul.f32 %v3175, %v3159
        %v3184 = vmul.f32 %v3176, %v3160
        %v3185 = vmul.f32 %v3177, %v3161
        %v3186 = vmul.f32 %v3178, %v3162
        %v3187 = vmul.f32 %v3179, %v3163
        %v3188 = vmul.f32 %v3180, %v3164
        %v3189 = vmul.f32 %v3181, %v3165
        %v3190 = vmul.f32 %v3182, %v3166
        %v3191 = vmul.f32 %v3183, %v3159
        %v3192 = vmul.f32 %v3184, %v3160
        %v3193 = vmul.f32 %v3185, %v3161
        %v3194 = vmul.f32 %v3186, %v3162
        %v3195 = vmul.f32 %v3187, %v3163
        %v3196 = vmul.f32 %v3188, %v3164
        %v3197 = vmul.f32 %v3189, %v3165
        %v3198 = vmul.f32 %v3190, %v3166
        %v3199 = vadd.f32 %v3159, %v3191
        %v3200 = vadd.f32 %v3160, %v3192
        %v3201 = vadd.f32 %v3161, %v3193
        %v3202 = vadd.f32 %v3162, %v3194
        %v3203 = vadd.f32 %v3163, %v3195
        %v3204 = vadd.f32 %v3164, %v3196
        %v3205 = vadd.f32 %v3165, %v3197
        %v3206 = vadd.f32 %v3166, %v3198
        %v3207 = vmul.f32 %v3199, 0.7978846
        %v3208 = vmul.f32 %v3200, 0.7978846
        %v3209 = vmul.f32 %v3201, 0.7978846
        %v3210 = vmul.f32 %v3202, 0.7978846
        %v3211 = vmul.f32 %v3203, 0.7978846
        %v3212 = vmul.f32 %v3204, 0.7978846
        %v3213 = vmul.f32 %v3205, 0.7978846
        %v3214 = vmul.f32 %v3206, 0.7978846
        %v3215 = vtanh.pop %v3207
        %v3216 = vtanh.pop %v3208
        %v3217 = vtanh.pop %v3209
        %v3218 = vtanh.pop %v3210
        %v3219 = vtanh.pop %v3211
        %v3220 = vtanh.pop %v3212
        %v3221 = vtanh.pop %v3213
        %v3222 = vtanh.pop %v3214
        %v3223 = vadd.f32 %v3215, 1.0
        %v3224 = vadd.f32 %v3216, 1.0
        %v3225 = vadd.f32 %v3217, 1.0
        %v3226 = vadd.f32 %v3218, 1.0
        %v3227 = vadd.f32 %v3219, 1.0
        %v3228 = vadd.f32 %v3220, 1.0
        %v3229 = vadd.f32 %v3221, 1.0
        %v3230 = vadd.f32 %v3222, 1.0
        %v3231 = vmul.f32 %v3167, %v3223
        %v3232 = vmul.f32 %v3168, %v3224
        %v3233 = vmul.f32 %v3169, %v3225
        %v3234 = vmul.f32 %v3170, %v3226
        %v3235 = vmul.f32 %v3171, %v3227
        %v3236 = vmul.f32 %v3172, %v3228
        %v3237 = vmul.f32 %v3173, %v3229
        %v3238 = vmul.f32 %v3174, %v3230
        %s3239 = scalar_lea.vmem %s6, 64
        %v3240 = vld [vmem:[%s3239] sm:$0xff]
        %v3241 = vld [vmem:[%s3239 + $0x8] sm:$0xff]
        %v3242 = vld [vmem:[%s3239 + $0x10] sm:$0xff]
        %v3243 = vld [vmem:[%s3239 + $0x18] sm:$0xff]
        %s3244 = scalar_lea.vmem %s7, 2
        %v3245 = vld [vmem:[%s3244] sm:$0x1]
        %v3247 = vlaneseq
        %v3248 = vshrl.u32 %v3247, 7
        %v3249 = vsub.s32 0, %v3248
        %v3250 = vrot.slane %v3245, %v3249
        %v3253 = vsel %vm682, %v3231, 0
        %v3256 = vsel %vm682, %v3232, 0
        %v3259 = vsel %vm682, %v3233, 0
        %v3262 = vsel %vm682, %v3234, 0
        %v3265 = vsel %vm682, %v3235, 0
        %v3268 = vsel %vm682, %v3236, 0
        %v3271 = vsel %vm682, %v3237, 0
        %v3274 = vsel %vm682, %v3238, 0
        %3276 = vmatprep.subr.mxu0 0.0
        %3277 = vmatpush1.msra.mxu0 0.0
        %3278 = vmatprep.subr.mxu0 0.0
        %3279 = vmatpush1.msra.mxu0 0.0
        %3280 = vmatprep.subr.mxu0 0.0
        %3281 = vmatpush1.msra.mxu0 0.0
        %3282 = vmatprep.subr.mxu0 0.0
        %3283 = vmatpush1.msra.mxu0 0.0
        %3284 = vmatprep.subr.mxu0 0.0
        %3285 = vmatpush1.msra.mxu0 0.0
        %3286 = vmatprep.subr.mxu0 0.0
        %3287 = vmatpush1.msra.mxu0 0.0
        %3288 = vmatprep.subr.mxu0 0.0
        %3289 = vmatpush1.msra.mxu0 0.0
        %3290 = vmatprep.subr.mxu0 0.0
        %3291 = vmatpush1.msra.mxu0 0.0
        %3292 = vmatprep.subr.mxu0 0.0
        %3293 = vmatpush1.msra.mxu0 0.0
        %3294 = vmatprep.subr.mxu0 0.0
        %3295 = vmatpush1.msra.mxu0 0.0
        %3296 = vmatprep.subr.mxu0 0.0
        %3297 = vmatpush1.msra.mxu0 0.0
        %3298 = vmatprep.subr.mxu0 0.0
        %3299 = vmatpush1.msra.mxu0 0.0
        %3300 = vmatprep.subr.mxu0 0.0
        %3301 = vmatpush1.msra.mxu0 %v3243
        %3302 = vmatprep.subr.mxu0 0.0
        %3303 = vmatpush1.msra.mxu0 %v3242
        %3304 = vmatprep.subr.mxu0 0.0
        %3305 = vmatpush1.msra.mxu0 %v3241
        %3306 = vmatprep.subr.mxu0 0.0
        %3307 = vmatpush1.msra.mxu0 %v3240
        %3308 = vmatprep.subr.mxu0 0.0
        %3309 = vmatpush2.msra.mxu0 0.0
        %3310 = vmatprep.subr.mxu0 0.0
        %3311 = vmatpush2.msra.mxu0 0.0
        %3312 = vmatprep.subr.mxu0 0.0
        %3313 = vmatpush2.msra.mxu0 0.0
        %3314 = vmatprep.subr.mxu0 0.0
        %3315 = vmatpush2.msra.mxu0 0.0
        %3316 = vmatprep.subr.mxu0 0.0
        %3317 = vmatpush2.msra.mxu0 0.0
        %3318 = vmatprep.subr.mxu0 0.0
        %3319 = vmatpush2.msra.mxu0 0.0
        %3320 = vmatprep.subr.mxu0 0.0
        %3321 = vmatpush2.msra.mxu0 0.0
        %3322 = vmatprep.subr.mxu0 0.0
        %3323 = vmatpush2.msra.mxu0 0.0
        %3324 = vmatprep.subr.mxu0 0.0
        %3325 = vmatpush2.msra.mxu0 0.0
        %3326 = vmatprep.subr.mxu0 0.0
        %3327 = vmatpush2.msra.mxu0 0.0
        %3328 = vmatprep.subr.mxu0 0.0
        %3329 = vmatpush2.msra.mxu0 0.0
        %3330 = vmatprep.subr.mxu0 0.0
        %3331 = vmatpush2.msra.mxu0 0.0
        %3332 = vmatprep.subr.mxu0 0.0
        %3333 = vmatpush2.msra.mxu0 0.0
        %3334 = vmatprep.subr.mxu0 0.0
        %3335 = vmatpush2.msra.mxu0 0.0
        %3336 = vmatprep.subr.mxu0 0.0
        %3337 = vmatpush2.msra.mxu0 0.0
        %3338 = vmatprep.subr.mxu0 0.0
        %3339 = vmatpush2.msra.mxu0 0.0
        %3340 = vmatprep.mubr.f32.mxu0 0.0
        %3341 = vmatmul.mubr.f32.gmra.mxu0 %v3253
        %v3342 = vpop.f32.mrf.mxu0
        %v3343 = vadd.f32 %v3250, %v3342
        %v3344 = vpop.f32.mrf.mxu0
        %3345 = vmatprep.mubr.f32.mxu0 0.0
        %3346 = vmatmul.mubr.f32.gmra.mxu0 %v3256
        %v3347 = vpop.f32.mrf.mxu0
        %v3348 = vadd.f32 %v3250, %v3347
        %v3349 = vpop.f32.mrf.mxu0
        %3350 = vmatprep.mubr.f32.mxu0 0.0
        %3351 = vmatmul.mubr.f32.gmra.mxu0 %v3259
        %v3352 = vpop.f32.mrf.mxu0
        %v3353 = vadd.f32 %v3250, %v3352
        %v3354 = vpop.f32.mrf.mxu0
        %3355 = vmatprep.mubr.f32.mxu0 0.0
        %3356 = vmatmul.mubr.f32.gmra.mxu0 %v3262
        %v3357 = vpop.f32.mrf.mxu0
        %v3358 = vadd.f32 %v3250, %v3357
        %v3359 = vpop.f32.mrf.mxu0
        %3360 = vmatprep.mubr.f32.mxu0 0.0
        %3361 = vmatmul.mubr.f32.gmra.mxu0 %v3265
        %v3362 = vpop.f32.mrf.mxu0
        %v3363 = vadd.f32 %v3250, %v3362
        %v3364 = vpop.f32.mrf.mxu0
        %3365 = vmatprep.mubr.f32.mxu0 0.0
        %3366 = vmatmul.mubr.f32.gmra.mxu0 %v3268
        %v3367 = vpop.f32.mrf.mxu0
        %v3368 = vadd.f32 %v3250, %v3367
        %v3369 = vpop.f32.mrf.mxu0
        %3370 = vmatprep.mubr.f32.mxu0 0.0
        %3371 = vmatmul.mubr.f32.gmra.mxu0 %v3271
        %v3372 = vpop.f32.mrf.mxu0
        %v3373 = vadd.f32 %v3250, %v3372
        %v3374 = vpop.f32.mrf.mxu0
        %3375 = vmatprep.mubr.f32.mxu0 0.0
        %3376 = vmatmul.mubr.f32.gmra.mxu0 %v3274
        %v3377 = vpop.f32.mrf.mxu0
        %v3378 = vadd.f32 %v3250, %v3377
        %v3379 = vpop.f32.mrf.mxu0
        %3380 = vdwg.mxu0
        %v3381 = vmul.f32 %v3343, 0.5
        %v3382 = vmul.f32 %v3348, 0.5
        %v3383 = vmul.f32 %v3353, 0.5
        %v3384 = vmul.f32 %v3358, 0.5
        %v3385 = vmul.f32 %v3363, 0.5
        %v3386 = vmul.f32 %v3368, 0.5
        %v3387 = vmul.f32 %v3373, 0.5
        %v3388 = vmul.f32 %v3378, 0.5
        %v3389 = vmul.f32 %v3343, 0.044715
        %v3390 = vmul.f32 %v3348, 0.044715
        %v3391 = vmul.f32 %v3353, 0.044715
        %v3392 = vmul.f32 %v3358, 0.044715
        %v3393 = vmul.f32 %v3363, 0.044715
        %v3394 = vmul.f32 %v3368, 0.044715
        %v3395 = vmul.f32 %v3373, 0.044715
        %v3396 = vmul.f32 %v3378, 0.044715
        %v3397 = vmul.f32 %v3389, %v3343
        %v3398 = vmul.f32 %v3390, %v3348
        %v3399 = vmul.f32 %v3391, %v3353
        %v3400 = vmul.f32 %v3392, %v3358
        %v3401 = vmul.f32 %v3393, %v3363
        %v3402 = vmul.f32 %v3394, %v3368
        %v3403 = vmul.f32 %v3395, %v3373
        %v3404 = vmul.f32 %v3396, %v3378
        %v3405 = vmul.f32 %v3397, %v3343
        %v3406 = vmul.f32 %v3398, %v3348
        %v3407 = vmul.f32 %v3399, %v3353
        %v3408 = vmul.f32 %v3400, %v3358
        %v3409 = vmul.f32 %v3401, %v3363
        %v3410 = vmul.f32 %v3402, %v3368
        %v3411 = vmul.f32 %v3403, %v3373
        %v3412 = vmul.f32 %v3404, %v3378
        %v3413 = vadd.f32 %v3343, %v3405
        %v3414 = vadd.f32 %v3348, %v3406
        %v3415 = vadd.f32 %v3353, %v3407
        %v3416 = vadd.f32 %v3358, %v3408
        %v3417 = vadd.f32 %v3363, %v3409
        %v3418 = vadd.f32 %v3368, %v3410
        %v3419 = vadd.f32 %v3373, %v3411
        %v3420 = vadd.f32 %v3378, %v3412
        %v3421 = vmul.f32 %v3413, 0.7978846
        %v3422 = vmul.f32 %v3414, 0.7978846
        %v3423 = vmul.f32 %v3415, 0.7978846
        %v3424 = vmul.f32 %v3416, 0.7978846
        %v3425 = vmul.f32 %v3417, 0.7978846
        %v3426 = vmul.f32 %v3418, 0.7978846
        %v3427 = vmul.f32 %v3419, 0.7978846
        %v3428 = vmul.f32 %v3420, 0.7978846
        %v3429 = vtanh.pop %v3421
        %v3430 = vtanh.pop %v3422
        %v3431 = vtanh.pop %v3423
        %v3432 = vtanh.pop %v3424
        %v3433 = vtanh.pop %v3425
        %v3434 = vtanh.pop %v3426
        %v3435 = vtanh.pop %v3427
        %v3436 = vtanh.pop %v3428
        %v3437 = vadd.f32 %v3429, 1.0
        %v3438 = vadd.f32 %v3430, 1.0
        %v3439 = vadd.f32 %v3431, 1.0
        %v3440 = vadd.f32 %v3432, 1.0
        %v3441 = vadd.f32 %v3433, 1.0
        %v3442 = vadd.f32 %v3434, 1.0
        %v3443 = vadd.f32 %v3435, 1.0
        %v3444 = vadd.f32 %v3436, 1.0
        %v3445 = vmul.f32 %v3381, %v3437
        %v3446 = vmul.f32 %v3382, %v3438
        %v3447 = vmul.f32 %v3383, %v3439
        %v3448 = vmul.f32 %v3384, %v3440
        %v3449 = vmul.f32 %v3385, %v3441
        %v3450 = vmul.f32 %v3386, %v3442
        %v3451 = vmul.f32 %v3387, %v3443
        %v3452 = vmul.f32 %v3388, %v3444
        %v3453 = vsel %vm682, %v3445, 0.0
        %v3454 = vrot.slane %v3453, 4
        %v3455 = vadd.f32 %v3453, %v3454
        %v3456 = vrot.slane %v3455, 2
        %v3457 = vadd.f32 %v3455, %v3456
        %v3458 = vrot.slane %v3457, 1
        %v3459 = vadd.f32 %v3457, %v3458
        %v3460 = vsel %vm682, %v3446, 0.0
        %v3461 = vrot.slane %v3460, 4
        %v3462 = vadd.f32 %v3460, %v3461
        %v3463 = vrot.slane %v3462, 2
        %v3464 = vadd.f32 %v3462, %v3463
        %v3465 = vrot.slane %v3464, 1
        %v3466 = vadd.f32 %v3464, %v3465
        %v3467 = vsel %vm682, %v3447, 0.0
        %v3468 = vrot.slane %v3467, 4
        %v3469 = vadd.f32 %v3467, %v3468
        %v3470 = vrot.slane %v3469, 2
        %v3471 = vadd.f32 %v3469, %v3470
        %v3472 = vrot.slane %v3471, 1
        %v3473 = vadd.f32 %v3471, %v3472
        %v3474 = vsel %vm682, %v3448, 0.0
        %v3475 = vrot.slane %v3474, 4
        %v3476 = vadd.f32 %v3474, %v3475
        %v3477 = vrot.slane %v3476, 2
        %v3478 = vadd.f32 %v3476, %v3477
        %v3479 = vrot.slane %v3478, 1
        %v3480 = vadd.f32 %v3478, %v3479
        %v3481 = vsel %vm682, %v3449, 0.0
        %v3482 = vrot.slane %v3481, 4
        %v3483 = vadd.f32 %v3481, %v3482
        %v3484 = vrot.slane %v3483, 2
        %v3485 = vadd.f32 %v3483, %v3484
        %v3486 = vrot.slane %v3485, 1
        %v3487 = vadd.f32 %v3485, %v3486
        %v3488 = vsel %vm682, %v3450, 0.0
        %v3489 = vrot.slane %v3488, 4
        %v3490 = vadd.f32 %v3488, %v3489
        %v3491 = vrot.slane %v3490, 2
        %v3492 = vadd.f32 %v3490, %v3491
        %v3493 = vrot.slane %v3492, 1
        %v3494 = vadd.f32 %v3492, %v3493
        %v3495 = vsel %vm682, %v3451, 0.0
        %v3496 = vrot.slane %v3495, 4
        %v3497 = vadd.f32 %v3495, %v3496
        %v3498 = vrot.slane %v3497, 2
        %v3499 = vadd.f32 %v3497, %v3498
        %v3500 = vrot.slane %v3499, 1
        %v3501 = vadd.f32 %v3499, %v3500
        %v3502 = vsel %vm682, %v3452, 0.0
        %v3503 = vrot.slane %v3502, 4
        %v3504 = vadd.f32 %v3502, %v3503
        %v3505 = vrot.slane %v3504, 2
        %v3506 = vadd.f32 %v3504, %v3505
        %v3507 = vrot.slane %v3506, 1
        %v3508 = vadd.f32 %v3506, %v3507
        %s3509 = scalar_lea.vmem %s8, 64
        %v3510 = vld [vmem:[%s3509] sm:$0xff]
        %v3511 = vld [vmem:[%s3509 + $0x8] sm:$0xff]
        %v3512 = vld [vmem:[%s3509 + $0x10] sm:$0xff]
        %v3513 = vld [vmem:[%s3509 + $0x18] sm:$0xff]
        %s3514 = scalar_lea.vmem %s9, 2
        %v3515 = vld [vmem:[%s3514] sm:$0x1]
        %v3517 = vlaneseq
        %v3518 = vshrl.u32 %v3517, 7
        %v3519 = vsub.s32 0, %v3518
        %v3520 = vrot.slane %v3515, %v3519
        %v3530 = vsel %vm1488, %v3466, %v3459
        %v3531 = vsel %vm1490, %v3473, %v3530
        %v3532 = vsel %vm1492, %v3480, %v3531
        %v3533 = vsel %vm1494, %v3487, %v3532
        %v3534 = vsel %vm1496, %v3494, %v3533
        %v3535 = vsel %vm1498, %v3501, %v3534
        %v3536 = vsel %vm1500, %v3508, %v3535
        %v3537 = vsel %vm682, %v3536, 0
        %3539 = vmatprep.subr.mxu0 0.0
        %3540 = vmatpush1.msra.mxu0 0.0
        %3541 = vmatprep.subr.mxu0 0.0
        %3542 = vmatpush1.msra.mxu0 0.0
        %3543 = vmatprep.subr.mxu0 0.0
        %3544 = vmatpush1.msra.mxu0 0.0
        %3545 = vmatprep.subr.mxu0 0.0
        %3546 = vmatpush1.msra.mxu0 0.0
        %3547 = vmatprep.subr.mxu0 0.0
        %3548 = vmatpush1.msra.mxu0 0.0
        %3549 = vmatprep.subr.mxu0 0.0
        %3550 = vmatpush1.msra.mxu0 0.0
        %3551 = vmatprep.subr.mxu0 0.0
        %3552 = vmatpush1.msra.mxu0 0.0
        %3553 = vmatprep.subr.mxu0 0.0
        %3554 = vmatpush1.msra.mxu0 0.0
        %3555 = vmatprep.subr.mxu0 0.0
        %3556 = vmatpush1.msra.mxu0 0.0
        %3557 = vmatprep.subr.mxu0 0.0
        %3558 = vmatpush1.msra.mxu0 0.0
        %3559 = vmatprep.subr.mxu0 0.0
        %3560 = vmatpush1.msra.mxu0 0.0
        %3561 = vmatprep.subr.mxu0 0.0
        %3562 = vmatpush1.msra.mxu0 0.0
        %3563 = vmatprep.subr.mxu0 0.0
        %3564 = vmatpush1.msra.mxu0 %v3513
        %3565 = vmatprep.subr.mxu0 0.0
        %3566 = vmatpush1.msra.mxu0 %v3512
        %3567 = vmatprep.subr.mxu0 0.0
        %3568 = vmatpush1.msra.mxu0 %v3511
        %3569 = vmatprep.subr.mxu0 0.0
        %3570 = vmatpush1.msra.mxu0 %v3510
        %3571 = vmatprep.subr.mxu0 0.0
        %3572 = vmatpush2.msra.mxu0 0.0
        %3573 = vmatprep.subr.mxu0 0.0
        %3574 = vmatpush2.msra.mxu0 0.0
        %3575 = vmatprep.subr.mxu0 0.0
        %3576 = vmatpush2.msra.mxu0 0.0
        %3577 = vmatprep.subr.mxu0 0.0
        %3578 = vmatpush2.msra.mxu0 0.0
        %3579 = vmatprep.subr.mxu0 0.0
        %3580 = vmatpush2.msra.mxu0 0.0
        %3581 = vmatprep.subr.mxu0 0.0
        %3582 = vmatpush2.msra.mxu0 0.0
        %3583 = vmatprep.subr.mxu0 0.0
        %3584 = vmatpush2.msra.mxu0 0.0
        %3585 = vmatprep.subr.mxu0 0.0
        %3586 = vmatpush2.msra.mxu0 0.0
        %3587 = vmatprep.subr.mxu0 0.0
        %3588 = vmatpush2.msra.mxu0 0.0
        %3589 = vmatprep.subr.mxu0 0.0
        %3590 = vmatpush2.msra.mxu0 0.0
        %3591 = vmatprep.subr.mxu0 0.0
        %3592 = vmatpush2.msra.mxu0 0.0
        %3593 = vmatprep.subr.mxu0 0.0
        %3594 = vmatpush2.msra.mxu0 0.0
        %3595 = vmatprep.subr.mxu0 0.0
        %3596 = vmatpush2.msra.mxu0 0.0
        %3597 = vmatprep.subr.mxu0 0.0
        %3598 = vmatpush2.msra.mxu0 0.0
        %3599 = vmatprep.subr.mxu0 0.0
        %3600 = vmatpush2.msra.mxu0 0.0
        %3601 = vmatprep.subr.mxu0 0.0
        %3602 = vmatpush2.msra.mxu0 0.0
        %3603 = vmatprep.mubr.f32.mxu0 0.0
        %3604 = vmatmul.mubr.f32.gmra.mxu0 %v3537
        %v3605 = vpop.f32.mrf.mxu0
        %v3606 = vadd.f32 %v3520, %v3605
        %v3607 = vpop.f32.mrf.mxu0
        %3608 = vdwg.mxu0
        %v3609 = vadd.f32 %v2844, %v3606
        %s3610 = scalar_lea.vmem %s14, 2
        %v3611 = vld [vmem:[%s3610] sm:$0x1]
        %s3612 = scalar_lea.vmem %s15, 2
        %v3613 = vld [vmem:[%s3612] sm:$0x1]
        %v3614 = vsel %vm682, %v3609, 0.0
        %3615 = vadd.xlane.f32.xlu0 %v3614
        %v3616 = vpop.xlane.xlu0 %3615
        %v3617 = vmul.f32 %v3616, %v1580
        %v3618 = vsub.f32 %v3609, %v3617
        %v3619 = vmul.f32 %v3618, %v3618
        %v3620 = vsel %vm682, %v3619, 0.0
        %3621 = vadd.xlane.f32.xlu0 %v3620
        %v3622 = vpop.xlane.xlu0 %3621
        %v3623 = vmul.f32 %v3622, %v1580
        %v3624 = vadd.f32 %v3623, 1e-05
        %v3625 = vrsqrt.pop %v3624
        %v3626 = vmul.f32 %v3618, %v3625
        %v3628 = vlaneseq
        %v3629 = vshrl.u32 %v3628, 7
        %v3630 = vsub.s32 0, %v3629
        %v3631 = vrot.slane %v3611, %v3630
        %v3633 = vmul.f32 %v3626, %v3631
        %v3635 = vlaneseq
        %v3636 = vshrl.u32 %v3635, 7
        %v3637 = vsub.s32 0, %v3636
        %v3638 = vrot.slane %v3613, %v3637
        %v3640 = vadd.f32 %v3633, %v3638
        %s3641 = scalar_lea.vmem %s10, 64
        %v3642 = vld [vmem:[%s3641] sm:$0xff]
        %v3643 = vld [vmem:[%s3641 + $0x8] sm:$0xff]
        %v3644 = vld [vmem:[%s3641 + $0x10] sm:$0xff]
        %v3645 = vld [vmem:[%s3641 + $0x18] sm:$0xff]
        %s3646 = scalar_lea.vmem %s11, 2
        %v3647 = vld [vmem:[%s3646] sm:$0x1]
        %v3649 = vlaneseq
        %v3650 = vshrl.u32 %v3649, 7
        %v3651 = vsub.s32 0, %v3650
        %v3652 = vrot.slane %v3647, %v3651
        %v3655 = vsel %vm682, %v3640, 0
        %3657 = vmatprep.subr.mxu0 0.0
        %3658 = vmatpush1.msra.mxu0 0.0
        %3659 = vmatprep.subr.mxu0 0.0
        %3660 = vmatpush1.msra.mxu0 0.0
        %3661 = vmatprep.subr.mxu0 0.0
        %3662 = vmatpush1.msra.mxu0 0.0
        %3663 = vmatprep.subr.mxu0 0.0
        %3664 = vmatpush1.msra.mxu0 0.0
        %3665 = vmatprep.subr.mxu0 0.0
        %3666 = vmatpush1.msra.mxu0 0.0
        %3667 = vmatprep.subr.mxu0 0.0
        %3668 = vmatpush1.msra.mxu0 0.0
        %3669 = vmatprep.subr.mxu0 0.0
        %3670 = vmatpush1.msra.mxu0 0.0
        %3671 = vmatprep.subr.mxu0 0.0
        %3672 = vmatpush1.msra.mxu0 0.0
        %3673 = vmatprep.subr.mxu0 0.0
        %3674 = vmatpush1.msra.mxu0 0.0
        %3675 = vmatprep.subr.mxu0 0.0
        %3676 = vmatpush1.msra.mxu0 0.0
        %3677 = vmatprep.subr.mxu0 0.0
        %3678 = vmatpush1.msra.mxu0 0.0
        %3679 = vmatprep.subr.mxu0 0.0
        %3680 = vmatpush1.msra.mxu0 0.0
        %3681 = vmatprep.subr.mxu0 0.0
        %3682 = vmatpush1.msra.mxu0 %v3645
        %3683 = vmatprep.subr.mxu0 0.0
        %3684 = vmatpush1.msra.mxu0 %v3644
        %3685 = vmatprep.subr.mxu0 0.0
        %3686 = vmatpush1.msra.mxu0 %v3643
        %3687 = vmatprep.subr.mxu0 0.0
        %3688 = vmatpush1.msra.mxu0 %v3642
        %3689 = vmatprep.subr.mxu0 0.0
        %3690 = vmatpush2.msra.mxu0 0.0
        %3691 = vmatprep.subr.mxu0 0.0
        %3692 = vmatpush2.msra.mxu0 0.0
        %3693 = vmatprep.subr.mxu0 0.0
        %3694 = vmatpush2.msra.mxu0 0.0
        %3695 = vmatprep.subr.mxu0 0.0
        %3696 = vmatpush2.msra.mxu0 0.0
        %3697 = vmatprep.subr.mxu0 0.0
        %3698 = vmatpush2.msra.mxu0 0.0
        %3699 = vmatprep.subr.mxu0 0.0
        %3700 = vmatpush2.msra.mxu0 0.0
        %3701 = vmatprep.subr.mxu0 0.0
        %3702 = vmatpush2.msra.mxu0 0.0
        %3703 = vmatprep.subr.mxu0 0.0
        %3704 = vmatpush2.msra.mxu0 0.0
        %3705 = vmatprep.subr.mxu0 0.0
        %3706 = vmatpush2.msra.mxu0 0.0
        %3707 = vmatprep.subr.mxu0 0.0
        %3708 = vmatpush2.msra.mxu0 0.0
        %3709 = vmatprep.subr.mxu0 0.0
        %3710 = vmatpush2.msra.mxu0 0.0
        %3711 = vmatprep.subr.mxu0 0.0
        %3712 = vmatpush2.msra.mxu0 0.0
        %3713 = vmatprep.subr.mxu0 0.0
        %3714 = vmatpush2.msra.mxu0 0.0
        %3715 = vmatprep.subr.mxu0 0.0
        %3716 = vmatpush2.msra.mxu0 0.0
        %3717 = vmatprep.subr.mxu0 0.0
        %3718 = vmatpush2.msra.mxu0 0.0
        %3719 = vmatprep.subr.mxu0 0.0
        %3720 = vmatpush2.msra.mxu0 0.0
        %3721 = vmatprep.mubr.f32.mxu0 0.0
        %3722 = vmatmul.mubr.f32.gmra.mxu0 %v3655
        %v3723 = vpop.f32.mrf.mxu0
        %v3724 = vadd.f32 %v3652, %v3723
        %v3725 = vpop.f32.mrf.mxu0
        %3726 = vdwg.mxu0
        %v3727 = vmul.f32 %v3724, 0.5
        %v3728 = vmul.f32 %v3724, 0.044715
        %v3729 = vmul.f32 %v3728, %v3724
        %v3730 = vmul.f32 %v3729, %v3724
        %v3731 = vadd.f32 %v3724, %v3730
        %v3732 = vmul.f32 %v3731, 0.7978846
        %v3733 = vtanh.pop %v3732
        %v3734 = vadd.f32 %v3733, 1.0
        %v3735 = vmul.f32 %v3727, %v3734
        %s3736 = scalar_lea.vmem %s12, 256
        %v3737 = vld [vmem:[%s3736] sm:$0xff]
        %v3738 = vld [vmem:[%s3736 + $0x8] sm:$0xff]
        %v3739 = vld [vmem:[%s3736 + $0x10] sm:$0xff]
        %v3740 = vld [vmem:[%s3736 + $0x18] sm:$0xff]
        %v3741 = vld [vmem:[%s3736 + $0x20] sm:$0xff]
        %v3742 = vld [vmem:[%s3736 + $0x28] sm:$0xff]
        %v3743 = vld [vmem:[%s3736 + $0x30] sm:$0xff]
        %v3744 = vld [vmem:[%s3736 + $0x38] sm:$0xff]
        %v3745 = vld [vmem:[%s3736 + $0x40] sm:$0xff]
        %v3746 = vld [vmem:[%s3736 + $0x48] sm:$0xff]
        %v3747 = vld [vmem:[%s3736 + $0x50] sm:$0xff]
        %v3748 = vld [vmem:[%s3736 + $0x58] sm:$0xff]
        %v3749 = vld [vmem:[%s3736 + $0x60] sm:$0xff]
        %v3750 = vld [vmem:[%s3736 + $0x68] sm:$0xff]
        %v3751 = vld [vmem:[%s3736 + $0x70] sm:$0xff]
        %v3752 = vld [vmem:[%s3736 + $0x78] sm:$0xff]
        %s3753 = scalar_lea.vmem %s13, 2
        %v3754 = vld [vmem:[%s3753] sm:$0x1]
        %v3756 = vlaneseq
        %v3757 = vshrl.u32 %v3756, 7
        %v3758 = vsub.s32 0, %v3757
        %v3759 = vrot.slane %v3754, %v3758
        %3761 = vmatprep.subr.mxu0 0.0
        %3762 = vmatpush1.msra.mxu0 %v3752
        %3763 = vmatprep.subr.mxu0 0.0
        %3764 = vmatpush1.msra.mxu0 %v3751
        %3765 = vmatprep.subr.mxu0 0.0
        %3766 = vmatpush1.msra.mxu0 %v3750
        %3767 = vmatprep.subr.mxu0 0.0
        %3768 = vmatpush1.msra.mxu0 %v3749
        %3769 = vmatprep.subr.mxu0 0.0
        %3770 = vmatpush1.msra.mxu0 %v3748
        %3771 = vmatprep.subr.mxu0 0.0
        %3772 = vmatpush1.msra.mxu0 %v3747
        %3773 = vmatprep.subr.mxu0 0.0
        %3774 = vmatpush1.msra.mxu0 %v3746
        %3775 = vmatprep.subr.mxu0 0.0
        %3776 = vmatpush1.msra.mxu0 %v3745
        %3777 = vmatprep.subr.mxu0 0.0
        %3778 = vmatpush1.msra.mxu0 %v3744
        %3779 = vmatprep.subr.mxu0 0.0
        %3780 = vmatpush1.msra.mxu0 %v3743
        %3781 = vmatprep.subr.mxu0 0.0
        %3782 = vmatpush1.msra.mxu0 %v3742
        %3783 = vmatprep.subr.mxu0 0.0
        %3784 = vmatpush1.msra.mxu0 %v3741
        %3785 = vmatprep.subr.mxu0 0.0
        %3786 = vmatpush1.msra.mxu0 %v3740
        %3787 = vmatprep.subr.mxu0 0.0
        %3788 = vmatpush1.msra.mxu0 %v3739
        %3789 = vmatprep.subr.mxu0 0.0
        %3790 = vmatpush1.msra.mxu0 %v3738
        %3791 = vmatprep.subr.mxu0 0.0
        %3792 = vmatpush1.msra.mxu0 %v3737
        %3793 = vmatprep.subr.mxu0 0.0
        %3794 = vmatpush2.msra.mxu0 0.0
        %3795 = vmatprep.subr.mxu0 0.0
        %3796 = vmatpush2.msra.mxu0 0.0
        %3797 = vmatprep.subr.mxu0 0.0
        %3798 = vmatpush2.msra.mxu0 0.0
        %3799 = vmatprep.subr.mxu0 0.0
        %3800 = vmatpush2.msra.mxu0 0.0
        %3801 = vmatprep.subr.mxu0 0.0
        %3802 = vmatpush2.msra.mxu0 0.0
        %3803 = vmatprep.subr.mxu0 0.0
        %3804 = vmatpush2.msra.mxu0 0.0
        %3805 = vmatprep.subr.mxu0 0.0
        %3806 = vmatpush2.msra.mxu0 0.0
        %3807 = vmatprep.subr.mxu0 0.0
        %3808 = vmatpush2.msra.mxu0 0.0
        %3809 = vmatprep.subr.mxu0 0.0
        %3810 = vmatpush2.msra.mxu0 0.0
        %3811 = vmatprep.subr.mxu0 0.0
        %3812 = vmatpush2.msra.mxu0 0.0
        %3813 = vmatprep.subr.mxu0 0.0
        %3814 = vmatpush2.msra.mxu0 0.0
        %3815 = vmatprep.subr.mxu0 0.0
        %3816 = vmatpush2.msra.mxu0 0.0
        %3817 = vmatprep.subr.mxu0 0.0
        %3818 = vmatpush2.msra.mxu0 0.0
        %3819 = vmatprep.subr.mxu0 0.0
        %3820 = vmatpush2.msra.mxu0 0.0
        %3821 = vmatprep.subr.mxu0 0.0
        %3822 = vmatpush2.msra.mxu0 0.0
        %3823 = vmatprep.subr.mxu0 0.0
        %3824 = vmatpush2.msra.mxu0 0.0
        %3825 = vmatprep.mubr.f32.mxu0 0.0
        %3826 = vmatmul.mubr.f32.gmra.mxu0 %v3735
        %v3827 = vpop.f32.mrf.mxu0
        %v3828 = vadd.f32 %v3759, %v3827
        %v3829 = vpop.f32.mrf.mxu0
        %3830 = vdwg.mxu0
        %v3831 = vadd.f32 %v3640, %v3828
        %s3832 = scalar_lea.vmem %s16, 2
        %v3833 = vld [vmem:[%s3832] sm:$0x1]
        %s3834 = scalar_lea.vmem %s17, 2
        %v3835 = vld [vmem:[%s3834] sm:$0x1]
        %v3836 = vsel %vm682, %v3831, 0.0
        %3837 = vadd.xlane.f32.xlu0 %v3836
        %v3838 = vpop.xlane.xlu0 %3837
        %v3839 = vmul.f32 %v3838, %v1580
        %v3840 = vsub.f32 %v3831, %v3839
        %v3841 = vmul.f32 %v3840, %v3840
        %v3842 = vsel %vm682, %v3841, 0.0
        %3843 = vadd.xlane.f32.xlu0 %v3842
        %v3844 = vpop.xlane.xlu0 %3843
        %v3845 = vmul.f32 %v3844, %v1580
        %v3846 = vadd.f32 %v3845, 1e-05
        %v3847 = vrsqrt.pop %v3846
        %v3848 = vmul.f32 %v3840, %v3847
        %v3850 = vlaneseq
        %v3851 = vshrl.u32 %v3850, 7
        %v3852 = vsub.s32 0, %v3851
        %v3853 = vrot.slane %v3833, %v3852
        %v3855 = vmul.f32 %v3848, %v3853
        %v3857 = vlaneseq
        %v3858 = vshrl.u32 %v3857, 7
        %v3859 = vsub.s32 0, %v3858
        %v3860 = vrot.slane %v3835, %v3859
        %v3862 = vadd.f32 %v3855, %v3860
        %v3863 = vmul.f32 %v1823, %v3862
        %3864 = vst.msk [vmem:[%s635] sm:$0xff] %vm682, %v3863
        %s3865 = sand.u32 %s453, 1
        %s3866 = scalar_lea.sflag [#allocation3], %s3865
        %s3867 = sand.u32 %s453, 1
        %s3868 = smul.addr %s3867, 8
        %s3869 = scalar_lea.vmem [#allocation2], %s3868
        // Predicated region
        $region93: #{tpu_custom_call.1} parent=91 // pred_check
          %p3870 = pneg %p463
        $region94: #{tpu_custom_call.1} parent=91 // pred_check_branch
          %3872 = sbr.rel (%p3870) target = $region96
        $region95: #{tpu_custom_call.1} parent=91 // pred_region
          %s3874 = ssub.s32 128, 128
          %3875 = vsyncadd %s3866, %s3874
          %s3876 = sadd.s32 %s37, %s36
          %s3877 = smul.addr %s3876, 128
          %s3878 = scalar_lea.hbm %s18, %s3877
          %s3880 = sshll.u32 %s3869, 4
          %s3881 = int_to_ptr.vmem [resolvable:$true] %s3880
          %3883 = dma.vmem_to_hbm [thread:$0]  %s3881, 128, %s3878, %s3866
        $region96: #{tpu_custom_call.1} parent=91 // pred_fallthru
          _
      $region92: #{tpu_custom_call.1} parent=5 // pred_fallthru
        _
      %p3884 = scmp.le.s32.totalorder 2, %s27
      // Predicated region
      $region97: #{tpu_custom_call.1} parent=5 // pred_check
        %p3885 = pneg %p3884
      $region98: #{tpu_custom_call.1} parent=5 // pred_check_branch
        %3887 = sbr.rel (%p3885) target = $region100
      $region99: #{tpu_custom_call.1} parent=5 // pred_region
        %s3888 = ssub.s32 %s27, 2
        // Predicated region
        $region101: #{tpu_custom_call.1} parent=99 // pred_check
          %p3889 = pneg %p469
        $region102: #{tpu_custom_call.1} parent=99 // pred_check_branch
          %3891 = sbr.rel (%p3889) target = $region104
        $region103: #{tpu_custom_call.1} parent=99 // pred_region
          %s3892 = sand.u32 %s454, 1
          %s3893 = scalar_lea.sflag [#allocation3], %s3892
          %s3894 = sand.u32 %s454, 1
          %s3895 = smul.addr %s3894, 8
          %s3896 = scalar_lea.vmem [#allocation2], %s3895
          %3897 = dma.done %s3893, 128
        $region104: #{tpu_custom_call.1} parent=99 // pred_fallthru
          _
      $region100: #{tpu_custom_call.1} parent=5 // pred_fallthru
        _
    $region6: #{tpu_custom_call.1} parent=1 // loop_footer
      %s31 = sadd.s32 1, %s27
    $region7: #{tpu_custom_call.1} parent=1 // loop_footer_branch
      %26 = sbr.rel target = $region3
    $region8: #{tpu_custom_call.1} parent=1 // loop_exit
      _
    %3898 = vsyncpa [#allocation3], 1
    %s3899 = scalar_lea.sflag [#allocation3], 1
    %3900 = vsyncpa %s3899, 1

</llo_original>
